<compile_context>
chip_gen: v7x
topology: tpu7x:2x2x1
jax: 0.10.0
libtpu: 0.0.40
codegen_flags: <defaults>
</compile_context>

<pallas_src>
import math
from functools import partial

import jax
import jax.numpy as jnp
from jax.experimental import pallas as pl
from jax.experimental.pallas import tpu as pltpu


def _mha2_kernel(q_ref, samp_ref, k_ref, v_ref, mask_ref,
                 wq_ref, bq_ref, wk_ref, bk_ref, wv_ref, bv_ref,
                 wrs_ref, wrk_ref, br_ref, wo_ref, bo_ref,
                 x_ref, attn_ref, *, flat_x, flat_attn):
    Bt, Lq, H = q_ref.shape
    Lk = k_ref.shape[1]
    Ls = samp_ref.shape[1]
    n_heads = mask_ref.shape[0]
    cdt = q_ref.dtype                       # MXU operand dtype (bf16 or f32)
    f32 = jnp.float32

    mask = mask_ref[...]                    # (n_heads, H) 0/1 head selector, compute dtype

    # ---- fc_q / fc_k / fc_v: one large 2-D MXU matmul each over flattened rows.
    # 1/sqrt(head_dim) is folded into wq/bq; cast back to the MXU operand dtype right after the
    # bias add so only one copy of each projection stays live (trims f32 intermediates).
    Q3 = (jnp.dot(q_ref[...].reshape(Bt * Lq, H), wq_ref[...],
                  preferred_element_type=f32) + bq_ref[...]
          ).astype(cdt).reshape(Bt, Lq, H)
    K3 = (jnp.dot(k_ref[...].reshape(Bt * Lk, H), wk_ref[...],
                  preferred_element_type=f32) + bk_ref[...]
          ).astype(cdt).reshape(Bt, Lk, H)
    V3 = (jnp.dot(v_ref[...].reshape(Bt * Lk, H), wv_ref[...],
                  preferred_element_type=f32) + bv_ref[...]
          ).astype(cdt).reshape(Bt, Lk, H)

    # ---- "reshape" Linear over the sequence axis with the concat folded into a split matmul:
    #      Kr = Wr_s @ sampled + Wr_k @ K + br   (Vr shares the sampled-term + bias).
    # The small (Lk,Ls)/(Lk,Lk) weights are broadcast once for the batched MXU contraction
    # (Mosaic dot_general needs matching batch ranks).
    wrs_b = jnp.broadcast_to(wrs_ref[...], (Bt, Lk, Ls))
    wrk_b = jnp.broadcast_to(wrk_ref[...], (Bt, Lk, Lk))
    samp_term = jnp.einsum("bts,bsh->bth", wrs_b, samp_ref[...],
                           preferred_element_type=f32) + br_ref[...]
    Kr = (samp_term + jnp.einsum("btk,bkh->bth", wrk_b, K3,
                                 preferred_element_type=f32)).astype(cdt)
    Vr = (samp_term + jnp.einsum("btk,bkh->bth", wrk_b, V3,
                                 preferred_element_type=f32)).astype(cdt)

    # ---- all heads at once via a head-masked replicated Q (row i = head*Lq + q): the full-H
    # contraction keeps the MXU K-dim filled at small head_dim.
    # TODO(synk): for production head_dim >= 128, switch to a heads-as-batch dot_general
    # ("bnqd,bnkd->bnqk") to avoid the n_heads-inflated ctxhat / mask-and-reduce work.
    Qhat = (Q3[:, None, :, :] * mask[None, :, None, :]).reshape(Bt, n_heads * Lq, H)

    energy = jnp.einsum("bih,bkh->bik", Qhat, Kr,
                        preferred_element_type=f32)          # (Bt, nH*Lq, Lk) f32
    # TODO(synk): attention-mask branch (mask is None in this forward) not implemented.
    # NOTE: the softmax lane axis is Lk; it is only fully lane-dense for production Lk >= 128.
    m = jnp.max(energy, axis=-1, keepdims=True)
    p = jnp.exp(energy - m)
    denom = jnp.sum(p, axis=-1, keepdims=True)
    attn = p * pl.reciprocal(denom)          # exact reciprocal: stored rows sum to 1
    # dropout(attention) is identity in eval mode.
    if flat_attn:                            # lane-dense (1, Bt, nH*Lq*Lk) slab store
        attn_ref[...] = attn.reshape(1, Bt, n_heads * Lq * Lk).astype(attn_ref.dtype)
    else:
        attn_ref[...] = attn.astype(attn_ref.dtype)

    ctxhat = jnp.einsum("bik,bkh->bih", attn.astype(cdt), Vr,
                        preferred_element_type=f32)          # (Bt, nH*Lq, H) f32
    # re-concatenate heads: keep head h's feature columns from row-block h, sum over heads.
    ctx = jnp.sum(ctxhat.reshape(Bt, n_heads, Lq, H) * mask[None, :, None, :], axis=1)

    out = jnp.dot(ctx.reshape(Bt * Lq, H).astype(cdt), wo_ref[...],
                  preferred_element_type=f32) + bo_ref[...]
    if flat_x:                               # lane-dense (1, Bt, Lq*H) slab store
        x_ref[...] = out.reshape(1, Bt, Lq * H).astype(x_ref.dtype)
    else:
        x_ref[...] = out.reshape(Bt, Lq, H).astype(x_ref.dtype)


def _vmem_limit_bytes():
    """~75% of per-core VMEM: 48 MiB-class on v7x (64 MiB/TC), ~96 MiB on v5e/v6e (128 MiB)."""
    cap = 64 * 1024 * 1024
    try:
        cap = int(pltpu.get_tpu_info().vmem_capacity_bytes)
    except Exception:
        pass
    return (cap * 3) // 4


def _per_batch_vmem_bytes(Lq, Lk, Ls, H, n_heads, act_b, out_b, attn_b):
    """Rough per-batch-element VMEM cost of one grid step (pipelined I/O + live values)."""
    f32 = 4
    nhlq = n_heads * Lq
    io = 2 * ((Lq + Ls + 2 * Lk) * H * act_b             # double-buffered inputs
              + Lq * H * out_b + nhlq * Lk * attn_b)     # double-buffered outputs
    live = ((Lq + 2 * Lk) * H * (f32 + act_b)            # Q/K/V projections (+ casts)
            + Lk * H * f32                               # shared sampled-term
            + 2 * Lk * H * (f32 + act_b)                 # Kr / Vr
            + nhlq * H * act_b                           # Qhat
            + 3 * nhlq * Lk * f32                        # energy / p / attn
            + nhlq * H * f32                             # ctxhat
            + 2 * Lq * H * f32)                          # ctx / out
    return int(io + live)


def _const_vmem_bytes(H, Lk, Ls, n_heads, w_b):
    return int((4 * H * H + Lk * (Ls + Lk) + n_heads * H) * w_b + (4 * H + Lk) * 4)


def _pick_block_batch(B, per_elem_bytes, const_bytes, vmem_limit):
    """Largest divisor of B whose per-step footprint fits ~half the VMEM budget, capped at
    B//2 so a 2-TensorCore chip (v7x) always gets >= 2 grid steps."""
    usable = max(vmem_limit // 2 - const_bytes, per_elem_bytes)
    cap = max(1, usable // per_elem_bytes)
    if B >= 2:
        cap = min(cap, B // 2)
    if cap >= 8:
        cap -= cap % 8          # sublane-aligned batch tile -> dense slab stores
    bt = int(min(B, cap))
    while B % bt:
        bt -= 1
    return max(bt, 1)


def multi_head_attention2(query, sampled, key, value, params, n_heads, *,
                          block_batch=None, compute_dtype=None, attn_dtype=None):
    B, Lq, H = query.shape
    Lk = key.shape[1]
    Ls = sampled.shape[1]
    assert H % n_heads == 0
    assert Lq % 8 == 0 and Lk % 8 == 0, \
        "Lq and Lk must be sublane (8) aligned for the free batch-flatten reshapes"
    head_dim = H // n_heads
    scale = math.sqrt(head_dim)
    f32 = jnp.float32
    cdt = jnp.dtype(compute_dtype) if compute_dtype is not None else query.dtype
    odt = query.dtype
    adt = jnp.dtype(attn_dtype) if attn_dtype is not None else query.dtype

    # Param glue: transpose Linear weights to [in, out], fold 1/sqrt(head_dim) into fc_q,
    # cast MXU operands to the compute dtype, keep biases f32 (added post-accumulation).
    wq = (params["wq"].T / scale).astype(cdt)
    bq = (params["bq"] / scale).reshape(1, H).astype(f32)
    wk = params["wk"].T.astype(cdt); bk = params["bk"].reshape(1, H).astype(f32)
    wv = params["wv"].T.astype(cdt); bv = params["bv"].reshape(1, H).astype(f32)
    wo = params["wo"].T.astype(cdt); bo = params["bo"].reshape(1, H).astype(f32)
    wrs = params["wr"][:, :Ls].astype(cdt)     # acts on the `sampled` prefix of the concat
    wrk = params["wr"][:, Ls:].astype(cdt)     # acts on the projected K / V part
    br = params["br"].reshape(Lk, 1).astype(f32)
    head_mask = (jnp.arange(H) // head_dim ==
                 jnp.arange(n_heads)[:, None]).astype(cdt)             # (n_heads, H)

    q_in = query.astype(cdt)
    s_in = sampled.astype(cdt)
    k_in = key.astype(cdt)
    v_in = value.astype(cdt)

    vmem_limit = _vmem_limit_bytes()
    if block_batch is None:
        Bt = _pick_block_batch(
            B,
            _per_batch_vmem_bytes(Lq, Lk, Ls, H, n_heads,
                                  jnp.dtype(cdt).itemsize, jnp.dtype(odt).itemsize,
                                  jnp.dtype(adt).itemsize),
            _const_vmem_bytes(H, Lk, Ls, n_heads, jnp.dtype(cdt).itemsize),
            vmem_limit)
    else:
        Bt = block_batch
    assert B % Bt == 0, "block_batch must divide the batch size"
    steps = B // Bt

    def _build(lane_dense, single_buffer_consts):
        # Lane-dense output slabs whenever the natural minor dim would be lane-masked (<128).
        fx = lane_dense and (H % 128 != 0)
        fa = lane_dense and (Lk % 128 != 0)
        x_shape = (steps, Bt, Lq * H) if fx else (B, Lq, H)
        a_shape = (steps, Bt, n_heads * Lq * Lk) if fa else (B, n_heads * Lq, Lk)
        x_block = (1, Bt, Lq * H) if fx else (Bt, Lq, H)
        a_block = (1, Bt, n_heads * Lq * Lk) if fa else (Bt, n_heads * Lq, Lk)

        def const_spec(shape):
            if single_buffer_consts:
                # Constant index_map -> DMA'd once; single-buffer to reclaim VMEM headroom.
                return pl.BlockSpec(shape, lambda b: (0,) * len(shape),
                                    pipeline_mode=pl.Buffered(1))
            return pl.BlockSpec(shape, lambda b: (0,) * len(shape))

        kernel = partial(_mha2_kernel, flat_x=fx, flat_attn=fa)
        return pl.pallas_call(
            kernel,
            out_shape=(jax.ShapeDtypeStruct(x_shape, odt),
                       jax.ShapeDtypeStruct(a_shape, adt)),
            grid_spec=pltpu.PrefetchScalarGridSpec(
                num_scalar_prefetch=0,
                grid=(steps,),
                in_specs=[
                    pl.BlockSpec((Bt, Lq, H), lambda b: (b, 0, 0)),
                    pl.BlockSpec((Bt, Ls, H), lambda b: (b, 0, 0)),
                    pl.BlockSpec((Bt, Lk, H), lambda b: (b, 0, 0)),
                    pl.BlockSpec((Bt, Lk, H), lambda b: (b, 0, 0)),
                    const_spec((n_heads, H)),
                    const_spec((H, H)), const_spec((1, H)),            # wq, bq
                    const_spec((H, H)), const_spec((1, H)),            # wk, bk
                    const_spec((H, H)), const_spec((1, H)),            # wv, bv
                    const_spec((Lk, Ls)), const_spec((Lk, Lk)), const_spec((Lk, 1)),
                    const_spec((H, H)), const_spec((1, H)),            # wo, bo
                ],
                out_specs=[
                    pl.BlockSpec(x_block, lambda b: (b, 0, 0)),
                    pl.BlockSpec(a_block, lambda b: (b, 0, 0)),
                ],
            ),
            compiler_params=pltpu.CompilerParams(
                dimension_semantics=("parallel",),
                vmem_limit_bytes=int(vmem_limit),
            ),
        )

    args = (q_in, s_in, k_in, v_in, head_mask,
            wq, bq, wk, bk, wv, bv, wrs, wrk, br, wo, bo)
    try:
        x, attn = _build(True, True)(*args)
    except Exception:
        # Fall back to the conservative known-good configuration (double-buffered constants,
        # natural output layout) if this jax rejects Buffered(1) or the lane-dense reshape.
        x, attn = _build(False, False)(*args)

    # Row-major relabel back to the module's output layouts (free wrapper-side reshapes).
    return x.reshape(B, Lq, H), attn.reshape(B, n_heads, Lq, Lk)


def _reference(query, sampled, key, value, params, n_heads):
    """Pure-JAX mirror of the PyTorch forward (eval mode, mask=None)."""
    lin = lambda x, w, b: x @ w.T + b
    Q = lin(query, params["wq"], params["bq"])
    K = lin(key, params["wk"], params["bk"])
    V = lin(value, params["wv"], params["bv"])
    Kc = jnp.concatenate([sampled, K], axis=1)
    Vc = jnp.concatenate([sampled, V], axis=1)
    Kr = jnp.einsum("ts,bsh->bth", params["wr"], Kc) + params["br"][None, :, None]
    Vr = jnp.einsum("ts,bsh->bth", params["wr"], Vc) + params["br"][None, :, None]
    B, Lq, H = query.shape
    hd = H // n_heads
    heads = lambda x: x.reshape(B, -1, n_heads, hd).transpose(0, 2, 1, 3)
    Qh, Kh, Vh = heads(Q), heads(Kr), heads(Vr)
    energy = jnp.einsum("bnqd,bnkd->bnqk", Qh, Kh) / math.sqrt(hd)
    attn = jax.nn.softmax(energy, axis=-1)
    x = jnp.einsum("bnqk,bnkd->bnqd", attn, Vh).transpose(0, 2, 1, 3).reshape(B, Lq, H)
    return lin(x, params["wo"], params["bo"]), attn


def _init_params(key, hid_dim, Lk, Ls):
    keys = jax.random.split(key, 10)
    u = lambda k, shape, fan_in: jax.random.uniform(
        k, shape, jnp.float32, -1.0 / math.sqrt(fan_in), 1.0 / math.sqrt(fan_in))
    H = hid_dim
    return {
        "wq": u(keys[0], (H, H), H), "bq": u(keys[1], (H,), H),
        "wk": u(keys[2], (H, H), H), "bk": u(keys[3], (H,), H),
        "wv": u(keys[4], (H, H), H), "bv": u(keys[5], (H,), H),
        "wo": u(keys[6], (H, H), H), "bo": u(keys[7], (H,), H),
        # the fresh nn.Linear(Ls+Lk, Lk) created inside forward()
        "wr": u(keys[8], (Lk, Ls + Lk), Ls + Lk),
        "br": u(keys[9], (Lk,), Ls + Lk),
    }


if __name__ == "__main__":
    B, hid_dim, n_heads = 8, 32, 4
    Lq, Lk, Ls = 8, 8, 4

    root = jax.random.PRNGKey(0)
    kq, ks, kk, kv, kp = jax.random.split(root, 5)
    query = jax.random.normal(kq, (B, Lq, hid_dim), jnp.float32)
    sampled = jax.random.normal(ks, (B, Ls, hid_dim), jnp.float32)
    key_in = jax.random.normal(kk, (B, Lq, hid_dim), jnp.float32)
    value = jax.random.normal(kv, (B, Lk, hid_dim), jnp.float32)
    params = _init_params(kp, hid_dim, Lk, Ls)

    # f32 run, auto batch tile (picks Bt=4 -> 2 grid steps, keeping both v7x TCs busy).
    x, attn = multi_head_attention2(query, sampled, key_in, value, params, n_heads)
    jax.block_until_ready((x, attn))

    x_ref, attn_ref = _reference(query, sampled, key_in, value, params, n_heads)
    assert jnp.allclose(x, x_ref, atol=2e-2, rtol=1e-2), "output mismatch"
    assert jnp.allclose(attn, attn_ref, atol=2e-3, rtol=2e-3), "attention mismatch"

    # bf16 activation/weight path (f32 accumulation + f32 softmax, bf16 attn writeback).
    to_bf16 = lambda a: a.astype(jnp.bfloat16)
    x_bf, attn_bf = multi_head_attention2(to_bf16(query), to_bf16(sampled),
                                          to_bf16(key_in), to_bf16(value),
                                          params, n_heads)
    jax.block_until_ready((x_bf, attn_bf))
    assert jnp.allclose(x_bf.astype(jnp.float32), x_ref, atol=2.5e-1, rtol=2.5e-1), \
        "bf16 output mismatch"

    print("KERNEL_OK")
</pallas_src>

<mosaic_0001>
module attributes {stable_mosaic.version = 11 : i64} {
  func.func @_mha2_kernel(%arg0: i32, %arg1: memref<4x8x32xf32, #tpu.memory_space<vmem>>, %arg2: memref<4x4x32xf32, #tpu.memory_space<vmem>>, %arg3: memref<4x8x32xf32, #tpu.memory_space<vmem>>, %arg4: memref<4x8x32xf32, #tpu.memory_space<vmem>>, %arg5: memref<4x32xf32, #tpu.memory_space<vmem>>, %arg6: memref<32x32xf32, #tpu.memory_space<vmem>>, %arg7: memref<1x32xf32, #tpu.memory_space<vmem>>, %arg8: memref<32x32xf32, #tpu.memory_space<vmem>>, %arg9: memref<1x32xf32, #tpu.memory_space<vmem>>, %arg10: memref<32x32xf32, #tpu.memory_space<vmem>>, %arg11: memref<1x32xf32, #tpu.memory_space<vmem>>, %arg12: memref<8x4xf32, #tpu.memory_space<vmem>>, %arg13: memref<8x8xf32, #tpu.memory_space<vmem>>, %arg14: memref<8x1xf32, #tpu.memory_space<vmem>>, %arg15: memref<32x32xf32, #tpu.memory_space<vmem>>, %arg16: memref<1x32xf32, #tpu.memory_space<vmem>>, %arg17: memref<1x4x256xf32, #tpu.memory_space<vmem>>, %arg18: memref<1x4x256xf32, #tpu.memory_space<vmem>>) attributes {dimension_semantics = [#tpu.dimension_semantics<parallel>], iteration_bounds = array<i64: 2>, scalar_prefetch = 0 : i64, scratch_operands = 0 : i64, tpu.core_type = #tpu.core_type<tc>, window_params = [{transform_indices = @transform_0, window_bounds = array<i64: 4, 8, 32>}, {transform_indices = @transform_1, window_bounds = array<i64: 4, 4, 32>}, {transform_indices = @transform_2, window_bounds = array<i64: 4, 8, 32>}, {transform_indices = @transform_3, window_bounds = array<i64: 4, 8, 32>}, {pipeline_mode = #tpu.pipeline_mode<synchronous>, transform_indices = @transform_4, window_bounds = array<i64: 4, 32>}, {pipeline_mode = #tpu.pipeline_mode<synchronous>, transform_indices = @transform_5, window_bounds = array<i64: 32, 32>}, {pipeline_mode = #tpu.pipeline_mode<synchronous>, transform_indices = @transform_6, window_bounds = array<i64: 1, 32>}, {pipeline_mode = #tpu.pipeline_mode<synchronous>, transform_indices = @transform_7, window_bounds = array<i64: 32, 32>}, {pipeline_mode = #tpu.pipeline_mode<synchronous>, transform_indices = @transform_8, window_bounds = array<i64: 1, 32>}, {pipeline_mode = #tpu.pipeline_mode<synchronous>, transform_indices = @transform_9, window_bounds = array<i64: 32, 32>}, {pipeline_mode = #tpu.pipeline_mode<synchronous>, transform_indices = @transform_10, window_bounds = array<i64: 1, 32>}, {pipeline_mode = #tpu.pipeline_mode<synchronous>, transform_indices = @transform_11, window_bounds = array<i64: 8, 4>}, {pipeline_mode = #tpu.pipeline_mode<synchronous>, transform_indices = @transform_12, window_bounds = array<i64: 8, 8>}, {pipeline_mode = #tpu.pipeline_mode<synchronous>, transform_indices = @transform_13, window_bounds = array<i64: 8, 1>}, {pipeline_mode = #tpu.pipeline_mode<synchronous>, transform_indices = @transform_14, window_bounds = array<i64: 32, 32>}, {pipeline_mode = #tpu.pipeline_mode<synchronous>, transform_indices = @transform_15, window_bounds = array<i64: 1, 32>}, {transform_indices = @transform_16, window_bounds = array<i64: 1, 4, 256>}, {transform_indices = @transform_17, window_bounds = array<i64: 1, 4, 256>}]} {
    %c0 = arith.constant 0 : index
    %c0_0 = arith.constant 0 : index
    %0 = vector.load %arg5[%c0, %c0_0] : memref<4x32xf32, #tpu.memory_space<vmem>>, vector<4x32xf32>
    %c0_1 = arith.constant 0 : index
    %c0_2 = arith.constant 0 : index
    %c0_3 = arith.constant 0 : index
    %1 = vector.load %arg1[%c0_1, %c0_2, %c0_3] : memref<4x8x32xf32, #tpu.memory_space<vmem>>, vector<4x8x32xf32>
    %2 = vector.shape_cast %1 : vector<4x8x32xf32> to vector<32x32xf32>
    %c0_4 = arith.constant 0 : index
    %c0_5 = arith.constant 0 : index
    %3 = vector.load %arg6[%c0_4, %c0_5] : memref<32x32xf32, #tpu.memory_space<vmem>>, vector<32x32xf32>
    %cst = arith.constant dense<0.000000e+00> : vector<32x32xf32>
    %4 = tpu.matmul %2, %3, %cst {dimension_numbers = #tpu.dot_dimension_numbers<[1], [0], [0], [1], [0, 0, 1, 1], [], []>} : vector<32x32xf32>, vector<32x32xf32>, vector<32x32xf32> -> vector<32x32xf32>
    %c0_6 = arith.constant 0 : index
    %c0_7 = arith.constant 0 : index
    %5 = vector.load %arg7[%c0_6, %c0_7] : memref<1x32xf32, #tpu.memory_space<vmem>>, vector<1x32xf32>
    %6 = vector.broadcast %5 : vector<1x32xf32> to vector<32x32xf32>
    %7 = arith.addf %4, %6 : vector<32x32xf32>
    %8 = vector.shape_cast %7 : vector<32x32xf32> to vector<4x8x32xf32>
    %c0_8 = arith.constant 0 : index
    %c0_9 = arith.constant 0 : index
    %c0_10 = arith.constant 0 : index
    %9 = vector.load %arg3[%c0_8, %c0_9, %c0_10] : memref<4x8x32xf32, #tpu.memory_space<vmem>>, vector<4x8x32xf32>
    %10 = vector.shape_cast %9 : vector<4x8x32xf32> to vector<32x32xf32>
    %c0_11 = arith.constant 0 : index
    %c0_12 = arith.constant 0 : index
    %11 = vector.load %arg8[%c0_11, %c0_12] : memref<32x32xf32, #tpu.memory_space<vmem>>, vector<32x32xf32>
    %cst_13 = arith.constant dense<0.000000e+00> : vector<32x32xf32>
    %12 = tpu.matmul %10, %11, %cst_13 {dimension_numbers = #tpu.dot_dimension_numbers<[1], [0], [0], [1], [0, 0, 1, 1], [], []>} : vector<32x32xf32>, vector<32x32xf32>, vector<32x32xf32> -> vector<32x32xf32>
    %c0_14 = arith.constant 0 : index
    %c0_15 = arith.constant 0 : index
    %13 = vector.load %arg9[%c0_14, %c0_15] : memref<1x32xf32, #tpu.memory_space<vmem>>, vector<1x32xf32>
    %14 = vector.broadcast %13 : vector<1x32xf32> to vector<32x32xf32>
    %15 = arith.addf %12, %14 : vector<32x32xf32>
    %16 = vector.shape_cast %15 : vector<32x32xf32> to vector<4x8x32xf32>
    %c0_16 = arith.constant 0 : index
    %c0_17 = arith.constant 0 : index
    %c0_18 = arith.constant 0 : index
    %17 = vector.load %arg4[%c0_16, %c0_17, %c0_18] : memref<4x8x32xf32, #tpu.memory_space<vmem>>, vector<4x8x32xf32>
    %18 = vector.shape_cast %17 : vector<4x8x32xf32> to vector<32x32xf32>
    %c0_19 = arith.constant 0 : index
    %c0_20 = arith.constant 0 : index
    %19 = vector.load %arg10[%c0_19, %c0_20] : memref<32x32xf32, #tpu.memory_space<vmem>>, vector<32x32xf32>
    %cst_21 = arith.constant dense<0.000000e+00> : vector<32x32xf32>
    %20 = tpu.matmul %18, %19, %cst_21 {dimension_numbers = #tpu.dot_dimension_numbers<[1], [0], [0], [1], [0, 0, 1, 1], [], []>} : vector<32x32xf32>, vector<32x32xf32>, vector<32x32xf32> -> vector<32x32xf32>
    %c0_22 = arith.constant 0 : index
    %c0_23 = arith.constant 0 : index
    %21 = vector.load %arg11[%c0_22, %c0_23] : memref<1x32xf32, #tpu.memory_space<vmem>>, vector<1x32xf32>
    %22 = vector.broadcast %21 : vector<1x32xf32> to vector<32x32xf32>
    %23 = arith.addf %20, %22 : vector<32x32xf32>
    %24 = vector.shape_cast %23 : vector<32x32xf32> to vector<4x8x32xf32>
    %c0_24 = arith.constant 0 : index
    %c0_25 = arith.constant 0 : index
    %25 = vector.load %arg12[%c0_24, %c0_25] : memref<8x4xf32, #tpu.memory_space<vmem>>, vector<8x4xf32>
    %26 = vector.shape_cast %25 : vector<8x4xf32> to vector<1x8x4xf32>
    %27 = vector.broadcast %26 : vector<1x8x4xf32> to vector<4x8x4xf32>
    %c0_26 = arith.constant 0 : index
    %c0_27 = arith.constant 0 : index
    %28 = vector.load %arg13[%c0_26, %c0_27] : memref<8x8xf32, #tpu.memory_space<vmem>>, vector<8x8xf32>
    %29 = vector.shape_cast %28 : vector<8x8xf32> to vector<1x8x8xf32>
    %30 = vector.broadcast %29 : vector<1x8x8xf32> to vector<4x8x8xf32>
    %c0_28 = arith.constant 0 : index
    %c0_29 = arith.constant 0 : index
    %c0_30 = arith.constant 0 : index
    %31 = vector.load %arg2[%c0_28, %c0_29, %c0_30] : memref<4x4x32xf32, #tpu.memory_space<vmem>>, vector<4x4x32xf32>
    "tpu.trace_start"() <{level = 10 : i32, message = "bts,bsh->bth"}> : () -> ()
    %cst_31 = arith.constant dense<0.000000e+00> : vector<4x8x32xf32>
    %32 = tpu.matmul %27, %31, %cst_31 {dimension_numbers = #tpu.dot_dimension_numbers<[2], [1], [1], [2], [0, 0, 0, 1, 1, 2], [0], [0]>} : vector<4x8x4xf32>, vector<4x4x32xf32>, vector<4x8x32xf32> -> vector<4x8x32xf32>
    "tpu.trace_stop"() : () -> ()
    %c0_32 = arith.constant 0 : index
    %c0_33 = arith.constant 0 : index
    %33 = vector.load %arg14[%c0_32, %c0_33] : memref<8x1xf32, #tpu.memory_space<vmem>>, vector<8x1xf32>
    %34 = vector.shape_cast %33 : vector<8x1xf32> to vector<1x8x1xf32>
    %35 = vector.broadcast %34 : vector<1x8x1xf32> to vector<4x8x32xf32>
    %36 = arith.addf %32, %35 : vector<4x8x32xf32>
    "tpu.trace_start"() <{level = 10 : i32, message = "btk,bkh->bth"}> : () -> ()
    %cst_34 = arith.constant dense<0.000000e+00> : vector<4x8x32xf32>
    %37 = tpu.matmul %30, %16, %cst_34 {dimension_numbers = #tpu.dot_dimension_numbers<[2], [1], [1], [2], [0, 0, 0, 1, 1, 2], [0], [0]>} : vector<4x8x8xf32>, vector<4x8x32xf32>, vector<4x8x32xf32> -> vector<4x8x32xf32>
    "tpu.trace_stop"() : () -> ()
    %38 = arith.addf %36, %37 : vector<4x8x32xf32>
    "tpu.trace_start"() <{level = 10 : i32, message = "btk,bkh->bth"}> : () -> ()
    %cst_35 = arith.constant dense<0.000000e+00> : vector<4x8x32xf32>
    %39 = tpu.matmul %30, %24, %cst_35 {dimension_numbers = #tpu.dot_dimension_numbers<[2], [1], [1], [2], [0, 0, 0, 1, 1, 2], [0], [0]>} : vector<4x8x8xf32>, vector<4x8x32xf32>, vector<4x8x32xf32> -> vector<4x8x32xf32>
    "tpu.trace_stop"() : () -> ()
    %40 = arith.addf %36, %39 : vector<4x8x32xf32>
    %41 = vector.shape_cast %8 : vector<4x8x32xf32> to vector<4x1x8x32xf32>
    %42 = vector.shape_cast %0 : vector<4x32xf32> to vector<1x4x1x32xf32>
    %43 = vector.broadcast %41 : vector<4x1x8x32xf32> to vector<4x4x8x32xf32>
    %44 = vector.broadcast %42 : vector<1x4x1x32xf32> to vector<4x4x8x32xf32>
    %45 = arith.mulf %43, %44 : vector<4x4x8x32xf32>
    %46 = vector.shape_cast %45 : vector<4x4x8x32xf32> to vector<4x32x32xf32>
    "tpu.trace_start"() <{level = 10 : i32, message = "bih,bkh->bik"}> : () -> ()
    %cst_36 = arith.constant dense<0.000000e+00> : vector<4x32x8xf32>
    %47 = tpu.matmul %46, %38, %cst_36 {dimension_numbers = #tpu.dot_dimension_numbers<[2], [2], [1], [1], [0, 0, 0, 1, 1, 1], [0], [0]>} : vector<4x32x32xf32>, vector<4x8x32xf32>, vector<4x32x8xf32> -> vector<4x32x8xf32>
    "tpu.trace_stop"() : () -> ()
    %cst_37 = arith.constant dense<0xFF800000> : vector<4x32xf32>
    %48 = vector.multi_reduction <maximumf>, %47, %cst_37 [2] : vector<4x32x8xf32> to vector<4x32xf32>
    %49 = vector.shape_cast %48 : vector<4x32xf32> to vector<4x32x1xf32>
    %50 = vector.broadcast %49 : vector<4x32x1xf32> to vector<4x32x8xf32>
    %51 = arith.subf %47, %50 : vector<4x32x8xf32>
    %52 = math.exp %51 : vector<4x32x8xf32>
    %cst_38 = arith.constant dense<0.000000e+00> : vector<4x32xf32>
    %53 = vector.multi_reduction <add>, %52, %cst_38 [2] : vector<4x32x8xf32> to vector<4x32xf32>
    %54 = vector.shape_cast %53 : vector<4x32xf32> to vector<4x32x1xf32>
    %55 = tpu.reciprocal %54 : vector<4x32x1xf32> -> vector<4x32x1xf32>
    %56 = vector.broadcast %55 : vector<4x32x1xf32> to vector<4x32x8xf32>
    %57 = arith.mulf %52, %56 : vector<4x32x8xf32>
    %58 = vector.shape_cast %57 : vector<4x32x8xf32> to vector<1x4x256xf32>
    %c0_39 = arith.constant 0 : index
    %c0_40 = arith.constant 0 : index
    %c0_41 = arith.constant 0 : index
    %59 = vector.load %arg18[%c0_39, %c0_40, %c0_41] : memref<1x4x256xf32, #tpu.memory_space<vmem>>, vector<1x4x256xf32>
    tpu.vector_store %arg18[%c0_39, %c0_40, %c0_41], %58 {strides = array<i32>} : memref<1x4x256xf32, #tpu.memory_space<vmem>>, vector<1x4x256xf32>,
    "tpu.trace_start"() <{level = 10 : i32, message = "bik,bkh->bih"}> : () -> ()
    %cst_42 = arith.constant dense<0.000000e+00> : vector<4x32x32xf32>
    %60 = tpu.matmul %57, %40, %cst_42 {dimension_numbers = #tpu.dot_dimension_numbers<[2], [1], [1], [2], [0, 0, 0, 1, 1, 2], [0], [0]>} : vector<4x32x8xf32>, vector<4x8x32xf32>, vector<4x32x32xf32> -> vector<4x32x32xf32>
    "tpu.trace_stop"() : () -> ()
    %61 = vector.shape_cast %60 : vector<4x32x32xf32> to vector<4x4x8x32xf32>
    %62 = vector.shape_cast %0 : vector<4x32xf32> to vector<1x4x1x32xf32>
    %63 = vector.broadcast %62 : vector<1x4x1x32xf32> to vector<4x4x8x32xf32>
    %64 = arith.mulf %61, %63 : vector<4x4x8x32xf32>
    %cst_43 = arith.constant dense<0.000000e+00> : vector<4x8x32xf32>
    %65 = vector.multi_reduction <add>, %64, %cst_43 [1] : vector<4x4x8x32xf32> to vector<4x8x32xf32>
    %66 = vector.shape_cast %65 : vector<4x8x32xf32> to vector<32x32xf32>
    %c0_44 = arith.constant 0 : index
    %c0_45 = arith.constant 0 : index
    %67 = vector.load %arg15[%c0_44, %c0_45] : memref<32x32xf32, #tpu.memory_space<vmem>>, vector<32x32xf32>
    %cst_46 = arith.constant dense<0.000000e+00> : vector<32x32xf32>
    %68 = tpu.matmul %66, %67, %cst_46 {dimension_numbers = #tpu.dot_dimension_numbers<[1], [0], [0], [1], [0, 0, 1, 1], [], []>} : vector<32x32xf32>, vector<32x32xf32>, vector<32x32xf32> -> vector<32x32xf32>
    %c0_47 = arith.constant 0 : index
    %c0_48 = arith.constant 0 : index
    %69 = vector.load %arg16[%c0_47, %c0_48] : memref<1x32xf32, #tpu.memory_space<vmem>>, vector<1x32xf32>
    %70 = vector.broadcast %69 : vector<1x32xf32> to vector<32x32xf32>
    %71 = arith.addf %68, %70 : vector<32x32xf32>
    %72 = vector.shape_cast %71 : vector<32x32xf32> to vector<1x4x256xf32>
    %c0_49 = arith.constant 0 : index
    %c0_50 = arith.constant 0 : index
    %c0_51 = arith.constant 0 : index
    %73 = vector.load %arg17[%c0_49, %c0_50, %c0_51] : memref<1x4x256xf32, #tpu.memory_space<vmem>>, vector<1x4x256xf32>
    tpu.vector_store %arg17[%c0_49, %c0_50, %c0_51], %72 {strides = array<i32>} : memref<1x4x256xf32, #tpu.memory_space<vmem>>, vector<1x4x256xf32>,
    return
  }
  func.func @transform_0(%arg0: i32) -> (i32, i32, i32) {
    %c0_i32 = arith.constant 0 : i32
    %c0_i32_0 = arith.constant 0 : i32
    %c0_i32_1 = arith.constant 0 : i32
    return %arg0, %c0_i32, %c0_i32_0 : i32, i32, i32
  }
  func.func @transform_1(%arg0: i32) -> (i32, i32, i32) {
    %c0_i32 = arith.constant 0 : i32
    %c0_i32_0 = arith.constant 0 : i32
    %c0_i32_1 = arith.constant 0 : i32
    return %arg0, %c0_i32, %c0_i32_0 : i32, i32, i32
  }
  func.func @transform_2(%arg0: i32) -> (i32, i32, i32) {
    %c0_i32 = arith.constant 0 : i32
    %c0_i32_0 = arith.constant 0 : i32
    %c0_i32_1 = arith.constant 0 : i32
    return %arg0, %c0_i32, %c0_i32_0 : i32, i32, i32
  }
  func.func @transform_3(%arg0: i32) -> (i32, i32, i32) {
    %c0_i32 = arith.constant 0 : i32
    %c0_i32_0 = arith.constant 0 : i32
    %c0_i32_1 = arith.constant 0 : i32
    return %arg0, %c0_i32, %c0_i32_0 : i32, i32, i32
  }
  func.func @transform_4(%arg0: i32) -> (i32, i32) {
    %c0_i32 = arith.constant 0 : i32
    %c0_i32_0 = arith.constant 0 : i32
    %c0_i32_1 = arith.constant 0 : i32
    return %c0_i32, %c0_i32_0 : i32, i32
  }
  func.func @transform_5(%arg0: i32) -> (i32, i32) {
    %c0_i32 = arith.constant 0 : i32
    %c0_i32_0 = arith.constant 0 : i32
    %c0_i32_1 = arith.constant 0 : i32
    return %c0_i32, %c0_i32_0 : i32, i32
  }
  func.func @transform_6(%arg0: i32) -> (i32, i32) {
    %c0_i32 = arith.constant 0 : i32
    %c0_i32_0 = arith.constant 0 : i32
    %c0_i32_1 = arith.constant 0 : i32
    return %c0_i32, %c0_i32_0 : i32, i32
  }
  func.func @transform_7(%arg0: i32) -> (i32, i32) {
    %c0_i32 = arith.constant 0 : i32
    %c0_i32_0 = arith.constant 0 : i32
    %c0_i32_1 = arith.constant 0 : i32
    return %c0_i32, %c0_i32_0 : i32, i32
  }
  func.func @transform_8(%arg0: i32) -> (i32, i32) {
    %c0_i32 = arith.constant 0 : i32
    %c0_i32_0 = arith.constant 0 : i32
    %c0_i32_1 = arith.constant 0 : i32
    return %c0_i32, %c0_i32_0 : i32, i32
  }
  func.func @transform_9(%arg0: i32) -> (i32, i32) {
    %c0_i32 = arith.constant 0 : i32
    %c0_i32_0 = arith.constant 0 : i32
    %c0_i32_1 = arith.constant 0 : i32
    return %c0_i32, %c0_i32_0 : i32, i32
  }
  func.func @transform_10(%arg0: i32) -> (i32, i32) {
    %c0_i32 = arith.constant 0 : i32
    %c0_i32_0 = arith.constant 0 : i32
    %c0_i32_1 = arith.constant 0 : i32
    return %c0_i32, %c0_i32_0 : i32, i32
  }
  func.func @transform_11(%arg0: i32) -> (i32, i32) {
    %c0_i32 = arith.constant 0 : i32
    %c0_i32_0 = arith.constant 0 : i32
    %c0_i32_1 = arith.constant 0 : i32
    return %c0_i32, %c0_i32_0 : i32, i32
  }
  func.func @transform_12(%arg0: i32) -> (i32, i32) {
    %c0_i32 = arith.constant 0 : i32
    %c0_i32_0 = arith.constant 0 : i32
    %c0_i32_1 = arith.constant 0 : i32
    return %c0_i32, %c0_i32_0 : i32, i32
  }
  func.func @transform_13(%arg0: i32) -> (i32, i32) {
    %c0_i32 = arith.constant 0 : i32
    %c0_i32_0 = arith.constant 0 : i32
    %c0_i32_1 = arith.constant 0 : i32
    return %c0_i32, %c0_i32_0 : i32, i32
  }
  func.func @transform_14(%arg0: i32) -> (i32, i32) {
    %c0_i32 = arith.constant 0 : i32
    %c0_i32_0 = arith.constant 0 : i32
    %c0_i32_1 = arith.constant 0 : i32
    return %c0_i32, %c0_i32_0 : i32, i32
  }
  func.func @transform_15(%arg0: i32) -> (i32, i32) {
    %c0_i32 = arith.constant 0 : i32
    %c0_i32_0 = arith.constant 0 : i32
    %c0_i32_1 = arith.constant 0 : i32
    return %c0_i32, %c0_i32_0 : i32, i32
  }
  func.func @transform_16(%arg0: i32) -> (i32, i32, i32) {
    %c0_i32 = arith.constant 0 : i32
    %c0_i32_0 = arith.constant 0 : i32
    %c0_i32_1 = arith.constant 0 : i32
    return %arg0, %c0_i32, %c0_i32_0 : i32, i32, i32
  }
  func.func @transform_17(%arg0: i32) -> (i32, i32, i32) {
    %c0_i32 = arith.constant 0 : i32
    %c0_i32_0 = arith.constant 0 : i32
    %c0_i32_1 = arith.constant 0 : i32
    return %arg0, %c0_i32, %c0_i32_0 : i32, i32, i32
  }
}

module attributes {stable_mosaic.version = 11 : i64} {
  func.func @_mha2_kernel(%arg0: i32, %arg1: memref<4x8x32xf32, #tpu.memory_space<vmem>>, %arg2: memref<4x4x32xf32, #tpu.memory_space<vmem>>, %arg3: memref<4x8x32xf32, #tpu.memory_space<vmem>>, %arg4: memref<4x8x32xf32, #tpu.memory_space<vmem>>, %arg5: memref<4x32xf32, #tpu.memory_space<vmem>>, %arg6: memref<32x32xf32, #tpu.memory_space<vmem>>, %arg7: memref<1x32xf32, #tpu.memory_space<vmem>>, %arg8: memref<32x32xf32, #tpu.memory_space<vmem>>, %arg9: memref<1x32xf32, #tpu.memory_space<vmem>>, %arg10: memref<32x32xf32, #tpu.memory_space<vmem>>, %arg11: memref<1x32xf32, #tpu.memory_space<vmem>>, %arg12: memref<8x4xf32, #tpu.memory_space<vmem>>, %arg13: memref<8x8xf32, #tpu.memory_space<vmem>>, %arg14: memref<8x1xf32, #tpu.memory_space<vmem>>, %arg15: memref<32x32xf32, #tpu.memory_space<vmem>>, %arg16: memref<1x32xf32, #tpu.memory_space<vmem>>, %arg17: memref<4x8x32xf32, #tpu.memory_space<vmem>>, %arg18: memref<4x32x8xf32, #tpu.memory_space<vmem>>) attributes {dimension_semantics = [#tpu.dimension_semantics<parallel>], iteration_bounds = array<i64: 2>, scalar_prefetch = 0 : i64, scratch_operands = 0 : i64, tpu.core_type = #tpu.core_type<tc>, window_params = [{transform_indices = @transform_0, window_bounds = array<i64: 4, 8, 32>}, {transform_indices = @transform_1, window_bounds = array<i64: 4, 4, 32>}, {transform_indices = @transform_2, window_bounds = array<i64: 4, 8, 32>}, {transform_indices = @transform_3, window_bounds = array<i64: 4, 8, 32>}, {pipeline_mode = #tpu.pipeline_mode<synchronous>, transform_indices = @transform_4, window_bounds = array<i64: 4, 32>}, {pipeline_mode = #tpu.pipeline_mode<synchronous>, transform_indices = @transform_5, window_bounds = array<i64: 32, 32>}, {pipeline_mode = #tpu.pipeline_mode<synchronous>, transform_indices = @transform_6, window_bounds = array<i64: 1, 32>}, {pipeline_mode = #tpu.pipeline_mode<synchronous>, transform_indices = @transform_7, window_bounds = array<i64: 32, 32>}, {pipeline_mode = #tpu.pipeline_mode<synchronous>, transform_indices = @transform_8, window_bounds = array<i64: 1, 32>}, {pipeline_mode = #tpu.pipeline_mode<synchronous>, transform_indices = @transform_9, window_bounds = array<i64: 32, 32>}, {pipeline_mode = #tpu.pipeline_mode<synchronous>, transform_indices = @transform_10, window_bounds = array<i64: 1, 32>}, {pipeline_mode = #tpu.pipeline_mode<synchronous>, transform_indices = @transform_11, window_bounds = array<i64: 8, 4>}, {pipeline_mode = #tpu.pipeline_mode<synchronous>, transform_indices = @transform_12, window_bounds = array<i64: 8, 8>}, {pipeline_mode = #tpu.pipeline_mode<synchronous>, transform_indices = @transform_13, window_bounds = array<i64: 8, 1>}, {pipeline_mode = #tpu.pipeline_mode<synchronous>, transform_indices = @transform_14, window_bounds = array<i64: 32, 32>}, {pipeline_mode = #tpu.pipeline_mode<synchronous>, transform_indices = @transform_15, window_bounds = array<i64: 1, 32>}, {transform_indices = @transform_16, window_bounds = array<i64: 4, 8, 32>}, {transform_indices = @transform_17, window_bounds = array<i64: 4, 32, 8>}]} {
    %c0 = arith.constant 0 : index
    %c0_0 = arith.constant 0 : index
    %0 = vector.load %arg5[%c0, %c0_0] : memref<4x32xf32, #tpu.memory_space<vmem>>, vector<4x32xf32>
    %c0_1 = arith.constant 0 : index
    %c0_2 = arith.constant 0 : index
    %c0_3 = arith.constant 0 : index
    %1 = vector.load %arg1[%c0_1, %c0_2, %c0_3] : memref<4x8x32xf32, #tpu.memory_space<vmem>>, vector<4x8x32xf32>
    %2 = vector.shape_cast %1 : vector<4x8x32xf32> to vector<32x32xf32>
    %c0_4 = arith.constant 0 : index
    %c0_5 = arith.constant 0 : index
    %3 = vector.load %arg6[%c0_4, %c0_5] : memref<32x32xf32, #tpu.memory_space<vmem>>, vector<32x32xf32>
    %cst = arith.constant dense<0.000000e+00> : vector<32x32xf32>
    %4 = tpu.matmul %2, %3, %cst {dimension_numbers = #tpu.dot_dimension_numbers<[1], [0], [0], [1], [0, 0, 1, 1], [], []>} : vector<32x32xf32>, vector<32x32xf32>, vector<32x32xf32> -> vector<32x32xf32>
    %c0_6 = arith.constant 0 : index
    %c0_7 = arith.constant 0 : index
    %5 = vector.load %arg7[%c0_6, %c0_7] : memref<1x32xf32, #tpu.memory_space<vmem>>, vector<1x32xf32>
    %6 = vector.broadcast %5 : vector<1x32xf32> to vector<32x32xf32>
    %7 = arith.addf %4, %6 : vector<32x32xf32>
    %8 = vector.shape_cast %7 : vector<32x32xf32> to vector<4x8x32xf32>
    %c0_8 = arith.constant 0 : index
    %c0_9 = arith.constant 0 : index
    %c0_10 = arith.constant 0 : index
    %9 = vector.load %arg3[%c0_8, %c0_9, %c0_10] : memref<4x8x32xf32, #tpu.memory_space<vmem>>, vector<4x8x32xf32>
    %10 = vector.shape_cast %9 : vector<4x8x32xf32> to vector<32x32xf32>
    %c0_11 = arith.constant 0 : index
    %c0_12 = arith.constant 0 : index
    %11 = vector.load %arg8[%c0_11, %c0_12] : memref<32x32xf32, #tpu.memory_space<vmem>>, vector<32x32xf32>
    %cst_13 = arith.constant dense<0.000000e+00> : vector<32x32xf32>
    %12 = tpu.matmul %10, %11, %cst_13 {dimension_numbers = #tpu.dot_dimension_numbers<[1], [0], [0], [1], [0, 0, 1, 1], [], []>} : vector<32x32xf32>, vector<32x32xf32>, vector<32x32xf32> -> vector<32x32xf32>
    %c0_14 = arith.constant 0 : index
    %c0_15 = arith.constant 0 : index
    %13 = vector.load %arg9[%c0_14, %c0_15] : memref<1x32xf32, #tpu.memory_space<vmem>>, vector<1x32xf32>
    %14 = vector.broadcast %13 : vector<1x32xf32> to vector<32x32xf32>
    %15 = arith.addf %12, %14 : vector<32x32xf32>
    %16 = vector.shape_cast %15 : vector<32x32xf32> to vector<4x8x32xf32>
    %c0_16 = arith.constant 0 : index
    %c0_17 = arith.constant 0 : index
    %c0_18 = arith.constant 0 : index
    %17 = vector.load %arg4[%c0_16, %c0_17, %c0_18] : memref<4x8x32xf32, #tpu.memory_space<vmem>>, vector<4x8x32xf32>
    %18 = vector.shape_cast %17 : vector<4x8x32xf32> to vector<32x32xf32>
    %c0_19 = arith.constant 0 : index
    %c0_20 = arith.constant 0 : index
    %19 = vector.load %arg10[%c0_19, %c0_20] : memref<32x32xf32, #tpu.memory_space<vmem>>, vector<32x32xf32>
    %cst_21 = arith.constant dense<0.000000e+00> : vector<32x32xf32>
    %20 = tpu.matmul %18, %19, %cst_21 {dimension_numbers = #tpu.dot_dimension_numbers<[1], [0], [0], [1], [0, 0, 1, 1], [], []>} : vector<32x32xf32>, vector<32x32xf32>, vector<32x32xf32> -> vector<32x32xf32>
    %c0_22 = arith.constant 0 : index
    %c0_23 = arith.constant 0 : index
    %21 = vector.load %arg11[%c0_22, %c0_23] : memref<1x32xf32, #tpu.memory_space<vmem>>, vector<1x32xf32>
    %22 = vector.broadcast %21 : vector<1x32xf32> to vector<32x32xf32>
    %23 = arith.addf %20, %22 : vector<32x32xf32>
    %24 = vector.shape_cast %23 : vector<32x32xf32> to vector<4x8x32xf32>
    %c0_24 = arith.constant 0 : index
    %c0_25 = arith.constant 0 : index
    %25 = vector.load %arg12[%c0_24, %c0_25] : memref<8x4xf32, #tpu.memory_space<vmem>>, vector<8x4xf32>
    %26 = vector.shape_cast %25 : vector<8x4xf32> to vector<1x8x4xf32>
    %27 = vector.broadcast %26 : vector<1x8x4xf32> to vector<4x8x4xf32>
    %c0_26 = arith.constant 0 : index
    %c0_27 = arith.constant 0 : index
    %28 = vector.load %arg13[%c0_26, %c0_27] : memref<8x8xf32, #tpu.memory_space<vmem>>, vector<8x8xf32>
    %29 = vector.shape_cast %28 : vector<8x8xf32> to vector<1x8x8xf32>
    %30 = vector.broadcast %29 : vector<1x8x8xf32> to vector<4x8x8xf32>
    %c0_28 = arith.constant 0 : index
    %c0_29 = arith.constant 0 : index
    %c0_30 = arith.constant 0 : index
    %31 = vector.load %arg2[%c0_28, %c0_29, %c0_30] : memref<4x4x32xf32, #tpu.memory_space<vmem>>, vector<4x4x32xf32>
    "tpu.trace_start"() <{level = 10 : i32, message = "bts,bsh->bth"}> : () -> ()
    %cst_31 = arith.constant dense<0.000000e+00> : vector<4x8x32xf32>
    %32 = tpu.matmul %27, %31, %cst_31 {dimension_numbers = #tpu.dot_dimension_numbers<[2], [1], [1], [2], [0, 0, 0, 1, 1, 2], [0], [0]>} : vector<4x8x4xf32>, vector<4x4x32xf32>, vector<4x8x32xf32> -> vector<4x8x32xf32>
    "tpu.trace_stop"() : () -> ()
    %c0_32 = arith.constant 0 : index
    %c0_33 = arith.constant 0 : index
    %33 = vector.load %arg14[%c0_32, %c0_33] : memref<8x1xf32, #tpu.memory_space<vmem>>, vector<8x1xf32>
    %34 = vector.shape_cast %33 : vector<8x1xf32> to vector<1x8x1xf32>
    %35 = vector.broadcast %34 : vector<1x8x1xf32> to vector<4x8x32xf32>
    %36 = arith.addf %32, %35 : vector<4x8x32xf32>
    "tpu.trace_start"() <{level = 10 : i32, message = "btk,bkh->bth"}> : () -> ()
    %cst_34 = arith.constant dense<0.000000e+00> : vector<4x8x32xf32>
    %37 = tpu.matmul %30, %16, %cst_34 {dimension_numbers = #tpu.dot_dimension_numbers<[2], [1], [1], [2], [0, 0, 0, 1, 1, 2], [0], [0]>} : vector<4x8x8xf32>, vector<4x8x32xf32>, vector<4x8x32xf32> -> vector<4x8x32xf32>
    "tpu.trace_stop"() : () -> ()
    %38 = arith.addf %36, %37 : vector<4x8x32xf32>
    "tpu.trace_start"() <{level = 10 : i32, message = "btk,bkh->bth"}> : () -> ()
    %cst_35 = arith.constant dense<0.000000e+00> : vector<4x8x32xf32>
    %39 = tpu.matmul %30, %24, %cst_35 {dimension_numbers = #tpu.dot_dimension_numbers<[2], [1], [1], [2], [0, 0, 0, 1, 1, 2], [0], [0]>} : vector<4x8x8xf32>, vector<4x8x32xf32>, vector<4x8x32xf32> -> vector<4x8x32xf32>
    "tpu.trace_stop"() : () -> ()
    %40 = arith.addf %36, %39 : vector<4x8x32xf32>
    %41 = vector.shape_cast %8 : vector<4x8x32xf32> to vector<4x1x8x32xf32>
    %42 = vector.shape_cast %0 : vector<4x32xf32> to vector<1x4x1x32xf32>
    %43 = vector.broadcast %41 : vector<4x1x8x32xf32> to vector<4x4x8x32xf32>
    %44 = vector.broadcast %42 : vector<1x4x1x32xf32> to vector<4x4x8x32xf32>
    %45 = arith.mulf %43, %44 : vector<4x4x8x32xf32>
    %46 = vector.shape_cast %45 : vector<4x4x8x32xf32> to vector<4x32x32xf32>
    "tpu.trace_start"() <{level = 10 : i32, message = "bih,bkh->bik"}> : () -> ()
    %cst_36 = arith.constant dense<0.000000e+00> : vector<4x32x8xf32>
    %47 = tpu.matmul %46, %38, %cst_36 {dimension_numbers = #tpu.dot_dimension_numbers<[2], [2], [1], [1], [0, 0, 0, 1, 1, 1], [0], [0]>} : vector<4x32x32xf32>, vector<4x8x32xf32>, vector<4x32x8xf32> -> vector<4x32x8xf32>
    "tpu.trace_stop"() : () -> ()
    %cst_37 = arith.constant dense<0xFF800000> : vector<4x32xf32>
    %48 = vector.multi_reduction <maximumf>, %47, %cst_37 [2] : vector<4x32x8xf32> to vector<4x32xf32>
    %49 = vector.shape_cast %48 : vector<4x32xf32> to vector<4x32x1xf32>
    %50 = vector.broadcast %49 : vector<4x32x1xf32> to vector<4x32x8xf32>
    %51 = arith.subf %47, %50 : vector<4x32x8xf32>
    %52 = math.exp %51 : vector<4x32x8xf32>
    %cst_38 = arith.constant dense<0.000000e+00> : vector<4x32xf32>
    %53 = vector.multi_reduction <add>, %52, %cst_38 [2] : vector<4x32x8xf32> to vector<4x32xf32>
    %54 = vector.shape_cast %53 : vector<4x32xf32> to vector<4x32x1xf32>
    %55 = tpu.reciprocal %54 : vector<4x32x1xf32> -> vector<4x32x1xf32>
    %56 = vector.broadcast %55 : vector<4x32x1xf32> to vector<4x32x8xf32>
    %57 = arith.mulf %52, %56 : vector<4x32x8xf32>
    %c0_39 = arith.constant 0 : index
    %c0_40 = arith.constant 0 : index
    %c0_41 = arith.constant 0 : index
    %58 = vector.load %arg18[%c0_39, %c0_40, %c0_41] : memref<4x32x8xf32, #tpu.memory_space<vmem>>, vector<4x32x8xf32>
    tpu.vector_store %arg18[%c0_39, %c0_40, %c0_41], %57 {strides = array<i32>} : memref<4x32x8xf32, #tpu.memory_space<vmem>>, vector<4x32x8xf32>,
    "tpu.trace_start"() <{level = 10 : i32, message = "bik,bkh->bih"}> : () -> ()
    %cst_42 = arith.constant dense<0.000000e+00> : vector<4x32x32xf32>
    %59 = tpu.matmul %57, %40, %cst_42 {dimension_numbers = #tpu.dot_dimension_numbers<[2], [1], [1], [2], [0, 0, 0, 1, 1, 2], [0], [0]>} : vector<4x32x8xf32>, vector<4x8x32xf32>, vector<4x32x32xf32> -> vector<4x32x32xf32>
    "tpu.trace_stop"() : () -> ()
    %60 = vector.shape_cast %59 : vector<4x32x32xf32> to vector<4x4x8x32xf32>
    %61 = vector.shape_cast %0 : vector<4x32xf32> to vector<1x4x1x32xf32>
    %62 = vector.broadcast %61 : vector<1x4x1x32xf32> to vector<4x4x8x32xf32>
    %63 = arith.mulf %60, %62 : vector<4x4x8x32xf32>
    %cst_43 = arith.constant dense<0.000000e+00> : vector<4x8x32xf32>
    %64 = vector.multi_reduction <add>, %63, %cst_43 [1] : vector<4x4x8x32xf32> to vector<4x8x32xf32>
    %65 = vector.shape_cast %64 : vector<4x8x32xf32> to vector<32x32xf32>
    %c0_44 = arith.constant 0 : index
    %c0_45 = arith.constant 0 : index
    %66 = vector.load %arg15[%c0_44, %c0_45] : memref<32x32xf32, #tpu.memory_space<vmem>>, vector<32x32xf32>
    %cst_46 = arith.constant dense<0.000000e+00> : vector<32x32xf32>
    %67 = tpu.matmul %65, %66, %cst_46 {dimension_numbers = #tpu.dot_dimension_numbers<[1], [0], [0], [1], [0, 0, 1, 1], [], []>} : vector<32x32xf32>, vector<32x32xf32>, vector<32x32xf32> -> vector<32x32xf32>
    %c0_47 = arith.constant 0 : index
    %c0_48 = arith.constant 0 : index
    %68 = vector.load %arg16[%c0_47, %c0_48] : memref<1x32xf32, #tpu.memory_space<vmem>>, vector<1x32xf32>
    %69 = vector.broadcast %68 : vector<1x32xf32> to vector<32x32xf32>
    %70 = arith.addf %67, %69 : vector<32x32xf32>
    %71 = vector.shape_cast %70 : vector<32x32xf32> to vector<4x8x32xf32>
    %c0_49 = arith.constant 0 : index
    %c0_50 = arith.constant 0 : index
    %c0_51 = arith.constant 0 : index
    %72 = vector.load %arg17[%c0_49, %c0_50, %c0_51] : memref<4x8x32xf32, #tpu.memory_space<vmem>>, vector<4x8x32xf32>
    tpu.vector_store %arg17[%c0_49, %c0_50, %c0_51], %71 {strides = array<i32>} : memref<4x8x32xf32, #tpu.memory_space<vmem>>, vector<4x8x32xf32>,
    return
  }
  func.func @transform_0(%arg0: i32) -> (i32, i32, i32) {
    %c0_i32 = arith.constant 0 : i32
    %c0_i32_0 = arith.constant 0 : i32
    %c0_i32_1 = arith.constant 0 : i32
    return %arg0, %c0_i32, %c0_i32_0 : i32, i32, i32
  }
  func.func @transform_1(%arg0: i32) -> (i32, i32, i32) {
    %c0_i32 = arith.constant 0 : i32
    %c0_i32_0 = arith.constant 0 : i32
    %c0_i32_1 = arith.constant 0 : i32
    return %arg0, %c0_i32, %c0_i32_0 : i32, i32, i32
  }
  func.func @transform_2(%arg0: i32) -> (i32, i32, i32) {
    %c0_i32 = arith.constant 0 : i32
    %c0_i32_0 = arith.constant 0 : i32
    %c0_i32_1 = arith.constant 0 : i32
    return %arg0, %c0_i32, %c0_i32_0 : i32, i32, i32
  }
  func.func @transform_3(%arg0: i32) -> (i32, i32, i32) {
    %c0_i32 = arith.constant 0 : i32
    %c0_i32_0 = arith.constant 0 : i32
    %c0_i32_1 = arith.constant 0 : i32
    return %arg0, %c0_i32, %c0_i32_0 : i32, i32, i32
  }
  func.func @transform_4(%arg0: i32) -> (i32, i32) {
    %c0_i32 = arith.constant 0 : i32
    %c0_i32_0 = arith.constant 0 : i32
    %c0_i32_1 = arith.constant 0 : i32
    return %c0_i32, %c0_i32_0 : i32, i32
  }
  func.func @transform_5(%arg0: i32) -> (i32, i32) {
    %c0_i32 = arith.constant 0 : i32
    %c0_i32_0 = arith.constant 0 : i32
    %c0_i32_1 = arith.constant 0 : i32
    return %c0_i32, %c0_i32_0 : i32, i32
  }
  func.func @transform_6(%arg0: i32) -> (i32, i32) {
    %c0_i32 = arith.constant 0 : i32
    %c0_i32_0 = arith.constant 0 : i32
    %c0_i32_1 = arith.constant 0 : i32
    return %c0_i32, %c0_i32_0 : i32, i32
  }
  func.func @transform_7(%arg0: i32) -> (i32, i32) {
    %c0_i32 = arith.constant 0 : i32
    %c0_i32_0 = arith.constant 0 : i32
    %c0_i32_1 = arith.constant 0 : i32
    return %c0_i32, %c0_i32_0 : i32, i32
  }
  func.func @transform_8(%arg0: i32) -> (i32, i32) {
    %c0_i32 = arith.constant 0 : i32
    %c0_i32_0 = arith.constant 0 : i32
    %c0_i32_1 = arith.constant 0 : i32
    return %c0_i32, %c0_i32_0 : i32, i32
  }
  func.func @transform_9(%arg0: i32) -> (i32, i32) {
    %c0_i32 = arith.constant 0 : i32
    %c0_i32_0 = arith.constant 0 : i32
    %c0_i32_1 = arith.constant 0 : i32
    return %c0_i32, %c0_i32_0 : i32, i32
  }
  func.func @transform_10(%arg0: i32) -> (i32, i32) {
    %c0_i32 = arith.constant 0 : i32
    %c0_i32_0 = arith.constant 0 : i32
    %c0_i32_1 = arith.constant 0 : i32
    return %c0_i32, %c0_i32_0 : i32, i32
  }
  func.func @transform_11(%arg0: i32) -> (i32, i32) {
    %c0_i32 = arith.constant 0 : i32
    %c0_i32_0 = arith.constant 0 : i32
    %c0_i32_1 = arith.constant 0 : i32
    return %c0_i32, %c0_i32_0 : i32, i32
  }
  func.func @transform_12(%arg0: i32) -> (i32, i32) {
    %c0_i32 = arith.constant 0 : i32
    %c0_i32_0 = arith.constant 0 : i32
    %c0_i32_1 = arith.constant 0 : i32
    return %c0_i32, %c0_i32_0 : i32, i32
  }
  func.func @transform_13(%arg0: i32) -> (i32, i32) {
    %c0_i32 = arith.constant 0 : i32
    %c0_i32_0 = arith.constant 0 : i32
    %c0_i32_1 = arith.constant 0 : i32
    return %c0_i32, %c0_i32_0 : i32, i32
  }
  func.func @transform_14(%arg0: i32) -> (i32, i32) {
    %c0_i32 = arith.constant 0 : i32
    %c0_i32_0 = arith.constant 0 : i32
    %c0_i32_1 = arith.constant 0 : i32
    return %c0_i32, %c0_i32_0 : i32, i32
  }
  func.func @transform_15(%arg0: i32) -> (i32, i32) {
    %c0_i32 = arith.constant 0 : i32
    %c0_i32_0 = arith.constant 0 : i32
    %c0_i32_1 = arith.constant 0 : i32
    return %c0_i32, %c0_i32_0 : i32, i32
  }
  func.func @transform_16(%arg0: i32) -> (i32, i32, i32) {
    %c0_i32 = arith.constant 0 : i32
    %c0_i32_0 = arith.constant 0 : i32
    %c0_i32_1 = arith.constant 0 : i32
    return %arg0, %c0_i32, %c0_i32_0 : i32, i32, i32
  }
  func.func @transform_17(%arg0: i32) -> (i32, i32, i32) {
    %c0_i32 = arith.constant 0 : i32
    %c0_i32_0 = arith.constant 0 : i32
    %c0_i32_1 = arith.constant 0 : i32
    return %arg0, %c0_i32, %c0_i32_0 : i32, i32, i32
  }
}

</mosaic_0001>

<llo_original>
// kernel: tpu_custom_call.1
$region0: #{tpu_custom_call.1}
  #allocation0 [shape = 'u32[]', space=smem, size = 0x4, offset = 0x4, fixed_abs, tag = 'smem constant byte address 0x4 - core index']
  #allocation1 [shape = 'u32[144,128]{1,0:T(1,128)}', space=vmem, size = 0x12000, scoped, tag = 'internal scratch']
  %s0 = inlined_call_operand.hbm [shape: f32[8,8,32], index: 0, kind: input, shape index: {}]
  %s1 = inlined_call_operand.hbm [shape: f32[8,4,32], index: 1, kind: input, shape index: {}]
  %s2 = inlined_call_operand.hbm [shape: f32[8,8,32], index: 2, kind: input, shape index: {}]
  %s3 = inlined_call_operand.hbm [shape: f32[8,8,32], index: 3, kind: input, shape index: {}]
  %s4 = inlined_call_operand.hbm [shape: f32[4,32], index: 4, kind: input, shape index: {}]
  %s5 = inlined_call_operand.vmem [shape: f32[32,32], index: 5, kind: input, shape index: {}]
  %s6 = inlined_call_operand.vmem [shape: f32[1,32], index: 6, kind: input, shape index: {}]
  %s7 = inlined_call_operand.hbm [shape: f32[32,32], index: 7, kind: input, shape index: {}]
  %s8 = inlined_call_operand.vmem [shape: f32[1,32], index: 8, kind: input, shape index: {}]
  %s9 = inlined_call_operand.hbm [shape: f32[32,32], index: 9, kind: input, shape index: {}]
  %s10 = inlined_call_operand.hbm [shape: f32[1,32], index: 10, kind: input, shape index: {}]
  %s11 = inlined_call_operand.vmem [shape: f32[8,4], index: 11, kind: input, shape index: {}]
  %s12 = inlined_call_operand.hbm [shape: f32[8,8], index: 12, kind: input, shape index: {}]
  %s13 = inlined_call_operand.vmem [shape: f32[8,1], index: 13, kind: input, shape index: {}]
  %s14 = inlined_call_operand.vmem [shape: f32[32,32], index: 14, kind: input, shape index: {}]
  %s15 = inlined_call_operand.vmem [shape: f32[1,32], index: 15, kind: input, shape index: {}]
  %s16 = inlined_call_operand.hbm [shape: f32[8,8,32], index: 16, kind: output, shape index: {0}]
  %s17 = inlined_call_operand.vmem [shape: f32[8,32,8], index: 17, kind: output, shape index: {1}]
  %18 = xla_tuple %s16, %s17
  %s19 = sld [smem:[#allocation0]]
  $region141: #{tpu_custom_call.1} parent=0
    _
  %s21 = ssub.s32 1, %s19
  %s22 = scalar_select 0, %s21, %s19
  $region1: #{tpu_custom_call.1} parent=0
    #allocation2 [shape = 'u8[32768]{0}', space=vmem, size = 0x8000, scoped, tag = 'input window, operand 0']
    #allocation3 [shape = 's32[2]{0}', space=sflag, size = 0x8, scoped, tag = 'scoped memory for tpu_custom_call.1']
    #allocation4 [shape = 's32[2]{0}', space=sflag, size = 0x8, scoped, tag = 'scoped memory for tpu_custom_call.1']
    #allocation5 [shape = 'u8[16384]{0}', space=vmem, size = 0x4000, scoped, tag = 'input window, operand 1']
    #allocation6 [shape = 's32[2]{0}', space=sflag, size = 0x8, scoped, tag = 'scoped memory for tpu_custom_call.1']
    #allocation7 [shape = 'u8[32768]{0}', space=vmem, size = 0x8000, scoped, tag = 'input window, operand 2']
    #allocation8 [shape = 'u8[32768]{0}', space=vmem, size = 0x8000, scoped, tag = 'input window, operand 3']
    #allocation9 [shape = 's32[2]{0}', space=sflag, size = 0x8, scoped, tag = 'scoped memory for tpu_custom_call.1']
    #allocation10 [shape = 'u8[2048]{0}', space=vmem, size = 0x800, scoped, tag = 'input window, operand 4, single buffered']
    #allocation11 [shape = 'u8[16384]{0}', space=vmem, size = 0x4000, scoped, tag = 'input window, operand 7, single buffered']
    #allocation12 [shape = 's32[1]{0}', space=sflag, size = 0x4, scoped, tag = 'scoped memory for tpu_custom_call.1']
    #allocation13 [shape = 'u8[16384]{0}', space=vmem, size = 0x4000, scoped, tag = 'input window, operand 9, single buffered']
    #allocation14 [shape = 'u8[512]{0}', space=vmem, size = 0x400, scoped, tag = 'input window, operand 10, single buffered']
    #allocation15 [shape = 's32[1]{0}', space=sflag, size = 0x4, scoped, tag = 'scoped memory for tpu_custom_call.1']
    #allocation16 [shape = 'u8[4096]{0}', space=vmem, size = 0x1000, scoped, tag = 'input window, operand 12, single buffered']
    #allocation17 [shape = 'u8[32768]{0}', space=vmem, size = 0x8000, scoped, tag = 'output window, operand 0']
    %23 = vsyncpa [#allocation3], 0
    %s24 = scalar_lea.sflag [#allocation3], 1
    %25 = vsyncpa %s24, 0
    %26 = vsyncpa [#allocation6], 0
    %s27 = scalar_lea.sflag [#allocation6], 1
    %28 = vsyncpa %s27, 0
    %29 = vsyncpa [#allocation9], 0
    %s30 = scalar_lea.sflag [#allocation9], 1
    %31 = vsyncpa %s30, 0
    %32 = vsyncpa [#allocation12], 0
    %33 = vsyncpa [#allocation15], 0
    %34 = vsyncpa [#allocation4], 0
    %s35 = scalar_lea.sflag [#allocation4], 1
    %36 = vsyncpa %s35, 0
    loop: start=0, step=1, limit=4
    $region2: #{tpu_custom_call.1} parent=1 // loop_pre_header
      _
    $region3: #{tpu_custom_call.1} parent=1 // loop_header
      %s38 = sphi 0, %s42
      %p39 = scmp.ge.s32.totalorder %s38, 4
      %s48 = sphi 0, %s50
      %s51 = sphi 0, %s48
      %s52 = sphi 0, %s51
      %s68 = sphi 0, %s52
      %s74 = sphi 0, %s76
      %s77 = sphi 0, %s74
      %s78 = sphi 0, %s77
      %s94 = sphi 0, %s78
      %s100 = sphi 0, %s102
      %s103 = sphi 0, %s100
      %s104 = sphi 0, %s103
      %s120 = sphi 0, %s104
      %s126 = sphi 0, %s128
      %s129 = sphi 0, %s126
      %s130 = sphi 0, %s129
      %s146 = sphi 0, %s130
      %s150 = sphi 0, %s150
      %s152 = sphi 0, %s150
      %s153 = sphi 0, %s152
      %s167 = sphi 0, %s153
      %s171 = sphi 0, %s171
      %s173 = sphi 0, %s171
      %s174 = sphi 0, %s173
      %s188 = sphi 0, %s174
      %s192 = sphi 0, %s192
      %s194 = sphi 0, %s192
      %s195 = sphi 0, %s194
      %s209 = sphi 0, %s195
      %s213 = sphi 0, %s213
      %s215 = sphi 0, %s213
      %s216 = sphi 0, %s215
      %s230 = sphi 0, %s216
      %s234 = sphi 0, %s234
      %s236 = sphi 0, %s234
      %s237 = sphi 0, %s236
      %s251 = sphi 0, %s237
      %s255 = sphi 0, %s255
      %s257 = sphi 0, %s255
      %s258 = sphi 0, %s257
      %s272 = sphi 0, %s258
      %s276 = sphi 0, %s276
      %s278 = sphi 0, %s276
      %s279 = sphi 0, %s278
      %s293 = sphi 0, %s279
      %s297 = sphi 0, %s297
      %s299 = sphi 0, %s297
      %s300 = sphi 0, %s299
      %s314 = sphi 0, %s300
      %s318 = sphi 0, %s318
      %s320 = sphi 0, %s318
      %s321 = sphi 0, %s320
      %s335 = sphi 0, %s321
      %s339 = sphi 0, %s339
      %s341 = sphi 0, %s339
      %s342 = sphi 0, %s341
      %s356 = sphi 0, %s342
      %s360 = sphi 0, %s360
      %s362 = sphi 0, %s360
      %s363 = sphi 0, %s362
      %s377 = sphi 0, %s363
      %s381 = sphi 0, %s381
      %s383 = sphi 0, %s381
      %s384 = sphi 0, %s383
      %s398 = sphi 0, %s384
      %s404 = sphi 0, %s406
      %s407 = sphi 0, %s404
      %s408 = sphi 0, %s407
      %s424 = sphi 0, %s408
      %s430 = sphi 0, %s432
      %s433 = sphi 0, %s430
      %s434 = sphi 0, %s433
      %s450 = sphi 0, %s434
    $region4: #{tpu_custom_call.1} parent=1 // loop_header_branch
      %41 = sbr.rel (%p39) target = $region8
    $region5: #{tpu_custom_call.1} parent=1 // loop_body
      %s43 = ssub.s32 %s38, 1
      %s44 = ssub.s32 %s38, 2
      %s45 = sadd.s32 %s38, 1
      %s46 = ssub.s32 %s38, %s45
      %p47 = scmp.eq.s32.totalorder %s46, 0
      %s49 = sadd.s32 %s48, 1
      %s50 = scalar_select %p47, %s48, %s49
      %p53 = pneg %p47
      %p54 = scmp.eq.s32.totalorder %s38, 1
      %p55 = por %p53, %p54
      %p56 = scmp.ne.s32.totalorder %s48, %s51
      %p57 = scmp.eq.s32.totalorder %s38, 0
      %p58 = por %p56, %p57
      %p59 = scmp.ne.s32.totalorder %s48, %s51
      %p60 = scmp.eq.s32.totalorder %s43, 1
      %p61 = por %p59, %p60
      %p62 = scmp.ne.s32.totalorder %s51, %s52
      %p63 = scmp.eq.s32.totalorder %s43, 0
      %p64 = por %p62, %p63
      %p65 = scmp.ne.s32.totalorder %s51, %s52
      %p66 = scmp.eq.s32.totalorder %s44, 1
      %p67 = por %p65, %p66
      %p69 = scmp.ne.s32.totalorder %s52, %s68
      %p70 = scmp.eq.s32.totalorder %s44, 0
      %p71 = por %p69, %p70
      %s72 = ssub.s32 %s38, %s45
      %p73 = scmp.eq.s32.totalorder %s72, 0
      %s75 = sadd.s32 %s74, 1
      %s76 = scalar_select %p73, %s74, %s75
      %p79 = pneg %p73
      %p80 = scmp.eq.s32.totalorder %s38, 1
      %p81 = por %p79, %p80
      %p82 = scmp.ne.s32.totalorder %s74, %s77
      %p83 = scmp.eq.s32.totalorder %s38, 0
      %p84 = por %p82, %p83
      %p85 = scmp.ne.s32.totalorder %s74, %s77
      %p86 = scmp.eq.s32.totalorder %s43, 1
      %p87 = por %p85, %p86
      %p88 = scmp.ne.s32.totalorder %s77, %s78
      %p89 = scmp.eq.s32.totalorder %s43, 0
      %p90 = por %p88, %p89
      %p91 = scmp.ne.s32.totalorder %s77, %s78
      %p92 = scmp.eq.s32.totalorder %s44, 1
      %p93 = por %p91, %p92
      %p95 = scmp.ne.s32.totalorder %s78, %s94
      %p96 = scmp.eq.s32.totalorder %s44, 0
      %p97 = por %p95, %p96
      %s98 = ssub.s32 %s38, %s45
      %p99 = scmp.eq.s32.totalorder %s98, 0
      %s101 = sadd.s32 %s100, 1
      %s102 = scalar_select %p99, %s100, %s101
      %p105 = pneg %p99
      %p106 = scmp.eq.s32.totalorder %s38, 1
      %p107 = por %p105, %p106
      %p108 = scmp.ne.s32.totalorder %s100, %s103
      %p109 = scmp.eq.s32.totalorder %s38, 0
      %p110 = por %p108, %p109
      %p111 = scmp.ne.s32.totalorder %s100, %s103
      %p112 = scmp.eq.s32.totalorder %s43, 1
      %p113 = por %p111, %p112
      %p114 = scmp.ne.s32.totalorder %s103, %s104
      %p115 = scmp.eq.s32.totalorder %s43, 0
      %p116 = por %p114, %p115
      %p117 = scmp.ne.s32.totalorder %s103, %s104
      %p118 = scmp.eq.s32.totalorder %s44, 1
      %p119 = por %p117, %p118
      %p121 = scmp.ne.s32.totalorder %s104, %s120
      %p122 = scmp.eq.s32.totalorder %s44, 0
      %p123 = por %p121, %p122
      %s124 = ssub.s32 %s38, %s45
      %p125 = scmp.eq.s32.totalorder %s124, 0
      %s127 = sadd.s32 %s126, 1
      %s128 = scalar_select %p125, %s126, %s127
      %p131 = pneg %p125
      %p132 = scmp.eq.s32.totalorder %s38, 1
      %p133 = por %p131, %p132
      %p134 = scmp.ne.s32.totalorder %s126, %s129
      %p135 = scmp.eq.s32.totalorder %s38, 0
      %p136 = por %p134, %p135
      %p137 = scmp.ne.s32.totalorder %s126, %s129
      %p138 = scmp.eq.s32.totalorder %s43, 1
      %p139 = por %p137, %p138
      %p140 = scmp.ne.s32.totalorder %s129, %s130
      %p141 = scmp.eq.s32.totalorder %s43, 0
      %p142 = por %p140, %p141
      %p143 = scmp.ne.s32.totalorder %s129, %s130
      %p144 = scmp.eq.s32.totalorder %s44, 1
      %p145 = por %p143, %p144
      %p147 = scmp.ne.s32.totalorder %s130, %s146
      %p148 = scmp.eq.s32.totalorder %s44, 0
      %p149 = por %p147, %p148
      %s151 = sadd.s32 %s150, 1
      %p154 = scmp.eq.s32.totalorder %s38, 1
      %p155 = scmp.ne.s32.totalorder %s150, %s152
      %p156 = scmp.eq.s32.totalorder %s38, 0
      %p157 = por %p155, %p156
      %p158 = scmp.ne.s32.totalorder %s150, %s152
      %p159 = scmp.eq.s32.totalorder %s43, 1
      %p160 = por %p158, %p159
      %p161 = scmp.ne.s32.totalorder %s152, %s153
      %p162 = scmp.eq.s32.totalorder %s43, 0
      %p163 = por %p161, %p162
      %p164 = scmp.ne.s32.totalorder %s152, %s153
      %p165 = scmp.eq.s32.totalorder %s44, 1
      %p166 = por %p164, %p165
      %p168 = scmp.ne.s32.totalorder %s153, %s167
      %p169 = scmp.eq.s32.totalorder %s44, 0
      %p170 = por %p168, %p169
      %s172 = sadd.s32 %s171, 1
      %p175 = scmp.eq.s32.totalorder %s38, 1
      %p176 = scmp.ne.s32.totalorder %s171, %s173
      %p177 = scmp.eq.s32.totalorder %s38, 0
      %p178 = por %p176, %p177
      %p179 = scmp.ne.s32.totalorder %s171, %s173
      %p180 = scmp.eq.s32.totalorder %s43, 1
      %p181 = por %p179, %p180
      %p182 = scmp.ne.s32.totalorder %s173, %s174
      %p183 = scmp.eq.s32.totalorder %s43, 0
      %p184 = por %p182, %p183
      %p185 = scmp.ne.s32.totalorder %s173, %s174
      %p186 = scmp.eq.s32.totalorder %s44, 1
      %p187 = por %p185, %p186
      %p189 = scmp.ne.s32.totalorder %s174, %s188
      %p190 = scmp.eq.s32.totalorder %s44, 0
      %p191 = por %p189, %p190
      %s193 = sadd.s32 %s192, 1
      %p196 = scmp.eq.s32.totalorder %s38, 1
      %p197 = scmp.ne.s32.totalorder %s192, %s194
      %p198 = scmp.eq.s32.totalorder %s38, 0
      %p199 = por %p197, %p198
      %p200 = scmp.ne.s32.totalorder %s192, %s194
      %p201 = scmp.eq.s32.totalorder %s43, 1
      %p202 = por %p200, %p201
      %p203 = scmp.ne.s32.totalorder %s194, %s195
      %p204 = scmp.eq.s32.totalorder %s43, 0
      %p205 = por %p203, %p204
      %p206 = scmp.ne.s32.totalorder %s194, %s195
      %p207 = scmp.eq.s32.totalorder %s44, 1
      %p208 = por %p206, %p207
      %p210 = scmp.ne.s32.totalorder %s195, %s209
      %p211 = scmp.eq.s32.totalorder %s44, 0
      %p212 = por %p210, %p211
      %s214 = sadd.s32 %s213, 1
      %p217 = scmp.eq.s32.totalorder %s38, 1
      %p218 = scmp.ne.s32.totalorder %s213, %s215
      %p219 = scmp.eq.s32.totalorder %s38, 0
      %p220 = por %p218, %p219
      %p221 = scmp.ne.s32.totalorder %s213, %s215
      %p222 = scmp.eq.s32.totalorder %s43, 1
      %p223 = por %p221, %p222
      %p224 = scmp.ne.s32.totalorder %s215, %s216
      %p225 = scmp.eq.s32.totalorder %s43, 0
      %p226 = por %p224, %p225
      %p227 = scmp.ne.s32.totalorder %s215, %s216
      %p228 = scmp.eq.s32.totalorder %s44, 1
      %p229 = por %p227, %p228
      %p231 = scmp.ne.s32.totalorder %s216, %s230
      %p232 = scmp.eq.s32.totalorder %s44, 0
      %p233 = por %p231, %p232
      %s235 = sadd.s32 %s234, 1
      %p238 = scmp.eq.s32.totalorder %s38, 1
      %p239 = scmp.ne.s32.totalorder %s234, %s236
      %p240 = scmp.eq.s32.totalorder %s38, 0
      %p241 = por %p239, %p240
      %p242 = scmp.ne.s32.totalorder %s234, %s236
      %p243 = scmp.eq.s32.totalorder %s43, 1
      %p244 = por %p242, %p243
      %p245 = scmp.ne.s32.totalorder %s236, %s237
      %p246 = scmp.eq.s32.totalorder %s43, 0
      %p247 = por %p245, %p246
      %p248 = scmp.ne.s32.totalorder %s236, %s237
      %p249 = scmp.eq.s32.totalorder %s44, 1
      %p250 = por %p248, %p249
      %p252 = scmp.ne.s32.totalorder %s237, %s251
      %p253 = scmp.eq.s32.totalorder %s44, 0
      %p254 = por %p252, %p253
      %s256 = sadd.s32 %s255, 1
      %p259 = scmp.eq.s32.totalorder %s38, 1
      %p260 = scmp.ne.s32.totalorder %s255, %s257
      %p261 = scmp.eq.s32.totalorder %s38, 0
      %p262 = por %p260, %p261
      %p263 = scmp.ne.s32.totalorder %s255, %s257
      %p264 = scmp.eq.s32.totalorder %s43, 1
      %p265 = por %p263, %p264
      %p266 = scmp.ne.s32.totalorder %s257, %s258
      %p267 = scmp.eq.s32.totalorder %s43, 0
      %p268 = por %p266, %p267
      %p269 = scmp.ne.s32.totalorder %s257, %s258
      %p270 = scmp.eq.s32.totalorder %s44, 1
      %p271 = por %p269, %p270
      %p273 = scmp.ne.s32.totalorder %s258, %s272
      %p274 = scmp.eq.s32.totalorder %s44, 0
      %p275 = por %p273, %p274
      %s277 = sadd.s32 %s276, 1
      %p280 = scmp.eq.s32.totalorder %s38, 1
      %p281 = scmp.ne.s32.totalorder %s276, %s278
      %p282 = scmp.eq.s32.totalorder %s38, 0
      %p283 = por %p281, %p282
      %p284 = scmp.ne.s32.totalorder %s276, %s278
      %p285 = scmp.eq.s32.totalorder %s43, 1
      %p286 = por %p284, %p285
      %p287 = scmp.ne.s32.totalorder %s278, %s279
      %p288 = scmp.eq.s32.totalorder %s43, 0
      %p289 = por %p287, %p288
      %p290 = scmp.ne.s32.totalorder %s278, %s279
      %p291 = scmp.eq.s32.totalorder %s44, 1
      %p292 = por %p290, %p291
      %p294 = scmp.ne.s32.totalorder %s279, %s293
      %p295 = scmp.eq.s32.totalorder %s44, 0
      %p296 = por %p294, %p295
      %s298 = sadd.s32 %s297, 1
      %p301 = scmp.eq.s32.totalorder %s38, 1
      %p302 = scmp.ne.s32.totalorder %s297, %s299
      %p303 = scmp.eq.s32.totalorder %s38, 0
      %p304 = por %p302, %p303
      %p305 = scmp.ne.s32.totalorder %s297, %s299
      %p306 = scmp.eq.s32.totalorder %s43, 1
      %p307 = por %p305, %p306
      %p308 = scmp.ne.s32.totalorder %s299, %s300
      %p309 = scmp.eq.s32.totalorder %s43, 0
      %p310 = por %p308, %p309
      %p311 = scmp.ne.s32.totalorder %s299, %s300
      %p312 = scmp.eq.s32.totalorder %s44, 1
      %p313 = por %p311, %p312
      %p315 = scmp.ne.s32.totalorder %s300, %s314
      %p316 = scmp.eq.s32.totalorder %s44, 0
      %p317 = por %p315, %p316
      %s319 = sadd.s32 %s318, 1
      %p322 = scmp.eq.s32.totalorder %s38, 1
      %p323 = scmp.ne.s32.totalorder %s318, %s320
      %p324 = scmp.eq.s32.totalorder %s38, 0
      %p325 = por %p323, %p324
      %p326 = scmp.ne.s32.totalorder %s318, %s320
      %p327 = scmp.eq.s32.totalorder %s43, 1
      %p328 = por %p326, %p327
      %p329 = scmp.ne.s32.totalorder %s320, %s321
      %p330 = scmp.eq.s32.totalorder %s43, 0
      %p331 = por %p329, %p330
      %p332 = scmp.ne.s32.totalorder %s320, %s321
      %p333 = scmp.eq.s32.totalorder %s44, 1
      %p334 = por %p332, %p333
      %p336 = scmp.ne.s32.totalorder %s321, %s335
      %p337 = scmp.eq.s32.totalorder %s44, 0
      %p338 = por %p336, %p337
      %s340 = sadd.s32 %s339, 1
      %p343 = scmp.eq.s32.totalorder %s38, 1
      %p344 = scmp.ne.s32.totalorder %s339, %s341
      %p345 = scmp.eq.s32.totalorder %s38, 0
      %p346 = por %p344, %p345
      %p347 = scmp.ne.s32.totalorder %s339, %s341
      %p348 = scmp.eq.s32.totalorder %s43, 1
      %p349 = por %p347, %p348
      %p350 = scmp.ne.s32.totalorder %s341, %s342
      %p351 = scmp.eq.s32.totalorder %s43, 0
      %p352 = por %p350, %p351
      %p353 = scmp.ne.s32.totalorder %s341, %s342
      %p354 = scmp.eq.s32.totalorder %s44, 1
      %p355 = por %p353, %p354
      %p357 = scmp.ne.s32.totalorder %s342, %s356
      %p358 = scmp.eq.s32.totalorder %s44, 0
      %p359 = por %p357, %p358
      %s361 = sadd.s32 %s360, 1
      %p364 = scmp.eq.s32.totalorder %s38, 1
      %p365 = scmp.ne.s32.totalorder %s360, %s362
      %p366 = scmp.eq.s32.totalorder %s38, 0
      %p367 = por %p365, %p366
      %p368 = scmp.ne.s32.totalorder %s360, %s362
      %p369 = scmp.eq.s32.totalorder %s43, 1
      %p370 = por %p368, %p369
      %p371 = scmp.ne.s32.totalorder %s362, %s363
      %p372 = scmp.eq.s32.totalorder %s43, 0
      %p373 = por %p371, %p372
      %p374 = scmp.ne.s32.totalorder %s362, %s363
      %p375 = scmp.eq.s32.totalorder %s44, 1
      %p376 = por %p374, %p375
      %p378 = scmp.ne.s32.totalorder %s363, %s377
      %p379 = scmp.eq.s32.totalorder %s44, 0
      %p380 = por %p378, %p379
      %s382 = sadd.s32 %s381, 1
      %p385 = scmp.eq.s32.totalorder %s38, 1
      %p386 = scmp.ne.s32.totalorder %s381, %s383
      %p387 = scmp.eq.s32.totalorder %s38, 0
      %p388 = por %p386, %p387
      %p389 = scmp.ne.s32.totalorder %s381, %s383
      %p390 = scmp.eq.s32.totalorder %s43, 1
      %p391 = por %p389, %p390
      %p392 = scmp.ne.s32.totalorder %s383, %s384
      %p393 = scmp.eq.s32.totalorder %s43, 0
      %p394 = por %p392, %p393
      %p395 = scmp.ne.s32.totalorder %s383, %s384
      %p396 = scmp.eq.s32.totalorder %s44, 1
      %p397 = por %p395, %p396
      %p399 = scmp.ne.s32.totalorder %s384, %s398
      %p400 = scmp.eq.s32.totalorder %s44, 0
      %p401 = por %p399, %p400
      %s402 = ssub.s32 %s38, %s45
      %p403 = scmp.eq.s32.totalorder %s402, 0
      %s405 = sadd.s32 %s404, 1
      %s406 = scalar_select %p403, %s404, %s405
      %p409 = pneg %p403
      %p410 = scmp.eq.s32.totalorder %s38, 1
      %p411 = por %p409, %p410
      %p412 = scmp.ne.s32.totalorder %s404, %s407
      %p413 = scmp.eq.s32.totalorder %s38, 0
      %p414 = por %p412, %p413
      %p415 = scmp.ne.s32.totalorder %s404, %s407
      %p416 = scmp.eq.s32.totalorder %s43, 1
      %p417 = por %p415, %p416
      %p418 = scmp.ne.s32.totalorder %s407, %s408
      %p419 = scmp.eq.s32.totalorder %s43, 0
      %p420 = por %p418, %p419
      %p421 = scmp.ne.s32.totalorder %s407, %s408
      %p422 = scmp.eq.s32.totalorder %s44, 1
      %p423 = por %p421, %p422
      %p425 = scmp.ne.s32.totalorder %s408, %s424
      %p426 = scmp.eq.s32.totalorder %s44, 0
      %p427 = por %p425, %p426
      %s428 = ssub.s32 %s38, %s45
      %p429 = scmp.eq.s32.totalorder %s428, 0
      %s431 = sadd.s32 %s430, 1
      %s432 = scalar_select %p429, %s430, %s431
      %p435 = pneg %p429
      %p436 = scmp.eq.s32.totalorder %s38, 1
      %p437 = por %p435, %p436
      %p438 = scmp.ne.s32.totalorder %s430, %s433
      %p439 = scmp.eq.s32.totalorder %s38, 0
      %p440 = por %p438, %p439
      %p441 = scmp.ne.s32.totalorder %s430, %s433
      %p442 = scmp.eq.s32.totalorder %s43, 1
      %p443 = por %p441, %p442
      %p444 = scmp.ne.s32.totalorder %s433, %s434
      %p445 = scmp.eq.s32.totalorder %s43, 0
      %p446 = por %p444, %p445
      %p447 = scmp.ne.s32.totalorder %s433, %s434
      %p448 = scmp.eq.s32.totalorder %s44, 1
      %p449 = por %p447, %p448
      %p451 = scmp.ne.s32.totalorder %s434, %s450
      %p452 = scmp.eq.s32.totalorder %s44, 0
      %p453 = por %p451, %p452
      %p454 = scmp.le.s32.totalorder 1, %s38
      %p455 = scmp.lt.s32.totalorder %s38, 3
      %p456 = pnand %p454, %p455
      %p457 = pneg %p456
      // Predicated region
      $region9: #{tpu_custom_call.1} parent=5 // pred_check
        _
      $region10: #{tpu_custom_call.1} parent=5 // pred_check_branch
        %459 = sbr.rel (%p456) target = $region12
      $region11: #{tpu_custom_call.1} parent=5 // pred_region
        %s460 = ssub.s32 %s38, 1
        // Predicated region
        $region13: #{tpu_custom_call.1} parent=11 // pred_check
          %p461 = pneg %p163
        $region14: #{tpu_custom_call.1} parent=11 // pred_check_branch
          %463 = sbr.rel (%p461) target = $region16
        $region15: #{tpu_custom_call.1} parent=11 // pred_region
          %s465 = ssub.s32 64, 64
          %466 = vsyncadd [#allocation9], %s465
          %s468 = sshll.u32 [#allocation10], 4
          %s469 = int_to_ptr.vmem [resolvable:$true] %s468
          %471 = dma.hbm_to_vmem [thread:$0]  %s4, 64, %s469, [#allocation9]
        $region16: #{tpu_custom_call.1} parent=11 // pred_fallthru
          _
        // Predicated region
        $region17: #{tpu_custom_call.1} parent=11 // pred_check
          %p472 = pneg %p184
        $region18: #{tpu_custom_call.1} parent=11 // pred_check_branch
          %474 = sbr.rel (%p472) target = $region20
        $region19: #{tpu_custom_call.1} parent=11 // pred_region
          _
        $region20: #{tpu_custom_call.1} parent=11 // pred_fallthru
          _
        // Predicated region
        $region21: #{tpu_custom_call.1} parent=11 // pred_check
          %p475 = pneg %p205
        $region22: #{tpu_custom_call.1} parent=11 // pred_check_branch
          %477 = sbr.rel (%p475) target = $region24
        $region23: #{tpu_custom_call.1} parent=11 // pred_region
          _
        $region24: #{tpu_custom_call.1} parent=11 // pred_fallthru
          _
        // Predicated region
        $region25: #{tpu_custom_call.1} parent=11 // pred_check
          %p478 = pneg %p226
        $region26: #{tpu_custom_call.1} parent=11 // pred_check_branch
          %480 = sbr.rel (%p478) target = $region28
        $region27: #{tpu_custom_call.1} parent=11 // pred_region
          %s482 = ssub.s32 512, 512
          %483 = vsyncadd [#allocation12], %s482
          %s484 = sshll.u32 [#allocation11], 4
          %s485 = int_to_ptr.vmem [resolvable:$true] %s484
          %490 = dma.hbm_to_vmem [thread:$0]  %s7, 512, %s485, [#allocation12], 128, 128, 8
        $region28: #{tpu_custom_call.1} parent=11 // pred_fallthru
          _
        // Predicated region
        $region29: #{tpu_custom_call.1} parent=11 // pred_check
          %p491 = pneg %p247
        $region30: #{tpu_custom_call.1} parent=11 // pred_check_branch
          %493 = sbr.rel (%p491) target = $region32
        $region31: #{tpu_custom_call.1} parent=11 // pred_region
          _
        $region32: #{tpu_custom_call.1} parent=11 // pred_fallthru
          _
        // Predicated region
        $region33: #{tpu_custom_call.1} parent=11 // pred_check
          %p494 = pneg %p268
        $region34: #{tpu_custom_call.1} parent=11 // pred_check_branch
          %496 = sbr.rel (%p494) target = $region36
        $region35: #{tpu_custom_call.1} parent=11 // pred_region
          %s498 = ssub.s32 512, 512
          %499 = vsyncadd [#allocation12], %s498
          %s500 = sshll.u32 [#allocation13], 4
          %s501 = int_to_ptr.vmem [resolvable:$true] %s500
          %506 = dma.hbm_to_vmem [thread:$0]  %s9, 512, %s501, [#allocation12], 128, 128, 8
        $region36: #{tpu_custom_call.1} parent=11 // pred_fallthru
          _
        // Predicated region
        $region37: #{tpu_custom_call.1} parent=11 // pred_check
          %p507 = pneg %p289
        $region38: #{tpu_custom_call.1} parent=11 // pred_check_branch
          %509 = sbr.rel (%p507) target = $region40
        $region39: #{tpu_custom_call.1} parent=11 // pred_region
          %s511 = ssub.s32 16, 16
          %512 = vsyncadd [#allocation15], %s511
          %s514 = sshll.u32 [#allocation14], 4
          %s515 = int_to_ptr.vmem [resolvable:$true] %s514
          %517 = dma.hbm_to_vmem [thread:$0]  %s10, 16, %s515, [#allocation15]
        $region40: #{tpu_custom_call.1} parent=11 // pred_fallthru
          _
        // Predicated region
        $region41: #{tpu_custom_call.1} parent=11 // pred_check
          %p518 = pneg %p310
        $region42: #{tpu_custom_call.1} parent=11 // pred_check_branch
          %520 = sbr.rel (%p518) target = $region44
        $region43: #{tpu_custom_call.1} parent=11 // pred_region
          _
        $region44: #{tpu_custom_call.1} parent=11 // pred_fallthru
          _
        // Predicated region
        $region45: #{tpu_custom_call.1} parent=11 // pred_check
          %p521 = pneg %p331
        $region46: #{tpu_custom_call.1} parent=11 // pred_check_branch
          %523 = sbr.rel (%p521) target = $region48
        $region47: #{tpu_custom_call.1} parent=11 // pred_region
          %s525 = ssub.s32 128, 128
          %526 = vsyncadd [#allocation15], %s525
          %s528 = sshll.u32 [#allocation16], 4
          %s529 = int_to_ptr.vmem [resolvable:$true] %s528
          %531 = dma.hbm_to_vmem [thread:$0]  %s12, 128, %s529, [#allocation15]
        $region48: #{tpu_custom_call.1} parent=11 // pred_fallthru
          _
        // Predicated region
        $region49: #{tpu_custom_call.1} parent=11 // pred_check
          %p532 = pneg %p352
        $region50: #{tpu_custom_call.1} parent=11 // pred_check_branch
          %534 = sbr.rel (%p532) target = $region52
        $region51: #{tpu_custom_call.1} parent=11 // pred_region
          _
        $region52: #{tpu_custom_call.1} parent=11 // pred_fallthru
          _
        // Predicated region
        $region53: #{tpu_custom_call.1} parent=11 // pred_check
          %p535 = pneg %p373
        $region54: #{tpu_custom_call.1} parent=11 // pred_check_branch
          %537 = sbr.rel (%p535) target = $region56
        $region55: #{tpu_custom_call.1} parent=11 // pred_region
          _
        $region56: #{tpu_custom_call.1} parent=11 // pred_fallthru
          _
        // Predicated region
        $region57: #{tpu_custom_call.1} parent=11 // pred_check
          %p538 = pneg %p394
        $region58: #{tpu_custom_call.1} parent=11 // pred_check_branch
          %540 = sbr.rel (%p538) target = $region60
        $region59: #{tpu_custom_call.1} parent=11 // pred_region
          _
        $region60: #{tpu_custom_call.1} parent=11 // pred_fallthru
          _
      $region12: #{tpu_custom_call.1} parent=5 // pred_fallthru
        _
      %p541 = scmp.lt.s32.totalorder %s38, 2
      // Predicated region
      $region61: #{tpu_custom_call.1} parent=5 // pred_check
        %p542 = pneg %p541
      $region62: #{tpu_custom_call.1} parent=5 // pred_check_branch
        %544 = sbr.rel (%p542) target = $region64
      $region63: #{tpu_custom_call.1} parent=5 // pred_region
        // Predicated region
        $region65: #{tpu_custom_call.1} parent=63 // pred_check
          %p545 = pneg %p58
        $region66: #{tpu_custom_call.1} parent=63 // pred_check_branch
          %547 = sbr.rel (%p545) target = $region68
        $region67: #{tpu_custom_call.1} parent=63 // pred_region
          %s548 = sand.u32 %s48, 1
          %s549 = scalar_lea.sflag [#allocation3], %s548
          %s550 = sand.u32 %s48, 1
          %s551 = smul.addr %s550, 32
          %s552 = scalar_lea.vmem [#allocation2], %s551
          %s553 = smul.u32 4, %s38
          %s555 = ssub.s32 512, 512
          %556 = vsyncadd %s549, %s555
          %s557 = smul.addr %s553, 128
          %s558 = scalar_lea.hbm %s0, %s557
          %s559 = sshll.u32 %s552, 4
          %s560 = int_to_ptr.vmem [resolvable:$true] %s559
          %565 = dma.hbm_to_vmem [thread:$0]  %s558, 512, %s560, %s549, 128, 128, 8
        $region68: #{tpu_custom_call.1} parent=63 // pred_fallthru
          _
        // Predicated region
        $region69: #{tpu_custom_call.1} parent=63 // pred_check
          %p566 = pneg %p84
        $region70: #{tpu_custom_call.1} parent=63 // pred_check_branch
          %568 = sbr.rel (%p566) target = $region72
        $region71: #{tpu_custom_call.1} parent=63 // pred_region
          %s569 = sand.u32 %s38, 1
          %s570 = scalar_lea.sflag [#allocation6], %s569
          %s571 = sand.u32 %s74, 1
          %s572 = smul.addr %s571, 16
          %s573 = scalar_lea.vmem [#allocation5], %s572
          %s574 = smul.u32 4, %s38
          %s576 = ssub.s32 256, 256
          %577 = vsyncadd %s570, %s576
          %s578 = smul.addr %s574, 64
          %s579 = scalar_lea.hbm %s1, %s578
          %s580 = sshll.u32 %s573, 4
          %s581 = int_to_ptr.vmem [resolvable:$true] %s580
          %586 = dma.hbm_to_vmem [thread:$0]  %s579, 256, %s581, %s570, 64, 64, 4
        $region72: #{tpu_custom_call.1} parent=63 // pred_fallthru
          _
        // Predicated region
        $region73: #{tpu_custom_call.1} parent=63 // pred_check
          %p587 = pneg %p110
        $region74: #{tpu_custom_call.1} parent=63 // pred_check_branch
          %589 = sbr.rel (%p587) target = $region76
        $region75: #{tpu_custom_call.1} parent=63 // pred_region
          %s590 = sand.u32 %s38, 1
          %s591 = scalar_lea.sflag [#allocation6], %s590
          %s592 = sand.u32 %s100, 1
          %s593 = smul.addr %s592, 32
          %s594 = scalar_lea.vmem [#allocation7], %s593
          %s595 = smul.u32 4, %s38
          %s597 = ssub.s32 512, 512
          %598 = vsyncadd %s591, %s597
          %s599 = smul.addr %s595, 128
          %s600 = scalar_lea.hbm %s2, %s599
          %s601 = sshll.u32 %s594, 4
          %s602 = int_to_ptr.vmem [resolvable:$true] %s601
          %607 = dma.hbm_to_vmem [thread:$0]  %s600, 512, %s602, %s591, 128, 128, 8
        $region76: #{tpu_custom_call.1} parent=63 // pred_fallthru
          _
        // Predicated region
        $region77: #{tpu_custom_call.1} parent=63 // pred_check
          %p608 = pneg %p136
        $region78: #{tpu_custom_call.1} parent=63 // pred_check_branch
          %610 = sbr.rel (%p608) target = $region80
        $region79: #{tpu_custom_call.1} parent=63 // pred_region
          %s611 = sand.u32 %s38, 1
          %s612 = scalar_lea.sflag [#allocation9], %s611
          %s613 = sand.u32 %s126, 1
          %s614 = smul.addr %s613, 32
          %s615 = scalar_lea.vmem [#allocation8], %s614
          %s616 = smul.u32 4, %s38
          %s618 = ssub.s32 512, 512
          %619 = vsyncadd %s612, %s618
          %s620 = smul.addr %s616, 128
          %s621 = scalar_lea.hbm %s3, %s620
          %s622 = sshll.u32 %s615, 4
          %s623 = int_to_ptr.vmem [resolvable:$true] %s622
          %628 = dma.hbm_to_vmem [thread:$0]  %s621, 512, %s623, %s612, 128, 128, 8
        $region80: #{tpu_custom_call.1} parent=63 // pred_fallthru
          _
      $region64: #{tpu_custom_call.1} parent=5 // pred_fallthru
        _
      %p629 = scmp.le.s32.totalorder 1, %s38
      %p630 = scmp.lt.s32.totalorder %s38, 3
      %p631 = pnand %p629, %p630
      %p632 = pneg %p631
      // Predicated region
      $region81: #{tpu_custom_call.1} parent=5 // pred_check
        _
      $region82: #{tpu_custom_call.1} parent=5 // pred_check_branch
        %634 = sbr.rel (%p631) target = $region84
      $region83: #{tpu_custom_call.1} parent=5 // pred_region
        %s635 = ssub.s32 %s38, 1
        %s636 = sand.u32 %s51, 1
        %s637 = scalar_lea.sflag [#allocation3], %s636
        %s638 = sand.u32 %s51, 1
        %s639 = smul.addr %s638, 32
        %s640 = scalar_lea.vmem [#allocation2], %s639
        // Predicated region
        $region85: #{tpu_custom_call.1} parent=83 // pred_check
          %p641 = pneg %p64
        $region86: #{tpu_custom_call.1} parent=83 // pred_check_branch
          %643 = sbr.rel (%p641) target = $region88
        $region87: #{tpu_custom_call.1} parent=83 // pred_region
          %644 = dma.done %s637, 512
        $region88: #{tpu_custom_call.1} parent=83 // pred_fallthru
          _
        %s645 = sand.u32 %s43, 1
        %s646 = scalar_lea.sflag [#allocation6], %s645
        %s647 = sand.u32 %s77, 1
        %s648 = smul.addr %s647, 16
        %s649 = scalar_lea.vmem [#allocation5], %s648
        // Predicated region
        $region89: #{tpu_custom_call.1} parent=83 // pred_check
          %p650 = pneg %p90
        $region90: #{tpu_custom_call.1} parent=83 // pred_check_branch
          %652 = sbr.rel (%p650) target = $region92
        $region91: #{tpu_custom_call.1} parent=83 // pred_region
          %653 = dma.done %s646, 256
        $region92: #{tpu_custom_call.1} parent=83 // pred_fallthru
          _
        %s654 = sand.u32 %s43, 1
        %s655 = scalar_lea.sflag [#allocation6], %s654
        %s656 = sand.u32 %s103, 1
        %s657 = smul.addr %s656, 32
        %s658 = scalar_lea.vmem [#allocation7], %s657
        // Predicated region
        $region93: #{tpu_custom_call.1} parent=83 // pred_check
          %p659 = pneg %p116
        $region94: #{tpu_custom_call.1} parent=83 // pred_check_branch
          %661 = sbr.rel (%p659) target = $region96
        $region95: #{tpu_custom_call.1} parent=83 // pred_region
          %662 = dma.done %s655, 512
        $region96: #{tpu_custom_call.1} parent=83 // pred_fallthru
          _
        %s663 = sand.u32 %s43, 1
        %s664 = scalar_lea.sflag [#allocation9], %s663
        %s665 = sand.u32 %s129, 1
        %s666 = smul.addr %s665, 32
        %s667 = scalar_lea.vmem [#allocation8], %s666
        // Predicated region
        $region97: #{tpu_custom_call.1} parent=83 // pred_check
          %p668 = pneg %p142
        $region98: #{tpu_custom_call.1} parent=83 // pred_check_branch
          %670 = sbr.rel (%p668) target = $region100
        $region99: #{tpu_custom_call.1} parent=83 // pred_region
          %671 = dma.done %s664, 512
        $region100: #{tpu_custom_call.1} parent=83 // pred_fallthru
          _
        // Predicated region
        $region101: #{tpu_custom_call.1} parent=83 // pred_check
          %p672 = pneg %p163
        $region102: #{tpu_custom_call.1} parent=83 // pred_check_branch
          %674 = sbr.rel (%p672) target = $region104
        $region103: #{tpu_custom_call.1} parent=83 // pred_region
          %675 = dma.done [#allocation9], 64
        $region104: #{tpu_custom_call.1} parent=83 // pred_fallthru
          _
        // Predicated region
        $region105: #{tpu_custom_call.1} parent=83 // pred_check
          %p676 = pneg %p226
        $region106: #{tpu_custom_call.1} parent=83 // pred_check_branch
          %678 = sbr.rel (%p676) target = $region108
        $region107: #{tpu_custom_call.1} parent=83 // pred_region
          %679 = dma.done [#allocation12], 512
        $region108: #{tpu_custom_call.1} parent=83 // pred_fallthru
          _
        // Predicated region
        $region109: #{tpu_custom_call.1} parent=83 // pred_check
          %p680 = pneg %p268
        $region110: #{tpu_custom_call.1} parent=83 // pred_check_branch
          %682 = sbr.rel (%p680) target = $region112
        $region111: #{tpu_custom_call.1} parent=83 // pred_region
          %683 = dma.done [#allocation12], 512
        $region112: #{tpu_custom_call.1} parent=83 // pred_fallthru
          _
        // Predicated region
        $region113: #{tpu_custom_call.1} parent=83 // pred_check
          %p684 = pneg %p289
        $region114: #{tpu_custom_call.1} parent=83 // pred_check_branch
          %686 = sbr.rel (%p684) target = $region116
        $region115: #{tpu_custom_call.1} parent=83 // pred_region
          %687 = dma.done [#allocation15], 16
        $region116: #{tpu_custom_call.1} parent=83 // pred_fallthru
          _
        // Predicated region
        $region117: #{tpu_custom_call.1} parent=83 // pred_check
          %p688 = pneg %p331
        $region118: #{tpu_custom_call.1} parent=83 // pred_check_branch
          %690 = sbr.rel (%p688) target = $region120
        $region119: #{tpu_custom_call.1} parent=83 // pred_region
          %691 = dma.done [#allocation15], 128
        $region120: #{tpu_custom_call.1} parent=83 // pred_fallthru
          _
        %s692 = sand.u32 %s51, 1
        %s693 = scalar_lea.sflag [#allocation3], %s692
        %s694 = sand.u32 %s51, 1
        %s695 = smul.addr %s694, 32
        %s696 = scalar_lea.vmem [#allocation2], %s695
        %p697 = pneg %p64
        %p698 = pneg %p61
        %s699 = sand.u32 %s43, 1
        %s700 = scalar_lea.sflag [#allocation6], %s699
        %s701 = sand.u32 %s77, 1
        %s702 = smul.addr %s701, 16
        %s703 = scalar_lea.vmem [#allocation5], %s702
        %p704 = pneg %p90
        %p705 = pneg %p87
        %s706 = sand.u32 %s43, 1
        %s707 = scalar_lea.sflag [#allocation6], %s706
        %s708 = sand.u32 %s103, 1
        %s709 = smul.addr %s708, 32
        %s710 = scalar_lea.vmem [#allocation7], %s709
        %p711 = pneg %p116
        %p712 = pneg %p113
        %s713 = sand.u32 %s43, 1
        %s714 = scalar_lea.sflag [#allocation9], %s713
        %s715 = sand.u32 %s129, 1
        %s716 = smul.addr %s715, 32
        %s717 = scalar_lea.vmem [#allocation8], %s716
        %p718 = pneg %p142
        %p719 = pneg %p139
        %p720 = pneg %p163
        %p721 = pneg %p160
        %p722 = pneg %p184
        %p723 = pneg %p181
        %p724 = pneg %p205
        %p725 = pneg %p202
        %p726 = pneg %p226
        %p727 = pneg %p223
        %p728 = pneg %p247
        %p729 = pneg %p244
        %p730 = pneg %p268
        %p731 = pneg %p265
        %p732 = pneg %p289
        %p733 = pneg %p286
        %p734 = pneg %p310
        %p735 = pneg %p307
        %p736 = pneg %p331
        %p737 = pneg %p328
        %p738 = pneg %p352
        %p739 = pneg %p349
        %p740 = pneg %p373
        %p741 = pneg %p370
        %p742 = pneg %p394
        %p743 = pneg %p391
        %p744 = pneg %p420
        %p745 = pneg %p417
        %s746 = sand.u32 %s407, 1
        %s747 = scalar_lea.sflag [#allocation4], %s746
        %s748 = sand.u32 %s407, 1
        %s749 = smul.addr %s748, 32
        %s750 = scalar_lea.vmem [#allocation17], %s749
        %p751 = pneg %p446
        %p752 = pneg %p443
        %s753 = smul.u32 4, %s43
        %p754 = scmp.lt.s32.totalorder %s753, 7
        %s755 = scalar_select %p754, %s753, 7
        %s756 = smul.addr %s755, 4
        %s757 = smul.addr %s756, 8
        %s758 = scalar_lea.vmem %s17, %s757
        %s759 = smul.u32 4, %s43
        %s760 = smul.u32 4, %s43
        %s761 = smul.u32 4, %s43
        %s762 = smul.u32 4, %s43
        %s763 = smul.u32 4, %s43
        %s764 = smul.u32 4, %s43
        %p765 = scmp.lt.s32.totalorder %s764, 7
        %s766 = scalar_select %p765, %s764, 7
        %s767 = smul.addr %s766, 4
        %s768 = smul.addr %s767, 8
        %s769 = scalar_lea.vmem %s17, %s768
        %s770 = smul.u32 4, %s43
        %v771 = vld [vmem:[#allocation10] sm:$0xf]
        %v772 = vld [vmem:[%s640] sm:$0xff]
        %v773 = vld [vmem:[%s640 + $0x8] sm:$0xff]
        %v774 = vld [vmem:[%s640 + $0x10] sm:$0xff]
        %v775 = vld [vmem:[%s640 + $0x18] sm:$0xff]
        %v776 = vld [vmem:[%s5] sm:$0xff]
        %v777 = vld [vmem:[%s5 + $0x8] sm:$0xff]
        %v778 = vld [vmem:[%s5 + $0x10] sm:$0xff]
        %v779 = vld [vmem:[%s5 + $0x18] sm:$0xff]
        %v780 = vld [vmem:[%s6] sm:$0x1]
        %v782 = vlaneseq
        %v783 = vshrl.u32 %v782, 7
        %v784 = vsub.s32 0, %v783
        %v785 = vrot.slane %v780, %v784
        %vm787 = vcmask 261120
        %v789 = vsel %vm787, %v772, 0
        %v792 = vsel %vm787, %v773, 0
        %v795 = vsel %vm787, %v774, 0
        %v798 = vsel %vm787, %v775, 0
        %800 = vmatprep.subr.mxu0 0.0
        %801 = vmatpush1.msra.mxu0 %v776
        %802 = vmatprep.subr.mxu0 0.0
        %803 = vmatpush1.msra.mxu0 %v777
        %804 = vmatprep.subr.mxu0 0.0
        %805 = vmatpush1.msra.mxu0 %v778
        %806 = vmatprep.subr.mxu0 0.0
        %807 = vmatpush1.msra.mxu0 %v779
        %808 = vmatprep.subr.mxu0 0.0
        %809 = vmatpush1.msra.mxu0 0.0
        %810 = vmatprep.subr.mxu0 0.0
        %811 = vmatpush1.msra.mxu0 0.0
        %812 = vmatprep.subr.mxu0 0.0
        %813 = vmatpush1.msra.mxu0 0.0
        %814 = vmatprep.subr.mxu0 0.0
        %815 = vmatpush1.msra.mxu0 0.0
        %816 = vmatprep.subr.mxu0 0.0
        %817 = vmatpush1.msra.mxu0 0.0
        %818 = vmatprep.subr.mxu0 0.0
        %819 = vmatpush1.msra.mxu0 0.0
        %820 = vmatprep.subr.mxu0 0.0
        %821 = vmatpush1.msra.mxu0 0.0
        %822 = vmatprep.subr.mxu0 0.0
        %823 = vmatpush1.msra.mxu0 0.0
        %824 = vmatprep.subr.mxu0 0.0
        %825 = vmatpush1.msra.mxu0 0.0
        %826 = vmatprep.subr.mxu0 0.0
        %827 = vmatpush1.msra.mxu0 0.0
        %828 = vmatprep.subr.mxu0 0.0
        %829 = vmatpush1.msra.mxu0 0.0
        %830 = vmatprep.subr.mxu0 0.0
        %831 = vmatpush1.msra.mxu0 0.0
        %832 = vmatprep.subr.mxu0 0.0
        %833 = vmatpush1.msra.mxu0 0.0
        %834 = vmatprep.subr.mxu0 0.0
        %835 = vmatpush1.msra.mxu0 0.0
        %836 = vmatprep.subr.mxu0 0.0
        %837 = vmatpush1.msra.mxu0 0.0
        %838 = vmatprep.subr.mxu0 0.0
        %839 = vmatpush1.msra.mxu0 0.0
        %840 = vmatprep.subr.mxu0 0.0
        %841 = vmatpush1.msra.mxu0 0.0
        %842 = vmatprep.subr.mxu0 0.0
        %843 = vmatpush1.msra.mxu0 0.0
        %844 = vmatprep.subr.mxu0 0.0
        %845 = vmatpush1.msra.mxu0 0.0
        %846 = vmatprep.subr.mxu0 0.0
        %847 = vmatpush1.msra.mxu0 0.0
        %848 = vmatprep.subr.mxu0 0.0
        %849 = vmatpush1.msra.mxu0 0.0
        %850 = vmatprep.subr.mxu0 0.0
        %851 = vmatpush1.msra.mxu0 0.0
        %852 = vmatprep.subr.mxu0 0.0
        %853 = vmatpush1.msra.mxu0 0.0
        %854 = vmatprep.subr.mxu0 0.0
        %855 = vmatpush1.msra.mxu0 0.0
        %856 = vmatprep.subr.mxu0 0.0
        %857 = vmatpush1.msra.mxu0 0.0
        %858 = vmatprep.subr.mxu0 0.0
        %859 = vmatpush1.msra.mxu0 0.0
        %860 = vmatprep.subr.mxu0 0.0
        %861 = vmatpush1.msra.mxu0 0.0
        %862 = vmatprep.subr.mxu0 0.0
        %863 = vmatpush1.msra.mxu0 0.0
        %864 = vmatprep.mubr.f32.mxu0 0.0
        %865 = vmatmul.mubr.f32.gmra.mrb[0].mxu0 %v789
        %v866 = vpop.f32.mrb[0].mxu0
        %v867 = vadd.f32 %v785, %v866
        %v868 = vpop.f32.mrb[0].mxu0
        %869 = vmatprep.mubr.f32.mxu0 0.0
        %870 = vmatmul.mubr.f32.gmra.mrb[0].mxu0 %v792
        %v871 = vpop.f32.mrb[0].mxu0
        %v872 = vadd.f32 %v785, %v871
        %v873 = vpop.f32.mrb[0].mxu0
        %874 = vmatprep.mubr.f32.mxu0 0.0
        %875 = vmatmul.mubr.f32.gmra.mrb[0].mxu0 %v795
        %v876 = vpop.f32.mrb[0].mxu0
        %v877 = vadd.f32 %v785, %v876
        %v878 = vpop.f32.mrb[0].mxu0
        %879 = vmatprep.mubr.f32.mxu0 0.0
        %880 = vmatmul.mubr.f32.gmra.mrb[0].mxu0 %v798
        %v881 = vpop.f32.mrb[0].mxu0
        %v882 = vadd.f32 %v785, %v881
        %v883 = vpop.f32.mrb[0].mxu0
        %884 = vdwg.mxu0
        %v885 = vld [vmem:[%s658] sm:$0xff]
        %v886 = vld [vmem:[%s658 + $0x8] sm:$0xff]
        %v887 = vld [vmem:[%s658 + $0x10] sm:$0xff]
        %v888 = vld [vmem:[%s658 + $0x18] sm:$0xff]
        %v889 = vld [vmem:[#allocation11] sm:$0xff]
        %v890 = vld [vmem:[#allocation11 + $0x8] sm:$0xff]
        %v891 = vld [vmem:[#allocation11 + $0x10] sm:$0xff]
        %v892 = vld [vmem:[#allocation11 + $0x18] sm:$0xff]
        %v893 = vld [vmem:[%s8] sm:$0x1]
        %v895 = vlaneseq
        %v896 = vshrl.u32 %v895, 7
        %v897 = vsub.s32 0, %v896
        %v898 = vrot.slane %v893, %v897
        %v901 = vsel %vm787, %v885, 0
        %v904 = vsel %vm787, %v886, 0
        %v907 = vsel %vm787, %v887, 0
        %v910 = vsel %vm787, %v888, 0
        %912 = vmatprep.subr.mxu0 0.0
        %913 = vmatpush1.msra.mxu0 %v889
        %914 = vmatprep.subr.mxu0 0.0
        %915 = vmatpush1.msra.mxu0 %v890
        %916 = vmatprep.subr.mxu0 0.0
        %917 = vmatpush1.msra.mxu0 %v891
        %918 = vmatprep.subr.mxu0 0.0
        %919 = vmatpush1.msra.mxu0 %v892
        %920 = vmatprep.subr.mxu0 0.0
        %921 = vmatpush1.msra.mxu0 0.0
        %922 = vmatprep.subr.mxu0 0.0
        %923 = vmatpush1.msra.mxu0 0.0
        %924 = vmatprep.subr.mxu0 0.0
        %925 = vmatpush1.msra.mxu0 0.0
        %926 = vmatprep.subr.mxu0 0.0
        %927 = vmatpush1.msra.mxu0 0.0
        %928 = vmatprep.subr.mxu0 0.0
        %929 = vmatpush1.msra.mxu0 0.0
        %930 = vmatprep.subr.mxu0 0.0
        %931 = vmatpush1.msra.mxu0 0.0
        %932 = vmatprep.subr.mxu0 0.0
        %933 = vmatpush1.msra.mxu0 0.0
        %934 = vmatprep.subr.mxu0 0.0
        %935 = vmatpush1.msra.mxu0 0.0
        %936 = vmatprep.subr.mxu0 0.0
        %937 = vmatpush1.msra.mxu0 0.0
        %938 = vmatprep.subr.mxu0 0.0
        %939 = vmatpush1.msra.mxu0 0.0
        %940 = vmatprep.subr.mxu0 0.0
        %941 = vmatpush1.msra.mxu0 0.0
        %942 = vmatprep.subr.mxu0 0.0
        %943 = vmatpush1.msra.mxu0 0.0
        %944 = vmatprep.subr.mxu0 0.0
        %945 = vmatpush1.msra.mxu0 0.0
        %946 = vmatprep.subr.mxu0 0.0
        %947 = vmatpush1.msra.mxu0 0.0
        %948 = vmatprep.subr.mxu0 0.0
        %949 = vmatpush1.msra.mxu0 0.0
        %950 = vmatprep.subr.mxu0 0.0
        %951 = vmatpush1.msra.mxu0 0.0
        %952 = vmatprep.subr.mxu0 0.0
        %953 = vmatpush1.msra.mxu0 0.0
        %954 = vmatprep.subr.mxu0 0.0
        %955 = vmatpush1.msra.mxu0 0.0
        %956 = vmatprep.subr.mxu0 0.0
        %957 = vmatpush1.msra.mxu0 0.0
        %958 = vmatprep.subr.mxu0 0.0
        %959 = vmatpush1.msra.mxu0 0.0
        %960 = vmatprep.subr.mxu0 0.0
        %961 = vmatpush1.msra.mxu0 0.0
        %962 = vmatprep.subr.mxu0 0.0
        %963 = vmatpush1.msra.mxu0 0.0
        %964 = vmatprep.subr.mxu0 0.0
        %965 = vmatpush1.msra.mxu0 0.0
        %966 = vmatprep.subr.mxu0 0.0
        %967 = vmatpush1.msra.mxu0 0.0
        %968 = vmatprep.subr.mxu0 0.0
        %969 = vmatpush1.msra.mxu0 0.0
        %970 = vmatprep.subr.mxu0 0.0
        %971 = vmatpush1.msra.mxu0 0.0
        %972 = vmatprep.subr.mxu0 0.0
        %973 = vmatpush1.msra.mxu0 0.0
        %974 = vmatprep.subr.mxu0 0.0
        %975 = vmatpush1.msra.mxu0 0.0
        %976 = vmatprep.mubr.f32.mxu0 0.0
        %977 = vmatmul.mubr.f32.gmra.mrb[0].mxu0 %v901
        %v978 = vpop.f32.mrb[0].mxu0
        %v979 = vadd.f32 %v898, %v978
        %v980 = vpop.f32.mrb[0].mxu0
        %981 = vmatprep.mubr.f32.mxu0 0.0
        %982 = vmatmul.mubr.f32.gmra.mrb[0].mxu0 %v904
        %v983 = vpop.f32.mrb[0].mxu0
        %v984 = vadd.f32 %v898, %v983
        %v985 = vpop.f32.mrb[0].mxu0
        %986 = vmatprep.mubr.f32.mxu0 0.0
        %987 = vmatmul.mubr.f32.gmra.mrb[0].mxu0 %v907
        %v988 = vpop.f32.mrb[0].mxu0
        %v989 = vadd.f32 %v898, %v988
        %v990 = vpop.f32.mrb[0].mxu0
        %991 = vmatprep.mubr.f32.mxu0 0.0
        %992 = vmatmul.mubr.f32.gmra.mrb[0].mxu0 %v910
        %v993 = vpop.f32.mrb[0].mxu0
        %v994 = vadd.f32 %v898, %v993
        %v995 = vpop.f32.mrb[0].mxu0
        %996 = vdwg.mxu0
        %v997 = vld [vmem:[%s667] sm:$0xff]
        %v998 = vld [vmem:[%s667 + $0x8] sm:$0xff]
        %v999 = vld [vmem:[%s667 + $0x10] sm:$0xff]
        %v1000 = vld [vmem:[%s667 + $0x18] sm:$0xff]
        %v1001 = vld [vmem:[#allocation13] sm:$0xff]
        %v1002 = vld [vmem:[#allocation13 + $0x8] sm:$0xff]
        %v1003 = vld [vmem:[#allocation13 + $0x10] sm:$0xff]
        %v1004 = vld [vmem:[#allocation13 + $0x18] sm:$0xff]
        %v1005 = vld [vmem:[#allocation14] sm:$0x1]
        %v1007 = vlaneseq
        %v1008 = vshrl.u32 %v1007, 7
        %v1009 = vsub.s32 0, %v1008
        %v1010 = vrot.slane %v1005, %v1009
        %v1013 = vsel %vm787, %v997, 0
        %v1016 = vsel %vm787, %v998, 0
        %v1019 = vsel %vm787, %v999, 0
        %v1022 = vsel %vm787, %v1000, 0
        %1024 = vmatprep.subr.mxu0 0.0
        %1025 = vmatpush1.msra.mxu0 %v1001
        %1026 = vmatprep.subr.mxu0 0.0
        %1027 = vmatpush1.msra.mxu0 %v1002
        %1028 = vmatprep.subr.mxu0 0.0
        %1029 = vmatpush1.msra.mxu0 %v1003
        %1030 = vmatprep.subr.mxu0 0.0
        %1031 = vmatpush1.msra.mxu0 %v1004
        %1032 = vmatprep.subr.mxu0 0.0
        %1033 = vmatpush1.msra.mxu0 0.0
        %1034 = vmatprep.subr.mxu0 0.0
        %1035 = vmatpush1.msra.mxu0 0.0
        %1036 = vmatprep.subr.mxu0 0.0
        %1037 = vmatpush1.msra.mxu0 0.0
        %1038 = vmatprep.subr.mxu0 0.0
        %1039 = vmatpush1.msra.mxu0 0.0
        %1040 = vmatprep.subr.mxu0 0.0
        %1041 = vmatpush1.msra.mxu0 0.0
        %1042 = vmatprep.subr.mxu0 0.0
        %1043 = vmatpush1.msra.mxu0 0.0
        %1044 = vmatprep.subr.mxu0 0.0
        %1045 = vmatpush1.msra.mxu0 0.0
        %1046 = vmatprep.subr.mxu0 0.0
        %1047 = vmatpush1.msra.mxu0 0.0
        %1048 = vmatprep.subr.mxu0 0.0
        %1049 = vmatpush1.msra.mxu0 0.0
        %1050 = vmatprep.subr.mxu0 0.0
        %1051 = vmatpush1.msra.mxu0 0.0
        %1052 = vmatprep.subr.mxu0 0.0
        %1053 = vmatpush1.msra.mxu0 0.0
        %1054 = vmatprep.subr.mxu0 0.0
        %1055 = vmatpush1.msra.mxu0 0.0
        %1056 = vmatprep.subr.mxu0 0.0
        %1057 = vmatpush1.msra.mxu0 0.0
        %1058 = vmatprep.subr.mxu0 0.0
        %1059 = vmatpush1.msra.mxu0 0.0
        %1060 = vmatprep.subr.mxu0 0.0
        %1061 = vmatpush1.msra.mxu0 0.0
        %1062 = vmatprep.subr.mxu0 0.0
        %1063 = vmatpush1.msra.mxu0 0.0
        %1064 = vmatprep.subr.mxu0 0.0
        %1065 = vmatpush1.msra.mxu0 0.0
        %1066 = vmatprep.subr.mxu0 0.0
        %1067 = vmatpush1.msra.mxu0 0.0
        %1068 = vmatprep.subr.mxu0 0.0
        %1069 = vmatpush1.msra.mxu0 0.0
        %1070 = vmatprep.subr.mxu0 0.0
        %1071 = vmatpush1.msra.mxu0 0.0
        %1072 = vmatprep.subr.mxu0 0.0
        %1073 = vmatpush1.msra.mxu0 0.0
        %1074 = vmatprep.subr.mxu0 0.0
        %1075 = vmatpush1.msra.mxu0 0.0
        %1076 = vmatprep.subr.mxu0 0.0
        %1077 = vmatpush1.msra.mxu0 0.0
        %1078 = vmatprep.subr.mxu0 0.0
        %1079 = vmatpush1.msra.mxu0 0.0
        %1080 = vmatprep.subr.mxu0 0.0
        %1081 = vmatpush1.msra.mxu0 0.0
        %1082 = vmatprep.subr.mxu0 0.0
        %1083 = vmatpush1.msra.mxu0 0.0
        %1084 = vmatprep.subr.mxu0 0.0
        %1085 = vmatpush1.msra.mxu0 0.0
        %1086 = vmatprep.subr.mxu0 0.0
        %1087 = vmatpush1.msra.mxu0 0.0
        %1088 = vmatprep.mubr.f32.mxu0 0.0
        %1089 = vmatmul.mubr.f32.gmra.mrb[0].mxu0 %v1013
        %v1090 = vpop.f32.mrb[0].mxu0
        %v1091 = vadd.f32 %v1010, %v1090
        %v1092 = vpop.f32.mrb[0].mxu0
        %1093 = vmatprep.mubr.f32.mxu0 0.0
        %1094 = vmatmul.mubr.f32.gmra.mrb[0].mxu0 %v1016
        %v1095 = vpop.f32.mrb[0].mxu0
        %v1096 = vadd.f32 %v1010, %v1095
        %v1097 = vpop.f32.mrb[0].mxu0
        %1098 = vmatprep.mubr.f32.mxu0 0.0
        %1099 = vmatmul.mubr.f32.gmra.mrb[0].mxu0 %v1019
        %v1100 = vpop.f32.mrb[0].mxu0
        %v1101 = vadd.f32 %v1010, %v1100
        %v1102 = vpop.f32.mrb[0].mxu0
        %1103 = vmatprep.mubr.f32.mxu0 0.0
        %1104 = vmatmul.mubr.f32.gmra.mrb[0].mxu0 %v1022
        %v1105 = vpop.f32.mrb[0].mxu0
        %v1106 = vadd.f32 %v1010, %v1105
        %v1107 = vpop.f32.mrb[0].mxu0
        %1108 = vdwg.mxu0
        %v1109 = vld [vmem:[%s11] sm:$0xff]
        %v1110 = vld [vmem:[#allocation16] sm:$0xff]
        %v1111 = vld [vmem:[%s649] sm:$0xf]
        %v1112 = vld [vmem:[%s649 + $0x4] sm:$0xf]
        %v1113 = vld [vmem:[%s649 + $0x8] sm:$0xf]
        %v1114 = vld [vmem:[%s649 + $0xc] sm:$0xf]
        %v1115 = vld [vmem:[%s13] sm:$0xff]
        %1117 = vset.pattern.permute.xlu0 0
        %1118 = vperm.xlu0 %1117, %v1115
        %v1119 = vpop.permute.xlu0 %1118
        %vm1121 = vcmask 31744
        %v1123 = vsel %vm1121, %v1109, 0
        %vm1125 = vcmask 1043456
        %v1127 = vsel %vm1125, %v1111, 0
        %1129 = vmatprep.subr.mxu0 0.0
        %1130 = vmatpush1.msra.mxu0 %v1127
        %1131 = vmatprep.subr.mxu0 0.0
        %1132 = vmatpush1.msra.mxu0 0.0
        %1133 = vmatprep.subr.mxu0 0.0
        %1134 = vmatpush1.msra.mxu0 0.0
        %1135 = vmatprep.subr.mxu0 0.0
        %1136 = vmatpush1.msra.mxu0 0.0
        %1137 = vmatprep.subr.mxu0 0.0
        %1138 = vmatpush1.msra.mxu0 0.0
        %1139 = vmatprep.subr.mxu0 0.0
        %1140 = vmatpush1.msra.mxu0 0.0
        %1141 = vmatprep.subr.mxu0 0.0
        %1142 = vmatpush1.msra.mxu0 0.0
        %1143 = vmatprep.subr.mxu0 0.0
        %1144 = vmatpush1.msra.mxu0 0.0
        %1145 = vmatprep.subr.mxu0 0.0
        %1146 = vmatpush1.msra.mxu0 0.0
        %1147 = vmatprep.subr.mxu0 0.0
        %1148 = vmatpush1.msra.mxu0 0.0
        %1149 = vmatprep.subr.mxu0 0.0
        %1150 = vmatpush1.msra.mxu0 0.0
        %1151 = vmatprep.subr.mxu0 0.0
        %1152 = vmatpush1.msra.mxu0 0.0
        %1153 = vmatprep.subr.mxu0 0.0
        %1154 = vmatpush1.msra.mxu0 0.0
        %1155 = vmatprep.subr.mxu0 0.0
        %1156 = vmatpush1.msra.mxu0 0.0
        %1157 = vmatprep.subr.mxu0 0.0
        %1158 = vmatpush1.msra.mxu0 0.0
        %1159 = vmatprep.subr.mxu0 0.0
        %1160 = vmatpush1.msra.mxu0 0.0
        %1161 = vmatprep.subr.mxu0 0.0
        %1162 = vmatpush1.msra.mxu0 0.0
        %1163 = vmatprep.subr.mxu0 0.0
        %1164 = vmatpush1.msra.mxu0 0.0
        %1165 = vmatprep.subr.mxu0 0.0
        %1166 = vmatpush1.msra.mxu0 0.0
        %1167 = vmatprep.subr.mxu0 0.0
        %1168 = vmatpush1.msra.mxu0 0.0
        %1169 = vmatprep.subr.mxu0 0.0
        %1170 = vmatpush1.msra.mxu0 0.0
        %1171 = vmatprep.subr.mxu0 0.0
        %1172 = vmatpush1.msra.mxu0 0.0
        %1173 = vmatprep.subr.mxu0 0.0
        %1174 = vmatpush1.msra.mxu0 0.0
        %1175 = vmatprep.subr.mxu0 0.0
        %1176 = vmatpush1.msra.mxu0 0.0
        %1177 = vmatprep.subr.mxu0 0.0
        %1178 = vmatpush1.msra.mxu0 0.0
        %1179 = vmatprep.subr.mxu0 0.0
        %1180 = vmatpush1.msra.mxu0 0.0
        %1181 = vmatprep.subr.mxu0 0.0
        %1182 = vmatpush1.msra.mxu0 0.0
        %1183 = vmatprep.subr.mxu0 0.0
        %1184 = vmatpush1.msra.mxu0 0.0
        %1185 = vmatprep.subr.mxu0 0.0
        %1186 = vmatpush1.msra.mxu0 0.0
        %1187 = vmatprep.subr.mxu0 0.0
        %1188 = vmatpush1.msra.mxu0 0.0
        %1189 = vmatprep.subr.mxu0 0.0
        %1190 = vmatpush1.msra.mxu0 0.0
        %1191 = vmatprep.subr.mxu0 0.0
        %1192 = vmatpush1.msra.mxu0 0.0
        %1193 = vmatprep.mubr.f32.mxu0 0.0
        %1194 = vmatmul.mubr.f32.gmra.mrb[0].mxu0 %v1123
        %v1195 = vpop.f32.mrb[0].mxu0
        %v1196 = vadd.f32 %v1119, %v1195
        %v1197 = vpop.f32.mrb[0].mxu0
        %1198 = vdwg.mxu0
        %v1200 = vsel %vm1125, %v1112, 0
        %1202 = vmatprep.subr.mxu0 0.0
        %1203 = vmatpush1.msra.mxu0 %v1200
        %1204 = vmatprep.subr.mxu0 0.0
        %1205 = vmatpush1.msra.mxu0 0.0
        %1206 = vmatprep.subr.mxu0 0.0
        %1207 = vmatpush1.msra.mxu0 0.0
        %1208 = vmatprep.subr.mxu0 0.0
        %1209 = vmatpush1.msra.mxu0 0.0
        %1210 = vmatprep.subr.mxu0 0.0
        %1211 = vmatpush1.msra.mxu0 0.0
        %1212 = vmatprep.subr.mxu0 0.0
        %1213 = vmatpush1.msra.mxu0 0.0
        %1214 = vmatprep.subr.mxu0 0.0
        %1215 = vmatpush1.msra.mxu0 0.0
        %1216 = vmatprep.subr.mxu0 0.0
        %1217 = vmatpush1.msra.mxu0 0.0
        %1218 = vmatprep.subr.mxu0 0.0
        %1219 = vmatpush1.msra.mxu0 0.0
        %1220 = vmatprep.subr.mxu0 0.0
        %1221 = vmatpush1.msra.mxu0 0.0
        %1222 = vmatprep.subr.mxu0 0.0
        %1223 = vmatpush1.msra.mxu0 0.0
        %1224 = vmatprep.subr.mxu0 0.0
        %1225 = vmatpush1.msra.mxu0 0.0
        %1226 = vmatprep.subr.mxu0 0.0
        %1227 = vmatpush1.msra.mxu0 0.0
        %1228 = vmatprep.subr.mxu0 0.0
        %1229 = vmatpush1.msra.mxu0 0.0
        %1230 = vmatprep.subr.mxu0 0.0
        %1231 = vmatpush1.msra.mxu0 0.0
        %1232 = vmatprep.subr.mxu0 0.0
        %1233 = vmatpush1.msra.mxu0 0.0
        %1234 = vmatprep.subr.mxu0 0.0
        %1235 = vmatpush1.msra.mxu0 0.0
        %1236 = vmatprep.subr.mxu0 0.0
        %1237 = vmatpush1.msra.mxu0 0.0
        %1238 = vmatprep.subr.mxu0 0.0
        %1239 = vmatpush1.msra.mxu0 0.0
        %1240 = vmatprep.subr.mxu0 0.0
        %1241 = vmatpush1.msra.mxu0 0.0
        %1242 = vmatprep.subr.mxu0 0.0
        %1243 = vmatpush1.msra.mxu0 0.0
        %1244 = vmatprep.subr.mxu0 0.0
        %1245 = vmatpush1.msra.mxu0 0.0
        %1246 = vmatprep.subr.mxu0 0.0
        %1247 = vmatpush1.msra.mxu0 0.0
        %1248 = vmatprep.subr.mxu0 0.0
        %1249 = vmatpush1.msra.mxu0 0.0
        %1250 = vmatprep.subr.mxu0 0.0
        %1251 = vmatpush1.msra.mxu0 0.0
        %1252 = vmatprep.subr.mxu0 0.0
        %1253 = vmatpush1.msra.mxu0 0.0
        %1254 = vmatprep.subr.mxu0 0.0
        %1255 = vmatpush1.msra.mxu0 0.0
        %1256 = vmatprep.subr.mxu0 0.0
        %1257 = vmatpush1.msra.mxu0 0.0
        %1258 = vmatprep.subr.mxu0 0.0
        %1259 = vmatpush1.msra.mxu0 0.0
        %1260 = vmatprep.subr.mxu0 0.0
        %1261 = vmatpush1.msra.mxu0 0.0
        %1262 = vmatprep.subr.mxu0 0.0
        %1263 = vmatpush1.msra.mxu0 0.0
        %1264 = vmatprep.subr.mxu0 0.0
        %1265 = vmatpush1.msra.mxu0 0.0
        %1266 = vmatprep.mubr.f32.mxu0 0.0
        %1267 = vmatmul.mubr.f32.gmra.mrb[0].mxu0 %v1123
        %v1268 = vpop.f32.mrb[0].mxu0
        %v1269 = vadd.f32 %v1119, %v1268
        %v1270 = vpop.f32.mrb[0].mxu0
        %1271 = vdwg.mxu0
        %v1273 = vsel %vm1125, %v1113, 0
        %1275 = vmatprep.subr.mxu0 0.0
        %1276 = vmatpush1.msra.mxu0 %v1273
        %1277 = vmatprep.subr.mxu0 0.0
        %1278 = vmatpush1.msra.mxu0 0.0
        %1279 = vmatprep.subr.mxu0 0.0
        %1280 = vmatpush1.msra.mxu0 0.0
        %1281 = vmatprep.subr.mxu0 0.0
        %1282 = vmatpush1.msra.mxu0 0.0
        %1283 = vmatprep.subr.mxu0 0.0
        %1284 = vmatpush1.msra.mxu0 0.0
        %1285 = vmatprep.subr.mxu0 0.0
        %1286 = vmatpush1.msra.mxu0 0.0
        %1287 = vmatprep.subr.mxu0 0.0
        %1288 = vmatpush1.msra.mxu0 0.0
        %1289 = vmatprep.subr.mxu0 0.0
        %1290 = vmatpush1.msra.mxu0 0.0
        %1291 = vmatprep.subr.mxu0 0.0
        %1292 = vmatpush1.msra.mxu0 0.0
        %1293 = vmatprep.subr.mxu0 0.0
        %1294 = vmatpush1.msra.mxu0 0.0
        %1295 = vmatprep.subr.mxu0 0.0
        %1296 = vmatpush1.msra.mxu0 0.0
        %1297 = vmatprep.subr.mxu0 0.0
        %1298 = vmatpush1.msra.mxu0 0.0
        %1299 = vmatprep.subr.mxu0 0.0
        %1300 = vmatpush1.msra.mxu0 0.0
        %1301 = vmatprep.subr.mxu0 0.0
        %1302 = vmatpush1.msra.mxu0 0.0
        %1303 = vmatprep.subr.mxu0 0.0
        %1304 = vmatpush1.msra.mxu0 0.0
        %1305 = vmatprep.subr.mxu0 0.0
        %1306 = vmatpush1.msra.mxu0 0.0
        %1307 = vmatprep.subr.mxu0 0.0
        %1308 = vmatpush1.msra.mxu0 0.0
        %1309 = vmatprep.subr.mxu0 0.0
        %1310 = vmatpush1.msra.mxu0 0.0
        %1311 = vmatprep.subr.mxu0 0.0
        %1312 = vmatpush1.msra.mxu0 0.0
        %1313 = vmatprep.subr.mxu0 0.0
        %1314 = vmatpush1.msra.mxu0 0.0
        %1315 = vmatprep.subr.mxu0 0.0
        %1316 = vmatpush1.msra.mxu0 0.0
        %1317 = vmatprep.subr.mxu0 0.0
        %1318 = vmatpush1.msra.mxu0 0.0
        %1319 = vmatprep.subr.mxu0 0.0
        %1320 = vmatpush1.msra.mxu0 0.0
        %1321 = vmatprep.subr.mxu0 0.0
        %1322 = vmatpush1.msra.mxu0 0.0
        %1323 = vmatprep.subr.mxu0 0.0
        %1324 = vmatpush1.msra.mxu0 0.0
        %1325 = vmatprep.subr.mxu0 0.0
        %1326 = vmatpush1.msra.mxu0 0.0
        %1327 = vmatprep.subr.mxu0 0.0
        %1328 = vmatpush1.msra.mxu0 0.0
        %1329 = vmatprep.subr.mxu0 0.0
        %1330 = vmatpush1.msra.mxu0 0.0
        %1331 = vmatprep.subr.mxu0 0.0
        %1332 = vmatpush1.msra.mxu0 0.0
        %1333 = vmatprep.subr.mxu0 0.0
        %1334 = vmatpush1.msra.mxu0 0.0
        %1335 = vmatprep.subr.mxu0 0.0
        %1336 = vmatpush1.msra.mxu0 0.0
        %1337 = vmatprep.subr.mxu0 0.0
        %1338 = vmatpush1.msra.mxu0 0.0
        %1339 = vmatprep.mubr.f32.mxu0 0.0
        %1340 = vmatmul.mubr.f32.gmra.mrb[0].mxu0 %v1123
        %v1341 = vpop.f32.mrb[0].mxu0
        %v1342 = vadd.f32 %v1119, %v1341
        %v1343 = vpop.f32.mrb[0].mxu0
        %1344 = vdwg.mxu0
        %v1346 = vsel %vm1125, %v1114, 0
        %1348 = vmatprep.subr.mxu0 0.0
        %1349 = vmatpush1.msra.mxu0 %v1346
        %1350 = vmatprep.subr.mxu0 0.0
        %1351 = vmatpush1.msra.mxu0 0.0
        %1352 = vmatprep.subr.mxu0 0.0
        %1353 = vmatpush1.msra.mxu0 0.0
        %1354 = vmatprep.subr.mxu0 0.0
        %1355 = vmatpush1.msra.mxu0 0.0
        %1356 = vmatprep.subr.mxu0 0.0
        %1357 = vmatpush1.msra.mxu0 0.0
        %1358 = vmatprep.subr.mxu0 0.0
        %1359 = vmatpush1.msra.mxu0 0.0
        %1360 = vmatprep.subr.mxu0 0.0
        %1361 = vmatpush1.msra.mxu0 0.0
        %1362 = vmatprep.subr.mxu0 0.0
        %1363 = vmatpush1.msra.mxu0 0.0
        %1364 = vmatprep.subr.mxu0 0.0
        %1365 = vmatpush1.msra.mxu0 0.0
        %1366 = vmatprep.subr.mxu0 0.0
        %1367 = vmatpush1.msra.mxu0 0.0
        %1368 = vmatprep.subr.mxu0 0.0
        %1369 = vmatpush1.msra.mxu0 0.0
        %1370 = vmatprep.subr.mxu0 0.0
        %1371 = vmatpush1.msra.mxu0 0.0
        %1372 = vmatprep.subr.mxu0 0.0
        %1373 = vmatpush1.msra.mxu0 0.0
        %1374 = vmatprep.subr.mxu0 0.0
        %1375 = vmatpush1.msra.mxu0 0.0
        %1376 = vmatprep.subr.mxu0 0.0
        %1377 = vmatpush1.msra.mxu0 0.0
        %1378 = vmatprep.subr.mxu0 0.0
        %1379 = vmatpush1.msra.mxu0 0.0
        %1380 = vmatprep.subr.mxu0 0.0
        %1381 = vmatpush1.msra.mxu0 0.0
        %1382 = vmatprep.subr.mxu0 0.0
        %1383 = vmatpush1.msra.mxu0 0.0
        %1384 = vmatprep.subr.mxu0 0.0
        %1385 = vmatpush1.msra.mxu0 0.0
        %1386 = vmatprep.subr.mxu0 0.0
        %1387 = vmatpush1.msra.mxu0 0.0
        %1388 = vmatprep.subr.mxu0 0.0
        %1389 = vmatpush1.msra.mxu0 0.0
        %1390 = vmatprep.subr.mxu0 0.0
        %1391 = vmatpush1.msra.mxu0 0.0
        %1392 = vmatprep.subr.mxu0 0.0
        %1393 = vmatpush1.msra.mxu0 0.0
        %1394 = vmatprep.subr.mxu0 0.0
        %1395 = vmatpush1.msra.mxu0 0.0
        %1396 = vmatprep.subr.mxu0 0.0
        %1397 = vmatpush1.msra.mxu0 0.0
        %1398 = vmatprep.subr.mxu0 0.0
        %1399 = vmatpush1.msra.mxu0 0.0
        %1400 = vmatprep.subr.mxu0 0.0
        %1401 = vmatpush1.msra.mxu0 0.0
        %1402 = vmatprep.subr.mxu0 0.0
        %1403 = vmatpush1.msra.mxu0 0.0
        %1404 = vmatprep.subr.mxu0 0.0
        %1405 = vmatpush1.msra.mxu0 0.0
        %1406 = vmatprep.subr.mxu0 0.0
        %1407 = vmatpush1.msra.mxu0 0.0
        %1408 = vmatprep.subr.mxu0 0.0
        %1409 = vmatpush1.msra.mxu0 0.0
        %1410 = vmatprep.subr.mxu0 0.0
        %1411 = vmatpush1.msra.mxu0 0.0
        %1412 = vmatprep.mubr.f32.mxu0 0.0
        %1413 = vmatmul.mubr.f32.gmra.mrb[0].mxu0 %v1123
        %v1414 = vpop.f32.mrb[0].mxu0
        %v1415 = vadd.f32 %v1119, %v1414
        %v1416 = vpop.f32.mrb[0].mxu0
        %1417 = vdwg.mxu0
        %vm1418 = vcmask 64512
        %v1420 = vsel %vm1418, %v1110, 0
        %1422 = vmatprep.subr.mxu0 0.0
        %1423 = vmatpush1.msra.mxu0 %v979
        %1424 = vmatprep.subr.mxu0 0.0
        %1425 = vmatpush1.msra.mxu0 0.0
        %1426 = vmatprep.subr.mxu0 0.0
        %1427 = vmatpush1.msra.mxu0 0.0
        %1428 = vmatprep.subr.mxu0 0.0
        %1429 = vmatpush1.msra.mxu0 0.0
        %1430 = vmatprep.subr.mxu0 0.0
        %1431 = vmatpush1.msra.mxu0 0.0
        %1432 = vmatprep.subr.mxu0 0.0
        %1433 = vmatpush1.msra.mxu0 0.0
        %1434 = vmatprep.subr.mxu0 0.0
        %1435 = vmatpush1.msra.mxu0 0.0
        %1436 = vmatprep.subr.mxu0 0.0
        %1437 = vmatpush1.msra.mxu0 0.0
        %1438 = vmatprep.subr.mxu0 0.0
        %1439 = vmatpush1.msra.mxu0 0.0
        %1440 = vmatprep.subr.mxu0 0.0
        %1441 = vmatpush1.msra.mxu0 0.0
        %1442 = vmatprep.subr.mxu0 0.0
        %1443 = vmatpush1.msra.mxu0 0.0
        %1444 = vmatprep.subr.mxu0 0.0
        %1445 = vmatpush1.msra.mxu0 0.0
        %1446 = vmatprep.subr.mxu0 0.0
        %1447 = vmatpush1.msra.mxu0 0.0
        %1448 = vmatprep.subr.mxu0 0.0
        %1449 = vmatpush1.msra.mxu0 0.0
        %1450 = vmatprep.subr.mxu0 0.0
        %1451 = vmatpush1.msra.mxu0 0.0
        %1452 = vmatprep.subr.mxu0 0.0
        %1453 = vmatpush1.msra.mxu0 0.0
        %1454 = vmatprep.subr.mxu0 0.0
        %1455 = vmatpush1.msra.mxu0 0.0
        %1456 = vmatprep.subr.mxu0 0.0
        %1457 = vmatpush1.msra.mxu0 0.0
        %1458 = vmatprep.subr.mxu0 0.0
        %1459 = vmatpush1.msra.mxu0 0.0
        %1460 = vmatprep.subr.mxu0 0.0
        %1461 = vmatpush1.msra.mxu0 0.0
        %1462 = vmatprep.subr.mxu0 0.0
        %1463 = vmatpush1.msra.mxu0 0.0
        %1464 = vmatprep.subr.mxu0 0.0
        %1465 = vmatpush1.msra.mxu0 0.0
        %1466 = vmatprep.subr.mxu0 0.0
        %1467 = vmatpush1.msra.mxu0 0.0
        %1468 = vmatprep.subr.mxu0 0.0
        %1469 = vmatpush1.msra.mxu0 0.0
        %1470 = vmatprep.subr.mxu0 0.0
        %1471 = vmatpush1.msra.mxu0 0.0
        %1472 = vmatprep.subr.mxu0 0.0
        %1473 = vmatpush1.msra.mxu0 0.0
        %1474 = vmatprep.subr.mxu0 0.0
        %1475 = vmatpush1.msra.mxu0 0.0
        %1476 = vmatprep.subr.mxu0 0.0
        %1477 = vmatpush1.msra.mxu0 0.0
        %1478 = vmatprep.subr.mxu0 0.0
        %1479 = vmatpush1.msra.mxu0 0.0
        %1480 = vmatprep.subr.mxu0 0.0
        %1481 = vmatpush1.msra.mxu0 0.0
        %1482 = vmatprep.subr.mxu0 0.0
        %1483 = vmatpush1.msra.mxu0 0.0
        %1484 = vmatprep.subr.mxu0 0.0
        %1485 = vmatpush1.msra.mxu0 0.0
        %1486 = vmatprep.mubr.f32.mxu0 0.0
        %1487 = vmatmul.mubr.f32.gmra.mrb[0].mxu0 %v1420
        %v1488 = vpop.f32.mrb[0].mxu0
        %v1489 = vadd.f32 0.0, %v1488
        %v1490 = vpop.f32.mrb[0].mxu0
        %1491 = vdwg.mxu0
        %1492 = vmatprep.subr.mxu0 0.0
        %1493 = vmatpush1.msra.mxu0 %v984
        %1494 = vmatprep.subr.mxu0 0.0
        %1495 = vmatpush1.msra.mxu0 0.0
        %1496 = vmatprep.subr.mxu0 0.0
        %1497 = vmatpush1.msra.mxu0 0.0
        %1498 = vmatprep.subr.mxu0 0.0
        %1499 = vmatpush1.msra.mxu0 0.0
        %1500 = vmatprep.subr.mxu0 0.0
        %1501 = vmatpush1.msra.mxu0 0.0
        %1502 = vmatprep.subr.mxu0 0.0
        %1503 = vmatpush1.msra.mxu0 0.0
        %1504 = vmatprep.subr.mxu0 0.0
        %1505 = vmatpush1.msra.mxu0 0.0
        %1506 = vmatprep.subr.mxu0 0.0
        %1507 = vmatpush1.msra.mxu0 0.0
        %1508 = vmatprep.subr.mxu0 0.0
        %1509 = vmatpush1.msra.mxu0 0.0
        %1510 = vmatprep.subr.mxu0 0.0
        %1511 = vmatpush1.msra.mxu0 0.0
        %1512 = vmatprep.subr.mxu0 0.0
        %1513 = vmatpush1.msra.mxu0 0.0
        %1514 = vmatprep.subr.mxu0 0.0
        %1515 = vmatpush1.msra.mxu0 0.0
        %1516 = vmatprep.subr.mxu0 0.0
        %1517 = vmatpush1.msra.mxu0 0.0
        %1518 = vmatprep.subr.mxu0 0.0
        %1519 = vmatpush1.msra.mxu0 0.0
        %1520 = vmatprep.subr.mxu0 0.0
        %1521 = vmatpush1.msra.mxu0 0.0
        %1522 = vmatprep.subr.mxu0 0.0
        %1523 = vmatpush1.msra.mxu0 0.0
        %1524 = vmatprep.subr.mxu0 0.0
        %1525 = vmatpush1.msra.mxu0 0.0
        %1526 = vmatprep.subr.mxu0 0.0
        %1527 = vmatpush1.msra.mxu0 0.0
        %1528 = vmatprep.subr.mxu0 0.0
        %1529 = vmatpush1.msra.mxu0 0.0
        %1530 = vmatprep.subr.mxu0 0.0
        %1531 = vmatpush1.msra.mxu0 0.0
        %1532 = vmatprep.subr.mxu0 0.0
        %1533 = vmatpush1.msra.mxu0 0.0
        %1534 = vmatprep.subr.mxu0 0.0
        %1535 = vmatpush1.msra.mxu0 0.0
        %1536 = vmatprep.subr.mxu0 0.0
        %1537 = vmatpush1.msra.mxu0 0.0
        %1538 = vmatprep.subr.mxu0 0.0
        %1539 = vmatpush1.msra.mxu0 0.0
        %1540 = vmatprep.subr.mxu0 0.0
        %1541 = vmatpush1.msra.mxu0 0.0
        %1542 = vmatprep.subr.mxu0 0.0
        %1543 = vmatpush1.msra.mxu0 0.0
        %1544 = vmatprep.subr.mxu0 0.0
        %1545 = vmatpush1.msra.mxu0 0.0
        %1546 = vmatprep.subr.mxu0 0.0
        %1547 = vmatpush1.msra.mxu0 0.0
        %1548 = vmatprep.subr.mxu0 0.0
        %1549 = vmatpush1.msra.mxu0 0.0
        %1550 = vmatprep.subr.mxu0 0.0
        %1551 = vmatpush1.msra.mxu0 0.0
        %1552 = vmatprep.subr.mxu0 0.0
        %1553 = vmatpush1.msra.mxu0 0.0
        %1554 = vmatprep.subr.mxu0 0.0
        %1555 = vmatpush1.msra.mxu0 0.0
        %1556 = vmatprep.mubr.f32.mxu0 0.0
        %1557 = vmatmul.mubr.f32.gmra.mrb[0].mxu0 %v1420
        %v1558 = vpop.f32.mrb[0].mxu0
        %v1559 = vadd.f32 0.0, %v1558
        %v1560 = vpop.f32.mrb[0].mxu0
        %1561 = vdwg.mxu0
        %1562 = vmatprep.subr.mxu0 0.0
        %1563 = vmatpush1.msra.mxu0 %v989
        %1564 = vmatprep.subr.mxu0 0.0
        %1565 = vmatpush1.msra.mxu0 0.0
        %1566 = vmatprep.subr.mxu0 0.0
        %1567 = vmatpush1.msra.mxu0 0.0
        %1568 = vmatprep.subr.mxu0 0.0
        %1569 = vmatpush1.msra.mxu0 0.0
        %1570 = vmatprep.subr.mxu0 0.0
        %1571 = vmatpush1.msra.mxu0 0.0
        %1572 = vmatprep.subr.mxu0 0.0
        %1573 = vmatpush1.msra.mxu0 0.0
        %1574 = vmatprep.subr.mxu0 0.0
        %1575 = vmatpush1.msra.mxu0 0.0
        %1576 = vmatprep.subr.mxu0 0.0
        %1577 = vmatpush1.msra.mxu0 0.0
        %1578 = vmatprep.subr.mxu0 0.0
        %1579 = vmatpush1.msra.mxu0 0.0
        %1580 = vmatprep.subr.mxu0 0.0
        %1581 = vmatpush1.msra.mxu0 0.0
        %1582 = vmatprep.subr.mxu0 0.0
        %1583 = vmatpush1.msra.mxu0 0.0
        %1584 = vmatprep.subr.mxu0 0.0
        %1585 = vmatpush1.msra.mxu0 0.0
        %1586 = vmatprep.subr.mxu0 0.0
        %1587 = vmatpush1.msra.mxu0 0.0
        %1588 = vmatprep.subr.mxu0 0.0
        %1589 = vmatpush1.msra.mxu0 0.0
        %1590 = vmatprep.subr.mxu0 0.0
        %1591 = vmatpush1.msra.mxu0 0.0
        %1592 = vmatprep.subr.mxu0 0.0
        %1593 = vmatpush1.msra.mxu0 0.0
        %1594 = vmatprep.subr.mxu0 0.0
        %1595 = vmatpush1.msra.mxu0 0.0
        %1596 = vmatprep.subr.mxu0 0.0
        %1597 = vmatpush1.msra.mxu0 0.0
        %1598 = vmatprep.subr.mxu0 0.0
        %1599 = vmatpush1.msra.mxu0 0.0
        %1600 = vmatprep.subr.mxu0 0.0
        %1601 = vmatpush1.msra.mxu0 0.0
        %1602 = vmatprep.subr.mxu0 0.0
        %1603 = vmatpush1.msra.mxu0 0.0
        %1604 = vmatprep.subr.mxu0 0.0
        %1605 = vmatpush1.msra.mxu0 0.0
        %1606 = vmatprep.subr.mxu0 0.0
        %1607 = vmatpush1.msra.mxu0 0.0
        %1608 = vmatprep.subr.mxu0 0.0
        %1609 = vmatpush1.msra.mxu0 0.0
        %1610 = vmatprep.subr.mxu0 0.0
        %1611 = vmatpush1.msra.mxu0 0.0
        %1612 = vmatprep.subr.mxu0 0.0
        %1613 = vmatpush1.msra.mxu0 0.0
        %1614 = vmatprep.subr.mxu0 0.0
        %1615 = vmatpush1.msra.mxu0 0.0
        %1616 = vmatprep.subr.mxu0 0.0
        %1617 = vmatpush1.msra.mxu0 0.0
        %1618 = vmatprep.subr.mxu0 0.0
        %1619 = vmatpush1.msra.mxu0 0.0
        %1620 = vmatprep.subr.mxu0 0.0
        %1621 = vmatpush1.msra.mxu0 0.0
        %1622 = vmatprep.subr.mxu0 0.0
        %1623 = vmatpush1.msra.mxu0 0.0
        %1624 = vmatprep.subr.mxu0 0.0
        %1625 = vmatpush1.msra.mxu0 0.0
        %1626 = vmatprep.mubr.f32.mxu0 0.0
        %1627 = vmatmul.mubr.f32.gmra.mrb[0].mxu0 %v1420
        %v1628 = vpop.f32.mrb[0].mxu0
        %v1629 = vadd.f32 0.0, %v1628
        %v1630 = vpop.f32.mrb[0].mxu0
        %1631 = vdwg.mxu0
        %1632 = vmatprep.subr.mxu0 0.0
        %1633 = vmatpush1.msra.mxu0 %v994
        %1634 = vmatprep.subr.mxu0 0.0
        %1635 = vmatpush1.msra.mxu0 0.0
        %1636 = vmatprep.subr.mxu0 0.0
        %1637 = vmatpush1.msra.mxu0 0.0
        %1638 = vmatprep.subr.mxu0 0.0
        %1639 = vmatpush1.msra.mxu0 0.0
        %1640 = vmatprep.subr.mxu0 0.0
        %1641 = vmatpush1.msra.mxu0 0.0
        %1642 = vmatprep.subr.mxu0 0.0
        %1643 = vmatpush1.msra.mxu0 0.0
        %1644 = vmatprep.subr.mxu0 0.0
        %1645 = vmatpush1.msra.mxu0 0.0
        %1646 = vmatprep.subr.mxu0 0.0
        %1647 = vmatpush1.msra.mxu0 0.0
        %1648 = vmatprep.subr.mxu0 0.0
        %1649 = vmatpush1.msra.mxu0 0.0
        %1650 = vmatprep.subr.mxu0 0.0
        %1651 = vmatpush1.msra.mxu0 0.0
        %1652 = vmatprep.subr.mxu0 0.0
        %1653 = vmatpush1.msra.mxu0 0.0
        %1654 = vmatprep.subr.mxu0 0.0
        %1655 = vmatpush1.msra.mxu0 0.0
        %1656 = vmatprep.subr.mxu0 0.0
        %1657 = vmatpush1.msra.mxu0 0.0
        %1658 = vmatprep.subr.mxu0 0.0
        %1659 = vmatpush1.msra.mxu0 0.0
        %1660 = vmatprep.subr.mxu0 0.0
        %1661 = vmatpush1.msra.mxu0 0.0
        %1662 = vmatprep.subr.mxu0 0.0
        %1663 = vmatpush1.msra.mxu0 0.0
        %1664 = vmatprep.subr.mxu0 0.0
        %1665 = vmatpush1.msra.mxu0 0.0
        %1666 = vmatprep.subr.mxu0 0.0
        %1667 = vmatpush1.msra.mxu0 0.0
        %1668 = vmatprep.subr.mxu0 0.0
        %1669 = vmatpush1.msra.mxu0 0.0
        %1670 = vmatprep.subr.mxu0 0.0
        %1671 = vmatpush1.msra.mxu0 0.0
        %1672 = vmatprep.subr.mxu0 0.0
        %1673 = vmatpush1.msra.mxu0 0.0
        %1674 = vmatprep.subr.mxu0 0.0
        %1675 = vmatpush1.msra.mxu0 0.0
        %1676 = vmatprep.subr.mxu0 0.0
        %1677 = vmatpush1.msra.mxu0 0.0
        %1678 = vmatprep.subr.mxu0 0.0
        %1679 = vmatpush1.msra.mxu0 0.0
        %1680 = vmatprep.subr.mxu0 0.0
        %1681 = vmatpush1.msra.mxu0 0.0
        %1682 = vmatprep.subr.mxu0 0.0
        %1683 = vmatpush1.msra.mxu0 0.0
        %1684 = vmatprep.subr.mxu0 0.0
        %1685 = vmatpush1.msra.mxu0 0.0
        %1686 = vmatprep.subr.mxu0 0.0
        %1687 = vmatpush1.msra.mxu0 0.0
        %1688 = vmatprep.subr.mxu0 0.0
        %1689 = vmatpush1.msra.mxu0 0.0
        %1690 = vmatprep.subr.mxu0 0.0
        %1691 = vmatpush1.msra.mxu0 0.0
        %1692 = vmatprep.subr.mxu0 0.0
        %1693 = vmatpush1.msra.mxu0 0.0
        %1694 = vmatprep.subr.mxu0 0.0
        %1695 = vmatpush1.msra.mxu0 0.0
        %1696 = vmatprep.mubr.f32.mxu0 0.0
        %1697 = vmatmul.mubr.f32.gmra.mrb[0].mxu0 %v1420
        %v1698 = vpop.f32.mrb[0].mxu0
        %v1699 = vadd.f32 0.0, %v1698
        %v1700 = vpop.f32.mrb[0].mxu0
        %1701 = vdwg.mxu0
        %v1702 = vadd.f32 %v1196, %v1489
        %v1703 = vadd.f32 %v1269, %v1559
        %v1704 = vadd.f32 %v1342, %v1629
        %v1705 = vadd.f32 %v1415, %v1699
        %1706 = vmatprep.subr.mxu0 0.0
        %1707 = vmatpush1.msra.mxu0 %v1091
        %1708 = vmatprep.subr.mxu0 0.0
        %1709 = vmatpush1.msra.mxu0 0.0
        %1710 = vmatprep.subr.mxu0 0.0
        %1711 = vmatpush1.msra.mxu0 0.0
        %1712 = vmatprep.subr.mxu0 0.0
        %1713 = vmatpush1.msra.mxu0 0.0
        %1714 = vmatprep.subr.mxu0 0.0
        %1715 = vmatpush1.msra.mxu0 0.0
        %1716 = vmatprep.subr.mxu0 0.0
        %1717 = vmatpush1.msra.mxu0 0.0
        %1718 = vmatprep.subr.mxu0 0.0
        %1719 = vmatpush1.msra.mxu0 0.0
        %1720 = vmatprep.subr.mxu0 0.0
        %1721 = vmatpush1.msra.mxu0 0.0
        %1722 = vmatprep.subr.mxu0 0.0
        %1723 = vmatpush1.msra.mxu0 0.0
        %1724 = vmatprep.subr.mxu0 0.0
        %1725 = vmatpush1.msra.mxu0 0.0
        %1726 = vmatprep.subr.mxu0 0.0
        %1727 = vmatpush1.msra.mxu0 0.0
        %1728 = vmatprep.subr.mxu0 0.0
        %1729 = vmatpush1.msra.mxu0 0.0
        %1730 = vmatprep.subr.mxu0 0.0
        %1731 = vmatpush1.msra.mxu0 0.0
        %1732 = vmatprep.subr.mxu0 0.0
        %1733 = vmatpush1.msra.mxu0 0.0
        %1734 = vmatprep.subr.mxu0 0.0
        %1735 = vmatpush1.msra.mxu0 0.0
        %1736 = vmatprep.subr.mxu0 0.0
        %1737 = vmatpush1.msra.mxu0 0.0
        %1738 = vmatprep.subr.mxu0 0.0
        %1739 = vmatpush1.msra.mxu0 0.0
        %1740 = vmatprep.subr.mxu0 0.0
        %1741 = vmatpush1.msra.mxu0 0.0
        %1742 = vmatprep.subr.mxu0 0.0
        %1743 = vmatpush1.msra.mxu0 0.0
        %1744 = vmatprep.subr.mxu0 0.0
        %1745 = vmatpush1.msra.mxu0 0.0
        %1746 = vmatprep.subr.mxu0 0.0
        %1747 = vmatpush1.msra.mxu0 0.0
        %1748 = vmatprep.subr.mxu0 0.0
        %1749 = vmatpush1.msra.mxu0 0.0
        %1750 = vmatprep.subr.mxu0 0.0
        %1751 = vmatpush1.msra.mxu0 0.0
        %1752 = vmatprep.subr.mxu0 0.0
        %1753 = vmatpush1.msra.mxu0 0.0
        %1754 = vmatprep.subr.mxu0 0.0
        %1755 = vmatpush1.msra.mxu0 0.0
        %1756 = vmatprep.subr.mxu0 0.0
        %1757 = vmatpush1.msra.mxu0 0.0
        %1758 = vmatprep.subr.mxu0 0.0
        %1759 = vmatpush1.msra.mxu0 0.0
        %1760 = vmatprep.subr.mxu0 0.0
        %1761 = vmatpush1.msra.mxu0 0.0
        %1762 = vmatprep.subr.mxu0 0.0
        %1763 = vmatpush1.msra.mxu0 0.0
        %1764 = vmatprep.subr.mxu0 0.0
        %1765 = vmatpush1.msra.mxu0 0.0
        %1766 = vmatprep.subr.mxu0 0.0
        %1767 = vmatpush1.msra.mxu0 0.0
        %1768 = vmatprep.subr.mxu0 0.0
        %1769 = vmatpush1.msra.mxu0 0.0
        %1770 = vmatprep.mubr.f32.mxu0 0.0
        %1771 = vmatmul.mubr.f32.gmra.mrb[0].mxu0 %v1420
        %v1772 = vpop.f32.mrb[0].mxu0
        %v1773 = vadd.f32 0.0, %v1772
        %v1774 = vpop.f32.mrb[0].mxu0
        %1775 = vdwg.mxu0
        %1776 = vmatprep.subr.mxu0 0.0
        %1777 = vmatpush1.msra.mxu0 %v1096
        %1778 = vmatprep.subr.mxu0 0.0
        %1779 = vmatpush1.msra.mxu0 0.0
        %1780 = vmatprep.subr.mxu0 0.0
        %1781 = vmatpush1.msra.mxu0 0.0
        %1782 = vmatprep.subr.mxu0 0.0
        %1783 = vmatpush1.msra.mxu0 0.0
        %1784 = vmatprep.subr.mxu0 0.0
        %1785 = vmatpush1.msra.mxu0 0.0
        %1786 = vmatprep.subr.mxu0 0.0
        %1787 = vmatpush1.msra.mxu0 0.0
        %1788 = vmatprep.subr.mxu0 0.0
        %1789 = vmatpush1.msra.mxu0 0.0
        %1790 = vmatprep.subr.mxu0 0.0
        %1791 = vmatpush1.msra.mxu0 0.0
        %1792 = vmatprep.subr.mxu0 0.0
        %1793 = vmatpush1.msra.mxu0 0.0
        %1794 = vmatprep.subr.mxu0 0.0
        %1795 = vmatpush1.msra.mxu0 0.0
        %1796 = vmatprep.subr.mxu0 0.0
        %1797 = vmatpush1.msra.mxu0 0.0
        %1798 = vmatprep.subr.mxu0 0.0
        %1799 = vmatpush1.msra.mxu0 0.0
        %1800 = vmatprep.subr.mxu0 0.0
        %1801 = vmatpush1.msra.mxu0 0.0
        %1802 = vmatprep.subr.mxu0 0.0
        %1803 = vmatpush1.msra.mxu0 0.0
        %1804 = vmatprep.subr.mxu0 0.0
        %1805 = vmatpush1.msra.mxu0 0.0
        %1806 = vmatprep.subr.mxu0 0.0
        %1807 = vmatpush1.msra.mxu0 0.0
        %1808 = vmatprep.subr.mxu0 0.0
        %1809 = vmatpush1.msra.mxu0 0.0
        %1810 = vmatprep.subr.mxu0 0.0
        %1811 = vmatpush1.msra.mxu0 0.0
        %1812 = vmatprep.subr.mxu0 0.0
        %1813 = vmatpush1.msra.mxu0 0.0
        %1814 = vmatprep.subr.mxu0 0.0
        %1815 = vmatpush1.msra.mxu0 0.0
        %1816 = vmatprep.subr.mxu0 0.0
        %1817 = vmatpush1.msra.mxu0 0.0
        %1818 = vmatprep.subr.mxu0 0.0
        %1819 = vmatpush1.msra.mxu0 0.0
        %1820 = vmatprep.subr.mxu0 0.0
        %1821 = vmatpush1.msra.mxu0 0.0
        %1822 = vmatprep.subr.mxu0 0.0
        %1823 = vmatpush1.msra.mxu0 0.0
        %1824 = vmatprep.subr.mxu0 0.0
        %1825 = vmatpush1.msra.mxu0 0.0
        %1826 = vmatprep.subr.mxu0 0.0
        %1827 = vmatpush1.msra.mxu0 0.0
        %1828 = vmatprep.subr.mxu0 0.0
        %1829 = vmatpush1.msra.mxu0 0.0
        %1830 = vmatprep.subr.mxu0 0.0
        %1831 = vmatpush1.msra.mxu0 0.0
        %1832 = vmatprep.subr.mxu0 0.0
        %1833 = vmatpush1.msra.mxu0 0.0
        %1834 = vmatprep.subr.mxu0 0.0
        %1835 = vmatpush1.msra.mxu0 0.0
        %1836 = vmatprep.subr.mxu0 0.0
        %1837 = vmatpush1.msra.mxu0 0.0
        %1838 = vmatprep.subr.mxu0 0.0
        %1839 = vmatpush1.msra.mxu0 0.0
        %1840 = vmatprep.mubr.f32.mxu0 0.0
        %1841 = vmatmul.mubr.f32.gmra.mrb[0].mxu0 %v1420
        %v1842 = vpop.f32.mrb[0].mxu0
        %v1843 = vadd.f32 0.0, %v1842
        %v1844 = vpop.f32.mrb[0].mxu0
        %1845 = vdwg.mxu0
        %1846 = vmatprep.subr.mxu0 0.0
        %1847 = vmatpush1.msra.mxu0 %v1101
        %1848 = vmatprep.subr.mxu0 0.0
        %1849 = vmatpush1.msra.mxu0 0.0
        %1850 = vmatprep.subr.mxu0 0.0
        %1851 = vmatpush1.msra.mxu0 0.0
        %1852 = vmatprep.subr.mxu0 0.0
        %1853 = vmatpush1.msra.mxu0 0.0
        %1854 = vmatprep.subr.mxu0 0.0
        %1855 = vmatpush1.msra.mxu0 0.0
        %1856 = vmatprep.subr.mxu0 0.0
        %1857 = vmatpush1.msra.mxu0 0.0
        %1858 = vmatprep.subr.mxu0 0.0
        %1859 = vmatpush1.msra.mxu0 0.0
        %1860 = vmatprep.subr.mxu0 0.0
        %1861 = vmatpush1.msra.mxu0 0.0
        %1862 = vmatprep.subr.mxu0 0.0
        %1863 = vmatpush1.msra.mxu0 0.0
        %1864 = vmatprep.subr.mxu0 0.0
        %1865 = vmatpush1.msra.mxu0 0.0
        %1866 = vmatprep.subr.mxu0 0.0
        %1867 = vmatpush1.msra.mxu0 0.0
        %1868 = vmatprep.subr.mxu0 0.0
        %1869 = vmatpush1.msra.mxu0 0.0
        %1870 = vmatprep.subr.mxu0 0.0
        %1871 = vmatpush1.msra.mxu0 0.0
        %1872 = vmatprep.subr.mxu0 0.0
        %1873 = vmatpush1.msra.mxu0 0.0
        %1874 = vmatprep.subr.mxu0 0.0
        %1875 = vmatpush1.msra.mxu0 0.0
        %1876 = vmatprep.subr.mxu0 0.0
        %1877 = vmatpush1.msra.mxu0 0.0
        %1878 = vmatprep.subr.mxu0 0.0
        %1879 = vmatpush1.msra.mxu0 0.0
        %1880 = vmatprep.subr.mxu0 0.0
        %1881 = vmatpush1.msra.mxu0 0.0
        %1882 = vmatprep.subr.mxu0 0.0
        %1883 = vmatpush1.msra.mxu0 0.0
        %1884 = vmatprep.subr.mxu0 0.0
        %1885 = vmatpush1.msra.mxu0 0.0
        %1886 = vmatprep.subr.mxu0 0.0
        %1887 = vmatpush1.msra.mxu0 0.0
        %1888 = vmatprep.subr.mxu0 0.0
        %1889 = vmatpush1.msra.mxu0 0.0
        %1890 = vmatprep.subr.mxu0 0.0
        %1891 = vmatpush1.msra.mxu0 0.0
        %1892 = vmatprep.subr.mxu0 0.0
        %1893 = vmatpush1.msra.mxu0 0.0
        %1894 = vmatprep.subr.mxu0 0.0
        %1895 = vmatpush1.msra.mxu0 0.0
        %1896 = vmatprep.subr.mxu0 0.0
        %1897 = vmatpush1.msra.mxu0 0.0
        %1898 = vmatprep.subr.mxu0 0.0
        %1899 = vmatpush1.msra.mxu0 0.0
        %1900 = vmatprep.subr.mxu0 0.0
        %1901 = vmatpush1.msra.mxu0 0.0
        %1902 = vmatprep.subr.mxu0 0.0
        %1903 = vmatpush1.msra.mxu0 0.0
        %1904 = vmatprep.subr.mxu0 0.0
        %1905 = vmatpush1.msra.mxu0 0.0
        %1906 = vmatprep.subr.mxu0 0.0
        %1907 = vmatpush1.msra.mxu0 0.0
        %1908 = vmatprep.subr.mxu0 0.0
        %1909 = vmatpush1.msra.mxu0 0.0
        %1910 = vmatprep.mubr.f32.mxu0 0.0
        %1911 = vmatmul.mubr.f32.gmra.mrb[0].mxu0 %v1420
        %v1912 = vpop.f32.mrb[0].mxu0
        %v1913 = vadd.f32 0.0, %v1912
        %v1914 = vpop.f32.mrb[0].mxu0
        %1915 = vdwg.mxu0
        %1916 = vmatprep.subr.mxu0 0.0
        %1917 = vmatpush1.msra.mxu0 %v1106
        %1918 = vmatprep.subr.mxu0 0.0
        %1919 = vmatpush1.msra.mxu0 0.0
        %1920 = vmatprep.subr.mxu0 0.0
        %1921 = vmatpush1.msra.mxu0 0.0
        %1922 = vmatprep.subr.mxu0 0.0
        %1923 = vmatpush1.msra.mxu0 0.0
        %1924 = vmatprep.subr.mxu0 0.0
        %1925 = vmatpush1.msra.mxu0 0.0
        %1926 = vmatprep.subr.mxu0 0.0
        %1927 = vmatpush1.msra.mxu0 0.0
        %1928 = vmatprep.subr.mxu0 0.0
        %1929 = vmatpush1.msra.mxu0 0.0
        %1930 = vmatprep.subr.mxu0 0.0
        %1931 = vmatpush1.msra.mxu0 0.0
        %1932 = vmatprep.subr.mxu0 0.0
        %1933 = vmatpush1.msra.mxu0 0.0
        %1934 = vmatprep.subr.mxu0 0.0
        %1935 = vmatpush1.msra.mxu0 0.0
        %1936 = vmatprep.subr.mxu0 0.0
        %1937 = vmatpush1.msra.mxu0 0.0
        %1938 = vmatprep.subr.mxu0 0.0
        %1939 = vmatpush1.msra.mxu0 0.0
        %1940 = vmatprep.subr.mxu0 0.0
        %1941 = vmatpush1.msra.mxu0 0.0
        %1942 = vmatprep.subr.mxu0 0.0
        %1943 = vmatpush1.msra.mxu0 0.0
        %1944 = vmatprep.subr.mxu0 0.0
        %1945 = vmatpush1.msra.mxu0 0.0
        %1946 = vmatprep.subr.mxu0 0.0
        %1947 = vmatpush1.msra.mxu0 0.0
        %1948 = vmatprep.subr.mxu0 0.0
        %1949 = vmatpush1.msra.mxu0 0.0
        %1950 = vmatprep.subr.mxu0 0.0
        %1951 = vmatpush1.msra.mxu0 0.0
        %1952 = vmatprep.subr.mxu0 0.0
        %1953 = vmatpush1.msra.mxu0 0.0
        %1954 = vmatprep.subr.mxu0 0.0
        %1955 = vmatpush1.msra.mxu0 0.0
        %1956 = vmatprep.subr.mxu0 0.0
        %1957 = vmatpush1.msra.mxu0 0.0
        %1958 = vmatprep.subr.mxu0 0.0
        %1959 = vmatpush1.msra.mxu0 0.0
        %1960 = vmatprep.subr.mxu0 0.0
        %1961 = vmatpush1.msra.mxu0 0.0
        %1962 = vmatprep.subr.mxu0 0.0
        %1963 = vmatpush1.msra.mxu0 0.0
        %1964 = vmatprep.subr.mxu0 0.0
        %1965 = vmatpush1.msra.mxu0 0.0
        %1966 = vmatprep.subr.mxu0 0.0
        %1967 = vmatpush1.msra.mxu0 0.0
        %1968 = vmatprep.subr.mxu0 0.0
        %1969 = vmatpush1.msra.mxu0 0.0
        %1970 = vmatprep.subr.mxu0 0.0
        %1971 = vmatpush1.msra.mxu0 0.0
        %1972 = vmatprep.subr.mxu0 0.0
        %1973 = vmatpush1.msra.mxu0 0.0
        %1974 = vmatprep.subr.mxu0 0.0
        %1975 = vmatpush1.msra.mxu0 0.0
        %1976 = vmatprep.subr.mxu0 0.0
        %1977 = vmatpush1.msra.mxu0 0.0
        %1978 = vmatprep.subr.mxu0 0.0
        %1979 = vmatpush1.msra.mxu0 0.0
        %1980 = vmatprep.mubr.f32.mxu0 0.0
        %1981 = vmatmul.mubr.f32.gmra.mrb[0].mxu0 %v1420
        %v1982 = vpop.f32.mrb[0].mxu0
        %v1983 = vadd.f32 0.0, %v1982
        %v1984 = vpop.f32.mrb[0].mxu0
        %1985 = vdwg.mxu0
        %v1986 = vadd.f32 %v1196, %v1773
        %v1987 = vadd.f32 %v1269, %v1843
        %v1988 = vadd.f32 %v1342, %v1913
        %v1989 = vadd.f32 %v1415, %v1983
        %v1992 = vunpack.c.l.s4 1966171168
        %v1993 = vunpack.c.0.s8 %v1992
        %v1994 = vlaneseq
        %v1995 = vshrl.u32 %v1994, 7
        %v1996 = vsub.s32 %v1993, %v1995
        %v1997 = vrot.slane %v771, %v1996
        %v1998 = vcombine.high %v1997, %v1997
        %v2000 = vunpack.c.l.s4 1966171168
        %v2001 = vunpack.c.0.s8 %v2000
        %v2002 = vlaneseq
        %v2003 = vshrl.u32 %v2002, 7
        %v2004 = vsub.s32 %v2001, %v2003
        %v2005 = vrot.slane %v1997, %v2004
        %v2007 = vunpack.c.l.s4 1966171168
        %v2008 = vunpack.c.0.s8 %v2007
        %v2009 = vlaneseq
        %v2010 = vshrl.u32 %v2009, 7
        %v2011 = vsub.s32 %v2008, %v2010
        %v2012 = vrot.slane %v1998, %v2011
        %v2013 = vcombine.high %v2005, %v2005
        %v2014 = vcombine.high %v2012, %v2012
        %v2015 = vlaneseq
        %v2016 = vshrl.u32 %v2015, 7
        %v2017 = vsub.s32 0, %v2016
        %v2018 = vrot.slane %v2005, %v2017
        %v2019 = vlaneseq
        %v2020 = vshrl.u32 %v2019, 7
        %v2021 = vsub.s32 0, %v2020
        %v2022 = vrot.slane %v2012, %v2021
        %v2023 = vlaneseq
        %v2024 = vshrl.u32 %v2023, 7
        %v2025 = vsub.s32 0, %v2024
        %v2026 = vrot.slane %v2013, %v2025
        %v2027 = vlaneseq
        %v2028 = vshrl.u32 %v2027, 7
        %v2029 = vsub.s32 0, %v2028
        %v2030 = vrot.slane %v2014, %v2029
        %v2035 = vmul.f32 %v867, %v2018
        %v2036 = vmul.f32 %v867, %v2022
        %v2037 = vmul.f32 %v867, %v2026
        %v2038 = vmul.f32 %v867, %v2030
        %v2039 = vmul.f32 %v872, %v2018
        %v2040 = vmul.f32 %v872, %v2022
        %v2041 = vmul.f32 %v872, %v2026
        %v2042 = vmul.f32 %v872, %v2030
        %v2043 = vmul.f32 %v877, %v2018
        %v2044 = vmul.f32 %v877, %v2022
        %v2045 = vmul.f32 %v877, %v2026
        %v2046 = vmul.f32 %v877, %v2030
        %v2047 = vmul.f32 %v882, %v2018
        %v2048 = vmul.f32 %v882, %v2022
        %v2049 = vmul.f32 %v882, %v2026
        %v2050 = vmul.f32 %v882, %v2030
        %v2052 = vsel %vm787, %v2035, 0
        %v2055 = vsel %vm787, %v2036, 0
        %v2058 = vsel %vm787, %v2037, 0
        %v2061 = vsel %vm787, %v2038, 0
        %v2064 = vsel %vm787, %v1702, 0
        %2066 = vmatprep.subr.mxu0 0.0
        %2067 = vmatpush1.xpose.msra.mxu0 %v2064
        %2068 = vmatprep.subr.mxu0 0.0
        %2069 = vmatpush1.xpose.msra.mxu0 0.0
        %2070 = vmatprep.subr.mxu0 0.0
        %2071 = vmatpush1.xpose.msra.mxu0 0.0
        %2072 = vmatprep.subr.mxu0 0.0
        %2073 = vmatpush1.xpose.msra.mxu0 0.0
        %2074 = vmatprep.subr.mxu0 0.0
        %2075 = vmatpush1.xpose.msra.mxu0 0.0
        %2076 = vmatprep.subr.mxu0 0.0
        %2077 = vmatpush1.xpose.msra.mxu0 0.0
        %2078 = vmatprep.subr.mxu0 0.0
        %2079 = vmatpush1.xpose.msra.mxu0 0.0
        %2080 = vmatprep.subr.mxu0 0.0
        %2081 = vmatpush1.xpose.msra.mxu0 0.0
        %2082 = vmatprep.subr.mxu0 0.0
        %2083 = vmatpush1.xpose.msra.mxu0 0.0
        %2084 = vmatprep.subr.mxu0 0.0
        %2085 = vmatpush1.xpose.msra.mxu0 0.0
        %2086 = vmatprep.subr.mxu0 0.0
        %2087 = vmatpush1.xpose.msra.mxu0 0.0
        %2088 = vmatprep.subr.mxu0 0.0
        %2089 = vmatpush1.xpose.msra.mxu0 0.0
        %2090 = vmatprep.subr.mxu0 0.0
        %2091 = vmatpush1.xpose.msra.mxu0 0.0
        %2092 = vmatprep.subr.mxu0 0.0
        %2093 = vmatpush1.xpose.msra.mxu0 0.0
        %2094 = vmatprep.subr.mxu0 0.0
        %2095 = vmatpush1.xpose.msra.mxu0 0.0
        %2096 = vmatprep.subr.mxu0 0.0
        %2097 = vmatpush1.xpose.msra.mxu0 0.0
        %2098 = vmatprep.subr.mxu0 0.0
        %2099 = vmatpush1.xpose.msra.mxu0 0.0
        %2100 = vmatprep.subr.mxu0 0.0
        %2101 = vmatpush1.xpose.msra.mxu0 0.0
        %2102 = vmatprep.subr.mxu0 0.0
        %2103 = vmatpush1.xpose.msra.mxu0 0.0
        %2104 = vmatprep.subr.mxu0 0.0
        %2105 = vmatpush1.xpose.msra.mxu0 0.0
        %2106 = vmatprep.subr.mxu0 0.0
        %2107 = vmatpush1.xpose.msra.mxu0 0.0
        %2108 = vmatprep.subr.mxu0 0.0
        %2109 = vmatpush1.xpose.msra.mxu0 0.0
        %2110 = vmatprep.subr.mxu0 0.0
        %2111 = vmatpush1.xpose.msra.mxu0 0.0
        %2112 = vmatprep.subr.mxu0 0.0
        %2113 = vmatpush1.xpose.msra.mxu0 0.0
        %2114 = vmatprep.subr.mxu0 0.0
        %2115 = vmatpush1.xpose.msra.mxu0 0.0
        %2116 = vmatprep.subr.mxu0 0.0
        %2117 = vmatpush1.xpose.msra.mxu0 0.0
        %2118 = vmatprep.subr.mxu0 0.0
        %2119 = vmatpush1.xpose.msra.mxu0 0.0
        %2120 = vmatprep.subr.mxu0 0.0
        %2121 = vmatpush1.xpose.msra.mxu0 0.0
        %2122 = vmatprep.subr.mxu0 0.0
        %2123 = vmatpush1.xpose.msra.mxu0 0.0
        %2124 = vmatprep.subr.mxu0 0.0
        %2125 = vmatpush1.xpose.msra.mxu0 0.0
        %2126 = vmatprep.subr.mxu0 0.0
        %2127 = vmatpush1.xpose.msra.mxu0 0.0
        %2128 = vmatprep.subr.mxu0 0.0
        %2129 = vmatpush1.xpose.msra.mxu0 0.0
        %2130 = vmatprep.mubr.f32.mxu0 0.0
        %2131 = vmatmul.mubr.f32.gmra.mrb[0].mxu0 %v2052
        %v2132 = vpop.f32.mrb[0].mxu0
        %v2133 = vadd.f32 0.0, %v2132
        %v2134 = vpop.f32.mrb[0].mxu0
        %2135 = vmatprep.mubr.f32.mxu0 0.0
        %2136 = vmatmul.mubr.f32.gmra.mrb[0].mxu0 %v2055
        %v2137 = vpop.f32.mrb[0].mxu0
        %v2138 = vadd.f32 0.0, %v2137
        %v2139 = vpop.f32.mrb[0].mxu0
        %2140 = vmatprep.mubr.f32.mxu0 0.0
        %2141 = vmatmul.mubr.f32.gmra.mrb[0].mxu0 %v2058
        %v2142 = vpop.f32.mrb[0].mxu0
        %v2143 = vadd.f32 0.0, %v2142
        %v2144 = vpop.f32.mrb[0].mxu0
        %2145 = vmatprep.mubr.f32.mxu0 0.0
        %2146 = vmatmul.mubr.f32.gmra.mrb[0].mxu0 %v2061
        %v2147 = vpop.f32.mrb[0].mxu0
        %v2148 = vadd.f32 0.0, %v2147
        %v2149 = vpop.f32.mrb[0].mxu0
        %2150 = vdwg.mxu0
        %v2152 = vsel %vm787, %v2039, 0
        %v2155 = vsel %vm787, %v2040, 0
        %v2158 = vsel %vm787, %v2041, 0
        %v2161 = vsel %vm787, %v2042, 0
        %v2164 = vsel %vm787, %v1703, 0
        %2166 = vmatprep.subr.mxu0 0.0
        %2167 = vmatpush1.xpose.msra.mxu0 %v2164
        %2168 = vmatprep.subr.mxu0 0.0
        %2169 = vmatpush1.xpose.msra.mxu0 0.0
        %2170 = vmatprep.subr.mxu0 0.0
        %2171 = vmatpush1.xpose.msra.mxu0 0.0
        %2172 = vmatprep.subr.mxu0 0.0
        %2173 = vmatpush1.xpose.msra.mxu0 0.0
        %2174 = vmatprep.subr.mxu0 0.0
        %2175 = vmatpush1.xpose.msra.mxu0 0.0
        %2176 = vmatprep.subr.mxu0 0.0
        %2177 = vmatpush1.xpose.msra.mxu0 0.0
        %2178 = vmatprep.subr.mxu0 0.0
        %2179 = vmatpush1.xpose.msra.mxu0 0.0
        %2180 = vmatprep.subr.mxu0 0.0
        %2181 = vmatpush1.xpose.msra.mxu0 0.0
        %2182 = vmatprep.subr.mxu0 0.0
        %2183 = vmatpush1.xpose.msra.mxu0 0.0
        %2184 = vmatprep.subr.mxu0 0.0
        %2185 = vmatpush1.xpose.msra.mxu0 0.0
        %2186 = vmatprep.subr.mxu0 0.0
        %2187 = vmatpush1.xpose.msra.mxu0 0.0
        %2188 = vmatprep.subr.mxu0 0.0
        %2189 = vmatpush1.xpose.msra.mxu0 0.0
        %2190 = vmatprep.subr.mxu0 0.0
        %2191 = vmatpush1.xpose.msra.mxu0 0.0
        %2192 = vmatprep.subr.mxu0 0.0
        %2193 = vmatpush1.xpose.msra.mxu0 0.0
        %2194 = vmatprep.subr.mxu0 0.0
        %2195 = vmatpush1.xpose.msra.mxu0 0.0
        %2196 = vmatprep.subr.mxu0 0.0
        %2197 = vmatpush1.xpose.msra.mxu0 0.0
        %2198 = vmatprep.subr.mxu0 0.0
        %2199 = vmatpush1.xpose.msra.mxu0 0.0
        %2200 = vmatprep.subr.mxu0 0.0
        %2201 = vmatpush1.xpose.msra.mxu0 0.0
        %2202 = vmatprep.subr.mxu0 0.0
        %2203 = vmatpush1.xpose.msra.mxu0 0.0
        %2204 = vmatprep.subr.mxu0 0.0
        %2205 = vmatpush1.xpose.msra.mxu0 0.0
        %2206 = vmatprep.subr.mxu0 0.0
        %2207 = vmatpush1.xpose.msra.mxu0 0.0
        %2208 = vmatprep.subr.mxu0 0.0
        %2209 = vmatpush1.xpose.msra.mxu0 0.0
        %2210 = vmatprep.subr.mxu0 0.0
        %2211 = vmatpush1.xpose.msra.mxu0 0.0
        %2212 = vmatprep.subr.mxu0 0.0
        %2213 = vmatpush1.xpose.msra.mxu0 0.0
        %2214 = vmatprep.subr.mxu0 0.0
        %2215 = vmatpush1.xpose.msra.mxu0 0.0
        %2216 = vmatprep.subr.mxu0 0.0
        %2217 = vmatpush1.xpose.msra.mxu0 0.0
        %2218 = vmatprep.subr.mxu0 0.0
        %2219 = vmatpush1.xpose.msra.mxu0 0.0
        %2220 = vmatprep.subr.mxu0 0.0
        %2221 = vmatpush1.xpose.msra.mxu0 0.0
        %2222 = vmatprep.subr.mxu0 0.0
        %2223 = vmatpush1.xpose.msra.mxu0 0.0
        %2224 = vmatprep.subr.mxu0 0.0
        %2225 = vmatpush1.xpose.msra.mxu0 0.0
        %2226 = vmatprep.subr.mxu0 0.0
        %2227 = vmatpush1.xpose.msra.mxu0 0.0
        %2228 = vmatprep.subr.mxu0 0.0
        %2229 = vmatpush1.xpose.msra.mxu0 0.0
        %2230 = vmatprep.mubr.f32.mxu0 0.0
        %2231 = vmatmul.mubr.f32.gmra.mrb[0].mxu0 %v2152
        %v2232 = vpop.f32.mrb[0].mxu0
        %v2233 = vadd.f32 0.0, %v2232
        %v2234 = vpop.f32.mrb[0].mxu0
        %2235 = vmatprep.mubr.f32.mxu0 0.0
        %2236 = vmatmul.mubr.f32.gmra.mrb[0].mxu0 %v2155
        %v2237 = vpop.f32.mrb[0].mxu0
        %v2238 = vadd.f32 0.0, %v2237
        %v2239 = vpop.f32.mrb[0].mxu0
        %2240 = vmatprep.mubr.f32.mxu0 0.0
        %2241 = vmatmul.mubr.f32.gmra.mrb[0].mxu0 %v2158
        %v2242 = vpop.f32.mrb[0].mxu0
        %v2243 = vadd.f32 0.0, %v2242
        %v2244 = vpop.f32.mrb[0].mxu0
        %2245 = vmatprep.mubr.f32.mxu0 0.0
        %2246 = vmatmul.mubr.f32.gmra.mrb[0].mxu0 %v2161
        %v2247 = vpop.f32.mrb[0].mxu0
        %v2248 = vadd.f32 0.0, %v2247
        %v2249 = vpop.f32.mrb[0].mxu0
        %2250 = vdwg.mxu0
        %v2252 = vsel %vm787, %v2043, 0
        %v2255 = vsel %vm787, %v2044, 0
        %v2258 = vsel %vm787, %v2045, 0
        %v2261 = vsel %vm787, %v2046, 0
        %v2264 = vsel %vm787, %v1704, 0
        %2266 = vmatprep.subr.mxu0 0.0
        %2267 = vmatpush1.xpose.msra.mxu0 %v2264
        %2268 = vmatprep.subr.mxu0 0.0
        %2269 = vmatpush1.xpose.msra.mxu0 0.0
        %2270 = vmatprep.subr.mxu0 0.0
        %2271 = vmatpush1.xpose.msra.mxu0 0.0
        %2272 = vmatprep.subr.mxu0 0.0
        %2273 = vmatpush1.xpose.msra.mxu0 0.0
        %2274 = vmatprep.subr.mxu0 0.0
        %2275 = vmatpush1.xpose.msra.mxu0 0.0
        %2276 = vmatprep.subr.mxu0 0.0
        %2277 = vmatpush1.xpose.msra.mxu0 0.0
        %2278 = vmatprep.subr.mxu0 0.0
        %2279 = vmatpush1.xpose.msra.mxu0 0.0
        %2280 = vmatprep.subr.mxu0 0.0
        %2281 = vmatpush1.xpose.msra.mxu0 0.0
        %2282 = vmatprep.subr.mxu0 0.0
        %2283 = vmatpush1.xpose.msra.mxu0 0.0
        %2284 = vmatprep.subr.mxu0 0.0
        %2285 = vmatpush1.xpose.msra.mxu0 0.0
        %2286 = vmatprep.subr.mxu0 0.0
        %2287 = vmatpush1.xpose.msra.mxu0 0.0
        %2288 = vmatprep.subr.mxu0 0.0
        %2289 = vmatpush1.xpose.msra.mxu0 0.0
        %2290 = vmatprep.subr.mxu0 0.0
        %2291 = vmatpush1.xpose.msra.mxu0 0.0
        %2292 = vmatprep.subr.mxu0 0.0
        %2293 = vmatpush1.xpose.msra.mxu0 0.0
        %2294 = vmatprep.subr.mxu0 0.0
        %2295 = vmatpush1.xpose.msra.mxu0 0.0
        %2296 = vmatprep.subr.mxu0 0.0
        %2297 = vmatpush1.xpose.msra.mxu0 0.0
        %2298 = vmatprep.subr.mxu0 0.0
        %2299 = vmatpush1.xpose.msra.mxu0 0.0
        %2300 = vmatprep.subr.mxu0 0.0
        %2301 = vmatpush1.xpose.msra.mxu0 0.0
        %2302 = vmatprep.subr.mxu0 0.0
        %2303 = vmatpush1.xpose.msra.mxu0 0.0
        %2304 = vmatprep.subr.mxu0 0.0
        %2305 = vmatpush1.xpose.msra.mxu0 0.0
        %2306 = vmatprep.subr.mxu0 0.0
        %2307 = vmatpush1.xpose.msra.mxu0 0.0
        %2308 = vmatprep.subr.mxu0 0.0
        %2309 = vmatpush1.xpose.msra.mxu0 0.0
        %2310 = vmatprep.subr.mxu0 0.0
        %2311 = vmatpush1.xpose.msra.mxu0 0.0
        %2312 = vmatprep.subr.mxu0 0.0
        %2313 = vmatpush1.xpose.msra.mxu0 0.0
        %2314 = vmatprep.subr.mxu0 0.0
        %2315 = vmatpush1.xpose.msra.mxu0 0.0
        %2316 = vmatprep.subr.mxu0 0.0
        %2317 = vmatpush1.xpose.msra.mxu0 0.0
        %2318 = vmatprep.subr.mxu0 0.0
        %2319 = vmatpush1.xpose.msra.mxu0 0.0
        %2320 = vmatprep.subr.mxu0 0.0
        %2321 = vmatpush1.xpose.msra.mxu0 0.0
        %2322 = vmatprep.subr.mxu0 0.0
        %2323 = vmatpush1.xpose.msra.mxu0 0.0
        %2324 = vmatprep.subr.mxu0 0.0
        %2325 = vmatpush1.xpose.msra.mxu0 0.0
        %2326 = vmatprep.subr.mxu0 0.0
        %2327 = vmatpush1.xpose.msra.mxu0 0.0
        %2328 = vmatprep.subr.mxu0 0.0
        %2329 = vmatpush1.xpose.msra.mxu0 0.0
        %2330 = vmatprep.mubr.f32.mxu0 0.0
        %2331 = vmatmul.mubr.f32.gmra.mrb[0].mxu0 %v2252
        %v2332 = vpop.f32.mrb[0].mxu0
        %v2333 = vadd.f32 0.0, %v2332
        %v2334 = vpop.f32.mrb[0].mxu0
        %2335 = vmatprep.mubr.f32.mxu0 0.0
        %2336 = vmatmul.mubr.f32.gmra.mrb[0].mxu0 %v2255
        %v2337 = vpop.f32.mrb[0].mxu0
        %v2338 = vadd.f32 0.0, %v2337
        %v2339 = vpop.f32.mrb[0].mxu0
        %2340 = vmatprep.mubr.f32.mxu0 0.0
        %2341 = vmatmul.mubr.f32.gmra.mrb[0].mxu0 %v2258
        %v2342 = vpop.f32.mrb[0].mxu0
        %v2343 = vadd.f32 0.0, %v2342
        %v2344 = vpop.f32.mrb[0].mxu0
        %2345 = vmatprep.mubr.f32.mxu0 0.0
        %2346 = vmatmul.mubr.f32.gmra.mrb[0].mxu0 %v2261
        %v2347 = vpop.f32.mrb[0].mxu0
        %v2348 = vadd.f32 0.0, %v2347
        %v2349 = vpop.f32.mrb[0].mxu0
        %2350 = vdwg.mxu0
        %v2352 = vsel %vm787, %v2047, 0
        %v2355 = vsel %vm787, %v2048, 0
        %v2358 = vsel %vm787, %v2049, 0
        %v2361 = vsel %vm787, %v2050, 0
        %v2364 = vsel %vm787, %v1705, 0
        %2366 = vmatprep.subr.mxu0 0.0
        %2367 = vmatpush1.xpose.msra.mxu0 %v2364
        %2368 = vmatprep.subr.mxu0 0.0
        %2369 = vmatpush1.xpose.msra.mxu0 0.0
        %2370 = vmatprep.subr.mxu0 0.0
        %2371 = vmatpush1.xpose.msra.mxu0 0.0
        %2372 = vmatprep.subr.mxu0 0.0
        %2373 = vmatpush1.xpose.msra.mxu0 0.0
        %2374 = vmatprep.subr.mxu0 0.0
        %2375 = vmatpush1.xpose.msra.mxu0 0.0
        %2376 = vmatprep.subr.mxu0 0.0
        %2377 = vmatpush1.xpose.msra.mxu0 0.0
        %2378 = vmatprep.subr.mxu0 0.0
        %2379 = vmatpush1.xpose.msra.mxu0 0.0
        %2380 = vmatprep.subr.mxu0 0.0
        %2381 = vmatpush1.xpose.msra.mxu0 0.0
        %2382 = vmatprep.subr.mxu0 0.0
        %2383 = vmatpush1.xpose.msra.mxu0 0.0
        %2384 = vmatprep.subr.mxu0 0.0
        %2385 = vmatpush1.xpose.msra.mxu0 0.0
        %2386 = vmatprep.subr.mxu0 0.0
        %2387 = vmatpush1.xpose.msra.mxu0 0.0
        %2388 = vmatprep.subr.mxu0 0.0
        %2389 = vmatpush1.xpose.msra.mxu0 0.0
        %2390 = vmatprep.subr.mxu0 0.0
        %2391 = vmatpush1.xpose.msra.mxu0 0.0
        %2392 = vmatprep.subr.mxu0 0.0
        %2393 = vmatpush1.xpose.msra.mxu0 0.0
        %2394 = vmatprep.subr.mxu0 0.0
        %2395 = vmatpush1.xpose.msra.mxu0 0.0
        %2396 = vmatprep.subr.mxu0 0.0
        %2397 = vmatpush1.xpose.msra.mxu0 0.0
        %2398 = vmatprep.subr.mxu0 0.0
        %2399 = vmatpush1.xpose.msra.mxu0 0.0
        %2400 = vmatprep.subr.mxu0 0.0
        %2401 = vmatpush1.xpose.msra.mxu0 0.0
        %2402 = vmatprep.subr.mxu0 0.0
        %2403 = vmatpush1.xpose.msra.mxu0 0.0
        %2404 = vmatprep.subr.mxu0 0.0
        %2405 = vmatpush1.xpose.msra.mxu0 0.0
        %2406 = vmatprep.subr.mxu0 0.0
        %2407 = vmatpush1.xpose.msra.mxu0 0.0
        %2408 = vmatprep.subr.mxu0 0.0
        %2409 = vmatpush1.xpose.msra.mxu0 0.0
        %2410 = vmatprep.subr.mxu0 0.0
        %2411 = vmatpush1.xpose.msra.mxu0 0.0
        %2412 = vmatprep.subr.mxu0 0.0
        %2413 = vmatpush1.xpose.msra.mxu0 0.0
        %2414 = vmatprep.subr.mxu0 0.0
        %2415 = vmatpush1.xpose.msra.mxu0 0.0
        %2416 = vmatprep.subr.mxu0 0.0
        %2417 = vmatpush1.xpose.msra.mxu0 0.0
        %2418 = vmatprep.subr.mxu0 0.0
        %2419 = vmatpush1.xpose.msra.mxu0 0.0
        %2420 = vmatprep.subr.mxu0 0.0
        %2421 = vmatpush1.xpose.msra.mxu0 0.0
        %2422 = vmatprep.subr.mxu0 0.0
        %2423 = vmatpush1.xpose.msra.mxu0 0.0
        %2424 = vmatprep.subr.mxu0 0.0
        %2425 = vmatpush1.xpose.msra.mxu0 0.0
        %2426 = vmatprep.subr.mxu0 0.0
        %2427 = vmatpush1.xpose.msra.mxu0 0.0
        %2428 = vmatprep.subr.mxu0 0.0
        %2429 = vmatpush1.xpose.msra.mxu0 0.0
        %2430 = vmatprep.mubr.f32.mxu0 0.0
        %2431 = vmatmul.mubr.f32.gmra.mrb[0].mxu0 %v2352
        %v2432 = vpop.f32.mrb[0].mxu0
        %v2433 = vadd.f32 0.0, %v2432
        %v2434 = vpop.f32.mrb[0].mxu0
        %2435 = vmatprep.mubr.f32.mxu0 0.0
        %2436 = vmatmul.mubr.f32.gmra.mrb[0].mxu0 %v2355
        %v2437 = vpop.f32.mrb[0].mxu0
        %v2438 = vadd.f32 0.0, %v2437
        %v2439 = vpop.f32.mrb[0].mxu0
        %2440 = vmatprep.mubr.f32.mxu0 0.0
        %2441 = vmatmul.mubr.f32.gmra.mrb[0].mxu0 %v2358
        %v2442 = vpop.f32.mrb[0].mxu0
        %v2443 = vadd.f32 0.0, %v2442
        %v2444 = vpop.f32.mrb[0].mxu0
        %2445 = vmatprep.mubr.f32.mxu0 0.0
        %2446 = vmatmul.mubr.f32.gmra.mrb[0].mxu0 %v2361
        %v2447 = vpop.f32.mrb[0].mxu0
        %v2448 = vadd.f32 0.0, %v2447
        %v2449 = vpop.f32.mrb[0].mxu0
        %2450 = vdwg.mxu0
        %v2451 = vsel %vm1418, %v2133, -inf
        %2452 = vmax.xlane.f32.xlu0 %v2451
        %v2453 = vpop.xlane.xlu0 %2452
        %v2454 = vsel %vm1418, %v2138, -inf
        %2455 = vmax.xlane.f32.xlu0 %v2454
        %v2456 = vpop.xlane.xlu0 %2455
        %v2457 = vsel %vm1418, %v2143, -inf
        %2458 = vmax.xlane.f32.xlu0 %v2457
        %v2459 = vpop.xlane.xlu0 %2458
        %v2460 = vsel %vm1418, %v2148, -inf
        %2461 = vmax.xlane.f32.xlu0 %v2460
        %v2462 = vpop.xlane.xlu0 %2461
        %v2463 = vsel %vm1418, %v2233, -inf
        %2464 = vmax.xlane.f32.xlu0 %v2463
        %v2465 = vpop.xlane.xlu0 %2464
        %v2466 = vsel %vm1418, %v2238, -inf
        %2467 = vmax.xlane.f32.xlu0 %v2466
        %v2468 = vpop.xlane.xlu0 %2467
        %v2469 = vsel %vm1418, %v2243, -inf
        %2470 = vmax.xlane.f32.xlu0 %v2469
        %v2471 = vpop.xlane.xlu0 %2470
        %v2472 = vsel %vm1418, %v2248, -inf
        %2473 = vmax.xlane.f32.xlu0 %v2472
        %v2474 = vpop.xlane.xlu0 %2473
        %v2475 = vsel %vm1418, %v2333, -inf
        %2476 = vmax.xlane.f32.xlu0 %v2475
        %v2477 = vpop.xlane.xlu0 %2476
        %v2478 = vsel %vm1418, %v2338, -inf
        %2479 = vmax.xlane.f32.xlu0 %v2478
        %v2480 = vpop.xlane.xlu0 %2479
        %v2481 = vsel %vm1418, %v2343, -inf
        %2482 = vmax.xlane.f32.xlu0 %v2481
        %v2483 = vpop.xlane.xlu0 %2482
        %v2484 = vsel %vm1418, %v2348, -inf
        %2485 = vmax.xlane.f32.xlu0 %v2484
        %v2486 = vpop.xlane.xlu0 %2485
        %v2487 = vsel %vm1418, %v2433, -inf
        %2488 = vmax.xlane.f32.xlu0 %v2487
        %v2489 = vpop.xlane.xlu0 %2488
        %v2490 = vsel %vm1418, %v2438, -inf
        %2491 = vmax.xlane.f32.xlu0 %v2490
        %v2492 = vpop.xlane.xlu0 %2491
        %v2493 = vsel %vm1418, %v2443, -inf
        %2494 = vmax.xlane.f32.xlu0 %v2493
        %v2495 = vpop.xlane.xlu0 %2494
        %v2496 = vsel %vm1418, %v2448, -inf
        %2497 = vmax.xlane.f32.xlu0 %v2496
        %v2498 = vpop.xlane.xlu0 %2497
        %v2499 = vsub.f32 %v2133, %v2453
        %v2500 = vsub.f32 %v2138, %v2456
        %v2501 = vsub.f32 %v2143, %v2459
        %v2502 = vsub.f32 %v2148, %v2462
        %v2503 = vsub.f32 %v2233, %v2465
        %v2504 = vsub.f32 %v2238, %v2468
        %v2505 = vsub.f32 %v2243, %v2471
        %v2506 = vsub.f32 %v2248, %v2474
        %v2507 = vsub.f32 %v2333, %v2477
        %v2508 = vsub.f32 %v2338, %v2480
        %v2509 = vsub.f32 %v2343, %v2483
        %v2510 = vsub.f32 %v2348, %v2486
        %v2511 = vsub.f32 %v2433, %v2489
        %v2512 = vsub.f32 %v2438, %v2492
        %v2513 = vsub.f32 %v2443, %v2495
        %v2514 = vsub.f32 %v2448, %v2498
        %v2515 = vmul.f32 %v2499, 1.442695
        %v2516 = vpow.pop %v2515
        %v2517 = vmul.f32 %v2500, 1.442695
        %v2518 = vpow.pop %v2517
        %v2519 = vmul.f32 %v2501, 1.442695
        %v2520 = vpow.pop %v2519
        %v2521 = vmul.f32 %v2502, 1.442695
        %v2522 = vpow.pop %v2521
        %v2523 = vmul.f32 %v2503, 1.442695
        %v2524 = vpow.pop %v2523
        %v2525 = vmul.f32 %v2504, 1.442695
        %v2526 = vpow.pop %v2525
        %v2527 = vmul.f32 %v2505, 1.442695
        %v2528 = vpow.pop %v2527
        %v2529 = vmul.f32 %v2506, 1.442695
        %v2530 = vpow.pop %v2529
        %v2531 = vmul.f32 %v2507, 1.442695
        %v2532 = vpow.pop %v2531
        %v2533 = vmul.f32 %v2508, 1.442695
        %v2534 = vpow.pop %v2533
        %v2535 = vmul.f32 %v2509, 1.442695
        %v2536 = vpow.pop %v2535
        %v2537 = vmul.f32 %v2510, 1.442695
        %v2538 = vpow.pop %v2537
        %v2539 = vmul.f32 %v2511, 1.442695
        %v2540 = vpow.pop %v2539
        %v2541 = vmul.f32 %v2512, 1.442695
        %v2542 = vpow.pop %v2541
        %v2543 = vmul.f32 %v2513, 1.442695
        %v2544 = vpow.pop %v2543
        %v2545 = vmul.f32 %v2514, 1.442695
        %v2546 = vpow.pop %v2545
        %v2547 = vsel %vm1418, %v2516, 0.0
        %2548 = vadd.xlane.f32.xlu0 %v2547
        %v2549 = vpop.xlane.xlu0 %2548
        %v2550 = vsel %vm1418, %v2518, 0.0
        %2551 = vadd.xlane.f32.xlu0 %v2550
        %v2552 = vpop.xlane.xlu0 %2551
        %v2553 = vsel %vm1418, %v2520, 0.0
        %2554 = vadd.xlane.f32.xlu0 %v2553
        %v2555 = vpop.xlane.xlu0 %2554
        %v2556 = vsel %vm1418, %v2522, 0.0
        %2557 = vadd.xlane.f32.xlu0 %v2556
        %v2558 = vpop.xlane.xlu0 %2557
        %v2559 = vsel %vm1418, %v2524, 0.0
        %2560 = vadd.xlane.f32.xlu0 %v2559
        %v2561 = vpop.xlane.xlu0 %2560
        %v2562 = vsel %vm1418, %v2526, 0.0
        %2563 = vadd.xlane.f32.xlu0 %v2562
        %v2564 = vpop.xlane.xlu0 %2563
        %v2565 = vsel %vm1418, %v2528, 0.0
        %2566 = vadd.xlane.f32.xlu0 %v2565
        %v2567 = vpop.xlane.xlu0 %2566
        %v2568 = vsel %vm1418, %v2530, 0.0
        %2569 = vadd.xlane.f32.xlu0 %v2568
        %v2570 = vpop.xlane.xlu0 %2569
        %v2571 = vsel %vm1418, %v2532, 0.0
        %2572 = vadd.xlane.f32.xlu0 %v2571
        %v2573 = vpop.xlane.xlu0 %2572
        %v2574 = vsel %vm1418, %v2534, 0.0
        %2575 = vadd.xlane.f32.xlu0 %v2574
        %v2576 = vpop.xlane.xlu0 %2575
        %v2577 = vsel %vm1418, %v2536, 0.0
        %2578 = vadd.xlane.f32.xlu0 %v2577
        %v2579 = vpop.xlane.xlu0 %2578
        %v2580 = vsel %vm1418, %v2538, 0.0
        %2581 = vadd.xlane.f32.xlu0 %v2580
        %v2582 = vpop.xlane.xlu0 %2581
        %v2583 = vsel %vm1418, %v2540, 0.0
        %2584 = vadd.xlane.f32.xlu0 %v2583
        %v2585 = vpop.xlane.xlu0 %2584
        %v2586 = vsel %vm1418, %v2542, 0.0
        %2587 = vadd.xlane.f32.xlu0 %v2586
        %v2588 = vpop.xlane.xlu0 %2587
        %v2589 = vsel %vm1418, %v2544, 0.0
        %2590 = vadd.xlane.f32.xlu0 %v2589
        %v2591 = vpop.xlane.xlu0 %2590
        %v2592 = vsel %vm1418, %v2546, 0.0
        %2593 = vadd.xlane.f32.xlu0 %v2592
        %v2594 = vpop.xlane.xlu0 %2593
        %v2595 = vrcp.pop %v2549
        %v2596 = vrcp.pop %v2552
        %v2597 = vrcp.pop %v2555
        %v2598 = vrcp.pop %v2558
        %v2599 = vrcp.pop %v2561
        %v2600 = vrcp.pop %v2564
        %v2601 = vrcp.pop %v2567
        %v2602 = vrcp.pop %v2570
        %v2603 = vrcp.pop %v2573
        %v2604 = vrcp.pop %v2576
        %v2605 = vrcp.pop %v2579
        %v2606 = vrcp.pop %v2582
        %v2607 = vrcp.pop %v2585
        %v2608 = vrcp.pop %v2588
        %v2609 = vrcp.pop %v2591
        %v2610 = vrcp.pop %v2594
        %v2611 = vmul.f32 %v2516, %v2595
        %v2612 = vmul.f32 %v2518, %v2596
        %v2613 = vmul.f32 %v2520, %v2597
        %v2614 = vmul.f32 %v2522, %v2598
        %v2615 = vmul.f32 %v2524, %v2599
        %v2616 = vmul.f32 %v2526, %v2600
        %v2617 = vmul.f32 %v2528, %v2601
        %v2618 = vmul.f32 %v2530, %v2602
        %v2619 = vmul.f32 %v2532, %v2603
        %v2620 = vmul.f32 %v2534, %v2604
        %v2621 = vmul.f32 %v2536, %v2605
        %v2622 = vmul.f32 %v2538, %v2606
        %v2623 = vmul.f32 %v2540, %v2607
        %v2624 = vmul.f32 %v2542, %v2608
        %v2625 = vmul.f32 %v2544, %v2609
        %v2626 = vmul.f32 %v2546, %v2610
        %2627 = vst.msk [vmem:[%s769] sm:$0xff] %vm1418, %v2611
        %2628 = vst.msk [vmem:[%s769 + $0x8] sm:$0xff] %vm1418, %v2612
        %2629 = vst.msk [vmem:[%s769 + $0x10] sm:$0xff] %vm1418, %v2613
        %2630 = vst.msk [vmem:[%s769 + $0x18] sm:$0xff] %vm1418, %v2614
        %2631 = vst.msk [vmem:[%s769 + $0x20] sm:$0xff] %vm1418, %v2615
        %2632 = vst.msk [vmem:[%s769 + $0x28] sm:$0xff] %vm1418, %v2616
        %2633 = vst.msk [vmem:[%s769 + $0x30] sm:$0xff] %vm1418, %v2617
        %2634 = vst.msk [vmem:[%s769 + $0x38] sm:$0xff] %vm1418, %v2618
        %2635 = vst.msk [vmem:[%s769 + $0x40] sm:$0xff] %vm1418, %v2619
        %2636 = vst.msk [vmem:[%s769 + $0x48] sm:$0xff] %vm1418, %v2620
        %2637 = vst.msk [vmem:[%s769 + $0x50] sm:$0xff] %vm1418, %v2621
        %2638 = vst.msk [vmem:[%s769 + $0x58] sm:$0xff] %vm1418, %v2622
        %2639 = vst.msk [vmem:[%s769 + $0x60] sm:$0xff] %vm1418, %v2623
        %2640 = vst.msk [vmem:[%s769 + $0x68] sm:$0xff] %vm1418, %v2624
        %2641 = vst.msk [vmem:[%s769 + $0x70] sm:$0xff] %vm1418, %v2625
        %2642 = vst.msk [vmem:[%s769 + $0x78] sm:$0xff] %vm1418, %v2626
        %v2644 = vsel %vm1418, %v2611, 0
        %v2647 = vsel %vm1418, %v2612, 0
        %v2650 = vsel %vm1418, %v2613, 0
        %v2653 = vsel %vm1418, %v2614, 0
        %2655 = vmatprep.subr.mxu0 0.0
        %2656 = vmatpush1.msra.mxu0 %v1986
        %2657 = vmatprep.subr.mxu0 0.0
        %2658 = vmatpush1.msra.mxu0 0.0
        %2659 = vmatprep.subr.mxu0 0.0
        %2660 = vmatpush1.msra.mxu0 0.0
        %2661 = vmatprep.subr.mxu0 0.0
        %2662 = vmatpush1.msra.mxu0 0.0
        %2663 = vmatprep.subr.mxu0 0.0
        %2664 = vmatpush1.msra.mxu0 0.0
        %2665 = vmatprep.subr.mxu0 0.0
        %2666 = vmatpush1.msra.mxu0 0.0
        %2667 = vmatprep.subr.mxu0 0.0
        %2668 = vmatpush1.msra.mxu0 0.0
        %2669 = vmatprep.subr.mxu0 0.0
        %2670 = vmatpush1.msra.mxu0 0.0
        %2671 = vmatprep.subr.mxu0 0.0
        %2672 = vmatpush1.msra.mxu0 0.0
        %2673 = vmatprep.subr.mxu0 0.0
        %2674 = vmatpush1.msra.mxu0 0.0
        %2675 = vmatprep.subr.mxu0 0.0
        %2676 = vmatpush1.msra.mxu0 0.0
        %2677 = vmatprep.subr.mxu0 0.0
        %2678 = vmatpush1.msra.mxu0 0.0
        %2679 = vmatprep.subr.mxu0 0.0
        %2680 = vmatpush1.msra.mxu0 0.0
        %2681 = vmatprep.subr.mxu0 0.0
        %2682 = vmatpush1.msra.mxu0 0.0
        %2683 = vmatprep.subr.mxu0 0.0
        %2684 = vmatpush1.msra.mxu0 0.0
        %2685 = vmatprep.subr.mxu0 0.0
        %2686 = vmatpush1.msra.mxu0 0.0
        %2687 = vmatprep.subr.mxu0 0.0
        %2688 = vmatpush1.msra.mxu0 0.0
        %2689 = vmatprep.subr.mxu0 0.0
        %2690 = vmatpush1.msra.mxu0 0.0
        %2691 = vmatprep.subr.mxu0 0.0
        %2692 = vmatpush1.msra.mxu0 0.0
        %2693 = vmatprep.subr.mxu0 0.0
        %2694 = vmatpush1.msra.mxu0 0.0
        %2695 = vmatprep.subr.mxu0 0.0
        %2696 = vmatpush1.msra.mxu0 0.0
        %2697 = vmatprep.subr.mxu0 0.0
        %2698 = vmatpush1.msra.mxu0 0.0
        %2699 = vmatprep.subr.mxu0 0.0
        %2700 = vmatpush1.msra.mxu0 0.0
        %2701 = vmatprep.subr.mxu0 0.0
        %2702 = vmatpush1.msra.mxu0 0.0
        %2703 = vmatprep.subr.mxu0 0.0
        %2704 = vmatpush1.msra.mxu0 0.0
        %2705 = vmatprep.subr.mxu0 0.0
        %2706 = vmatpush1.msra.mxu0 0.0
        %2707 = vmatprep.subr.mxu0 0.0
        %2708 = vmatpush1.msra.mxu0 0.0
        %2709 = vmatprep.subr.mxu0 0.0
        %2710 = vmatpush1.msra.mxu0 0.0
        %2711 = vmatprep.subr.mxu0 0.0
        %2712 = vmatpush1.msra.mxu0 0.0
        %2713 = vmatprep.subr.mxu0 0.0
        %2714 = vmatpush1.msra.mxu0 0.0
        %2715 = vmatprep.subr.mxu0 0.0
        %2716 = vmatpush1.msra.mxu0 0.0
        %2717 = vmatprep.subr.mxu0 0.0
        %2718 = vmatpush1.msra.mxu0 0.0
        %2719 = vmatprep.mubr.f32.mxu0 0.0
        %2720 = vmatmul.mubr.f32.gmra.mrb[0].mxu0 %v2644
        %v2721 = vpop.f32.mrb[0].mxu0
        %v2722 = vadd.f32 0.0, %v2721
        %v2723 = vpop.f32.mrb[0].mxu0
        %2724 = vmatprep.mubr.f32.mxu0 0.0
        %2725 = vmatmul.mubr.f32.gmra.mrb[0].mxu0 %v2647
        %v2726 = vpop.f32.mrb[0].mxu0
        %v2727 = vadd.f32 0.0, %v2726
        %v2728 = vpop.f32.mrb[0].mxu0
        %2729 = vmatprep.mubr.f32.mxu0 0.0
        %2730 = vmatmul.mubr.f32.gmra.mrb[0].mxu0 %v2650
        %v2731 = vpop.f32.mrb[0].mxu0
        %v2732 = vadd.f32 0.0, %v2731
        %v2733 = vpop.f32.mrb[0].mxu0
        %2734 = vmatprep.mubr.f32.mxu0 0.0
        %2735 = vmatmul.mubr.f32.gmra.mrb[0].mxu0 %v2653
        %v2736 = vpop.f32.mrb[0].mxu0
        %v2737 = vadd.f32 0.0, %v2736
        %v2738 = vpop.f32.mrb[0].mxu0
        %2739 = vdwg.mxu0
        %v2741 = vsel %vm1418, %v2615, 0
        %v2744 = vsel %vm1418, %v2616, 0
        %v2747 = vsel %vm1418, %v2617, 0
        %v2750 = vsel %vm1418, %v2618, 0
        %2752 = vmatprep.subr.mxu0 0.0
        %2753 = vmatpush1.msra.mxu0 %v1987
        %2754 = vmatprep.subr.mxu0 0.0
        %2755 = vmatpush1.msra.mxu0 0.0
        %2756 = vmatprep.subr.mxu0 0.0
        %2757 = vmatpush1.msra.mxu0 0.0
        %2758 = vmatprep.subr.mxu0 0.0
        %2759 = vmatpush1.msra.mxu0 0.0
        %2760 = vmatprep.subr.mxu0 0.0
        %2761 = vmatpush1.msra.mxu0 0.0
        %2762 = vmatprep.subr.mxu0 0.0
        %2763 = vmatpush1.msra.mxu0 0.0
        %2764 = vmatprep.subr.mxu0 0.0
        %2765 = vmatpush1.msra.mxu0 0.0
        %2766 = vmatprep.subr.mxu0 0.0
        %2767 = vmatpush1.msra.mxu0 0.0
        %2768 = vmatprep.subr.mxu0 0.0
        %2769 = vmatpush1.msra.mxu0 0.0
        %2770 = vmatprep.subr.mxu0 0.0
        %2771 = vmatpush1.msra.mxu0 0.0
        %2772 = vmatprep.subr.mxu0 0.0
        %2773 = vmatpush1.msra.mxu0 0.0
        %2774 = vmatprep.subr.mxu0 0.0
        %2775 = vmatpush1.msra.mxu0 0.0
        %2776 = vmatprep.subr.mxu0 0.0
        %2777 = vmatpush1.msra.mxu0 0.0
        %2778 = vmatprep.subr.mxu0 0.0
        %2779 = vmatpush1.msra.mxu0 0.0
        %2780 = vmatprep.subr.mxu0 0.0
        %2781 = vmatpush1.msra.mxu0 0.0
        %2782 = vmatprep.subr.mxu0 0.0
        %2783 = vmatpush1.msra.mxu0 0.0
        %2784 = vmatprep.subr.mxu0 0.0
        %2785 = vmatpush1.msra.mxu0 0.0
        %2786 = vmatprep.subr.mxu0 0.0
        %2787 = vmatpush1.msra.mxu0 0.0
        %2788 = vmatprep.subr.mxu0 0.0
        %2789 = vmatpush1.msra.mxu0 0.0
        %2790 = vmatprep.subr.mxu0 0.0
        %2791 = vmatpush1.msra.mxu0 0.0
        %2792 = vmatprep.subr.mxu0 0.0
        %2793 = vmatpush1.msra.mxu0 0.0
        %2794 = vmatprep.subr.mxu0 0.0
        %2795 = vmatpush1.msra.mxu0 0.0
        %2796 = vmatprep.subr.mxu0 0.0
        %2797 = vmatpush1.msra.mxu0 0.0
        %2798 = vmatprep.subr.mxu0 0.0
        %2799 = vmatpush1.msra.mxu0 0.0
        %2800 = vmatprep.subr.mxu0 0.0
        %2801 = vmatpush1.msra.mxu0 0.0
        %2802 = vmatprep.subr.mxu0 0.0
        %2803 = vmatpush1.msra.mxu0 0.0
        %2804 = vmatprep.subr.mxu0 0.0
        %2805 = vmatpush1.msra.mxu0 0.0
        %2806 = vmatprep.subr.mxu0 0.0
        %2807 = vmatpush1.msra.mxu0 0.0
        %2808 = vmatprep.subr.mxu0 0.0
        %2809 = vmatpush1.msra.mxu0 0.0
        %2810 = vmatprep.subr.mxu0 0.0
        %2811 = vmatpush1.msra.mxu0 0.0
        %2812 = vmatprep.subr.mxu0 0.0
        %2813 = vmatpush1.msra.mxu0 0.0
        %2814 = vmatprep.subr.mxu0 0.0
        %2815 = vmatpush1.msra.mxu0 0.0
        %2816 = vmatprep.mubr.f32.mxu0 0.0
        %2817 = vmatmul.mubr.f32.gmra.mrb[0].mxu0 %v2741
        %v2818 = vpop.f32.mrb[0].mxu0
        %v2819 = vadd.f32 0.0, %v2818
        %v2820 = vpop.f32.mrb[0].mxu0
        %2821 = vmatprep.mubr.f32.mxu0 0.0
        %2822 = vmatmul.mubr.f32.gmra.mrb[0].mxu0 %v2744
        %v2823 = vpop.f32.mrb[0].mxu0
        %v2824 = vadd.f32 0.0, %v2823
        %v2825 = vpop.f32.mrb[0].mxu0
        %2826 = vmatprep.mubr.f32.mxu0 0.0
        %2827 = vmatmul.mubr.f32.gmra.mrb[0].mxu0 %v2747
        %v2828 = vpop.f32.mrb[0].mxu0
        %v2829 = vadd.f32 0.0, %v2828
        %v2830 = vpop.f32.mrb[0].mxu0
        %2831 = vmatprep.mubr.f32.mxu0 0.0
        %2832 = vmatmul.mubr.f32.gmra.mrb[0].mxu0 %v2750
        %v2833 = vpop.f32.mrb[0].mxu0
        %v2834 = vadd.f32 0.0, %v2833
        %v2835 = vpop.f32.mrb[0].mxu0
        %2836 = vdwg.mxu0
        %v2838 = vsel %vm1418, %v2619, 0
        %v2841 = vsel %vm1418, %v2620, 0
        %v2844 = vsel %vm1418, %v2621, 0
        %v2847 = vsel %vm1418, %v2622, 0
        %2849 = vmatprep.subr.mxu0 0.0
        %2850 = vmatpush1.msra.mxu0 %v1988
        %2851 = vmatprep.subr.mxu0 0.0
        %2852 = vmatpush1.msra.mxu0 0.0
        %2853 = vmatprep.subr.mxu0 0.0
        %2854 = vmatpush1.msra.mxu0 0.0
        %2855 = vmatprep.subr.mxu0 0.0
        %2856 = vmatpush1.msra.mxu0 0.0
        %2857 = vmatprep.subr.mxu0 0.0
        %2858 = vmatpush1.msra.mxu0 0.0
        %2859 = vmatprep.subr.mxu0 0.0
        %2860 = vmatpush1.msra.mxu0 0.0
        %2861 = vmatprep.subr.mxu0 0.0
        %2862 = vmatpush1.msra.mxu0 0.0
        %2863 = vmatprep.subr.mxu0 0.0
        %2864 = vmatpush1.msra.mxu0 0.0
        %2865 = vmatprep.subr.mxu0 0.0
        %2866 = vmatpush1.msra.mxu0 0.0
        %2867 = vmatprep.subr.mxu0 0.0
        %2868 = vmatpush1.msra.mxu0 0.0
        %2869 = vmatprep.subr.mxu0 0.0
        %2870 = vmatpush1.msra.mxu0 0.0
        %2871 = vmatprep.subr.mxu0 0.0
        %2872 = vmatpush1.msra.mxu0 0.0
        %2873 = vmatprep.subr.mxu0 0.0
        %2874 = vmatpush1.msra.mxu0 0.0
        %2875 = vmatprep.subr.mxu0 0.0
        %2876 = vmatpush1.msra.mxu0 0.0
        %2877 = vmatprep.subr.mxu0 0.0
        %2878 = vmatpush1.msra.mxu0 0.0
        %2879 = vmatprep.subr.mxu0 0.0
        %2880 = vmatpush1.msra.mxu0 0.0
        %2881 = vmatprep.subr.mxu0 0.0
        %2882 = vmatpush1.msra.mxu0 0.0
        %2883 = vmatprep.subr.mxu0 0.0
        %2884 = vmatpush1.msra.mxu0 0.0
        %2885 = vmatprep.subr.mxu0 0.0
        %2886 = vmatpush1.msra.mxu0 0.0
        %2887 = vmatprep.subr.mxu0 0.0
        %2888 = vmatpush1.msra.mxu0 0.0
        %2889 = vmatprep.subr.mxu0 0.0
        %2890 = vmatpush1.msra.mxu0 0.0
        %2891 = vmatprep.subr.mxu0 0.0
        %2892 = vmatpush1.msra.mxu0 0.0
        %2893 = vmatprep.subr.mxu0 0.0
        %2894 = vmatpush1.msra.mxu0 0.0
        %2895 = vmatprep.subr.mxu0 0.0
        %2896 = vmatpush1.msra.mxu0 0.0
        %2897 = vmatprep.subr.mxu0 0.0
        %2898 = vmatpush1.msra.mxu0 0.0
        %2899 = vmatprep.subr.mxu0 0.0
        %2900 = vmatpush1.msra.mxu0 0.0
        %2901 = vmatprep.subr.mxu0 0.0
        %2902 = vmatpush1.msra.mxu0 0.0
        %2903 = vmatprep.subr.mxu0 0.0
        %2904 = vmatpush1.msra.mxu0 0.0
        %2905 = vmatprep.subr.mxu0 0.0
        %2906 = vmatpush1.msra.mxu0 0.0
        %2907 = vmatprep.subr.mxu0 0.0
        %2908 = vmatpush1.msra.mxu0 0.0
        %2909 = vmatprep.subr.mxu0 0.0
        %2910 = vmatpush1.msra.mxu0 0.0
        %2911 = vmatprep.subr.mxu0 0.0
        %2912 = vmatpush1.msra.mxu0 0.0
        %2913 = vmatprep.mubr.f32.mxu0 0.0
        %2914 = vmatmul.mubr.f32.gmra.mrb[0].mxu0 %v2838
        %v2915 = vpop.f32.mrb[0].mxu0
        %v2916 = vadd.f32 0.0, %v2915
        %v2917 = vpop.f32.mrb[0].mxu0
        %2918 = vmatprep.mubr.f32.mxu0 0.0
        %2919 = vmatmul.mubr.f32.gmra.mrb[0].mxu0 %v2841
        %v2920 = vpop.f32.mrb[0].mxu0
        %v2921 = vadd.f32 0.0, %v2920
        %v2922 = vpop.f32.mrb[0].mxu0
        %2923 = vmatprep.mubr.f32.mxu0 0.0
        %2924 = vmatmul.mubr.f32.gmra.mrb[0].mxu0 %v2844
        %v2925 = vpop.f32.mrb[0].mxu0
        %v2926 = vadd.f32 0.0, %v2925
        %v2927 = vpop.f32.mrb[0].mxu0
        %2928 = vmatprep.mubr.f32.mxu0 0.0
        %2929 = vmatmul.mubr.f32.gmra.mrb[0].mxu0 %v2847
        %v2930 = vpop.f32.mrb[0].mxu0
        %v2931 = vadd.f32 0.0, %v2930
        %v2932 = vpop.f32.mrb[0].mxu0
        %2933 = vdwg.mxu0
        %v2935 = vsel %vm1418, %v2623, 0
        %v2938 = vsel %vm1418, %v2624, 0
        %v2941 = vsel %vm1418, %v2625, 0
        %v2944 = vsel %vm1418, %v2626, 0
        %2946 = vmatprep.subr.mxu0 0.0
        %2947 = vmatpush1.msra.mxu0 %v1989
        %2948 = vmatprep.subr.mxu0 0.0
        %2949 = vmatpush1.msra.mxu0 0.0
        %2950 = vmatprep.subr.mxu0 0.0
        %2951 = vmatpush1.msra.mxu0 0.0
        %2952 = vmatprep.subr.mxu0 0.0
        %2953 = vmatpush1.msra.mxu0 0.0
        %2954 = vmatprep.subr.mxu0 0.0
        %2955 = vmatpush1.msra.mxu0 0.0
        %2956 = vmatprep.subr.mxu0 0.0
        %2957 = vmatpush1.msra.mxu0 0.0
        %2958 = vmatprep.subr.mxu0 0.0
        %2959 = vmatpush1.msra.mxu0 0.0
        %2960 = vmatprep.subr.mxu0 0.0
        %2961 = vmatpush1.msra.mxu0 0.0
        %2962 = vmatprep.subr.mxu0 0.0
        %2963 = vmatpush1.msra.mxu0 0.0
        %2964 = vmatprep.subr.mxu0 0.0
        %2965 = vmatpush1.msra.mxu0 0.0
        %2966 = vmatprep.subr.mxu0 0.0
        %2967 = vmatpush1.msra.mxu0 0.0
        %2968 = vmatprep.subr.mxu0 0.0
        %2969 = vmatpush1.msra.mxu0 0.0
        %2970 = vmatprep.subr.mxu0 0.0
        %2971 = vmatpush1.msra.mxu0 0.0
        %2972 = vmatprep.subr.mxu0 0.0
        %2973 = vmatpush1.msra.mxu0 0.0
        %2974 = vmatprep.subr.mxu0 0.0
        %2975 = vmatpush1.msra.mxu0 0.0
        %2976 = vmatprep.subr.mxu0 0.0
        %2977 = vmatpush1.msra.mxu0 0.0
        %2978 = vmatprep.subr.mxu0 0.0
        %2979 = vmatpush1.msra.mxu0 0.0
        %2980 = vmatprep.subr.mxu0 0.0
        %2981 = vmatpush1.msra.mxu0 0.0
        %2982 = vmatprep.subr.mxu0 0.0
        %2983 = vmatpush1.msra.mxu0 0.0
        %2984 = vmatprep.subr.mxu0 0.0
        %2985 = vmatpush1.msra.mxu0 0.0
        %2986 = vmatprep.subr.mxu0 0.0
        %2987 = vmatpush1.msra.mxu0 0.0
        %2988 = vmatprep.subr.mxu0 0.0
        %2989 = vmatpush1.msra.mxu0 0.0
        %2990 = vmatprep.subr.mxu0 0.0
        %2991 = vmatpush1.msra.mxu0 0.0
        %2992 = vmatprep.subr.mxu0 0.0
        %2993 = vmatpush1.msra.mxu0 0.0
        %2994 = vmatprep.subr.mxu0 0.0
        %2995 = vmatpush1.msra.mxu0 0.0
        %2996 = vmatprep.subr.mxu0 0.0
        %2997 = vmatpush1.msra.mxu0 0.0
        %2998 = vmatprep.subr.mxu0 0.0
        %2999 = vmatpush1.msra.mxu0 0.0
        %3000 = vmatprep.subr.mxu0 0.0
        %3001 = vmatpush1.msra.mxu0 0.0
        %3002 = vmatprep.subr.mxu0 0.0
        %3003 = vmatpush1.msra.mxu0 0.0
        %3004 = vmatprep.subr.mxu0 0.0
        %3005 = vmatpush1.msra.mxu0 0.0
        %3006 = vmatprep.subr.mxu0 0.0
        %3007 = vmatpush1.msra.mxu0 0.0
        %3008 = vmatprep.subr.mxu0 0.0
        %3009 = vmatpush1.msra.mxu0 0.0
        %3010 = vmatprep.mubr.f32.mxu0 0.0
        %3011 = vmatmul.mubr.f32.gmra.mrb[0].mxu0 %v2935
        %v3012 = vpop.f32.mrb[0].mxu0
        %v3013 = vadd.f32 0.0, %v3012
        %v3014 = vpop.f32.mrb[0].mxu0
        %3015 = vmatprep.mubr.f32.mxu0 0.0
        %3016 = vmatmul.mubr.f32.gmra.mrb[0].mxu0 %v2938
        %v3017 = vpop.f32.mrb[0].mxu0
        %v3018 = vadd.f32 0.0, %v3017
        %v3019 = vpop.f32.mrb[0].mxu0
        %3020 = vmatprep.mubr.f32.mxu0 0.0
        %3021 = vmatmul.mubr.f32.gmra.mrb[0].mxu0 %v2941
        %v3022 = vpop.f32.mrb[0].mxu0
        %v3023 = vadd.f32 0.0, %v3022
        %v3024 = vpop.f32.mrb[0].mxu0
        %3025 = vmatprep.mubr.f32.mxu0 0.0
        %3026 = vmatmul.mubr.f32.gmra.mrb[0].mxu0 %v2944
        %v3027 = vpop.f32.mrb[0].mxu0
        %v3028 = vadd.f32 0.0, %v3027
        %v3029 = vpop.f32.mrb[0].mxu0
        %3030 = vdwg.mxu0
        %v3031 = vmul.f32 %v2722, %v2018
        %v3032 = vmul.f32 %v2727, %v2022
        %v3033 = vmul.f32 %v2732, %v2026
        %v3034 = vmul.f32 %v2737, %v2030
        %v3035 = vmul.f32 %v2819, %v2018
        %v3036 = vmul.f32 %v2824, %v2022
        %v3037 = vmul.f32 %v2829, %v2026
        %v3038 = vmul.f32 %v2834, %v2030
        %v3039 = vmul.f32 %v2916, %v2018
        %v3040 = vmul.f32 %v2921, %v2022
        %v3041 = vmul.f32 %v2926, %v2026
        %v3042 = vmul.f32 %v2931, %v2030
        %v3043 = vmul.f32 %v3013, %v2018
        %v3044 = vmul.f32 %v3018, %v2022
        %v3045 = vmul.f32 %v3023, %v2026
        %v3046 = vmul.f32 %v3028, %v2030
        %v3047 = vsel %vm787, %v3031, 0.0
        %v3048 = vsel %vm787, %v3032, 0.0
        %v3049 = vadd.f32 %v3047, %v3048
        %v3050 = vsel %vm787, %v3033, 0.0
        %v3051 = vadd.f32 %v3049, %v3050
        %v3052 = vsel %vm787, %v3034, 0.0
        %v3053 = vadd.f32 %v3051, %v3052
        %v3054 = vsel %vm787, %v3035, 0.0
        %v3055 = vsel %vm787, %v3036, 0.0
        %v3056 = vadd.f32 %v3054, %v3055
        %v3057 = vsel %vm787, %v3037, 0.0
        %v3058 = vadd.f32 %v3056, %v3057
        %v3059 = vsel %vm787, %v3038, 0.0
        %v3060 = vadd.f32 %v3058, %v3059
        %v3061 = vsel %vm787, %v3039, 0.0
        %v3062 = vsel %vm787, %v3040, 0.0
        %v3063 = vadd.f32 %v3061, %v3062
        %v3064 = vsel %vm787, %v3041, 0.0
        %v3065 = vadd.f32 %v3063, %v3064
        %v3066 = vsel %vm787, %v3042, 0.0
        %v3067 = vadd.f32 %v3065, %v3066
        %v3068 = vsel %vm787, %v3043, 0.0
        %v3069 = vsel %vm787, %v3044, 0.0
        %v3070 = vadd.f32 %v3068, %v3069
        %v3071 = vsel %vm787, %v3045, 0.0
        %v3072 = vadd.f32 %v3070, %v3071
        %v3073 = vsel %vm787, %v3046, 0.0
        %v3074 = vadd.f32 %v3072, %v3073
        %v3075 = vld [vmem:[%s14] sm:$0xff]
        %v3076 = vld [vmem:[%s14 + $0x8] sm:$0xff]
        %v3077 = vld [vmem:[%s14 + $0x10] sm:$0xff]
        %v3078 = vld [vmem:[%s14 + $0x18] sm:$0xff]
        %v3079 = vld [vmem:[%s15] sm:$0x1]
        %v3081 = vlaneseq
        %v3082 = vshrl.u32 %v3081, 7
        %v3083 = vsub.s32 0, %v3082
        %v3084 = vrot.slane %v3079, %v3083
        %v3087 = vsel %vm787, %v3053, 0
        %v3090 = vsel %vm787, %v3060, 0
        %v3093 = vsel %vm787, %v3067, 0
        %v3096 = vsel %vm787, %v3074, 0
        %3098 = vmatprep.subr.mxu0 0.0
        %3099 = vmatpush1.msra.mxu0 %v3075
        %3100 = vmatprep.subr.mxu0 0.0
        %3101 = vmatpush1.msra.mxu0 %v3076
        %3102 = vmatprep.subr.mxu0 0.0
        %3103 = vmatpush1.msra.mxu0 %v3077
        %3104 = vmatprep.subr.mxu0 0.0
        %3105 = vmatpush1.msra.mxu0 %v3078
        %3106 = vmatprep.subr.mxu0 0.0
        %3107 = vmatpush1.msra.mxu0 0.0
        %3108 = vmatprep.subr.mxu0 0.0
        %3109 = vmatpush1.msra.mxu0 0.0
        %3110 = vmatprep.subr.mxu0 0.0
        %3111 = vmatpush1.msra.mxu0 0.0
        %3112 = vmatprep.subr.mxu0 0.0
        %3113 = vmatpush1.msra.mxu0 0.0
        %3114 = vmatprep.subr.mxu0 0.0
        %3115 = vmatpush1.msra.mxu0 0.0
        %3116 = vmatprep.subr.mxu0 0.0
        %3117 = vmatpush1.msra.mxu0 0.0
        %3118 = vmatprep.subr.mxu0 0.0
        %3119 = vmatpush1.msra.mxu0 0.0
        %3120 = vmatprep.subr.mxu0 0.0
        %3121 = vmatpush1.msra.mxu0 0.0
        %3122 = vmatprep.subr.mxu0 0.0
        %3123 = vmatpush1.msra.mxu0 0.0
        %3124 = vmatprep.subr.mxu0 0.0
        %3125 = vmatpush1.msra.mxu0 0.0
        %3126 = vmatprep.subr.mxu0 0.0
        %3127 = vmatpush1.msra.mxu0 0.0
        %3128 = vmatprep.subr.mxu0 0.0
        %3129 = vmatpush1.msra.mxu0 0.0
        %3130 = vmatprep.subr.mxu0 0.0
        %3131 = vmatpush1.msra.mxu0 0.0
        %3132 = vmatprep.subr.mxu0 0.0
        %3133 = vmatpush1.msra.mxu0 0.0
        %3134 = vmatprep.subr.mxu0 0.0
        %3135 = vmatpush1.msra.mxu0 0.0
        %3136 = vmatprep.subr.mxu0 0.0
        %3137 = vmatpush1.msra.mxu0 0.0
        %3138 = vmatprep.subr.mxu0 0.0
        %3139 = vmatpush1.msra.mxu0 0.0
        %3140 = vmatprep.subr.mxu0 0.0
        %3141 = vmatpush1.msra.mxu0 0.0
        %3142 = vmatprep.subr.mxu0 0.0
        %3143 = vmatpush1.msra.mxu0 0.0
        %3144 = vmatprep.subr.mxu0 0.0
        %3145 = vmatpush1.msra.mxu0 0.0
        %3146 = vmatprep.subr.mxu0 0.0
        %3147 = vmatpush1.msra.mxu0 0.0
        %3148 = vmatprep.subr.mxu0 0.0
        %3149 = vmatpush1.msra.mxu0 0.0
        %3150 = vmatprep.subr.mxu0 0.0
        %3151 = vmatpush1.msra.mxu0 0.0
        %3152 = vmatprep.subr.mxu0 0.0
        %3153 = vmatpush1.msra.mxu0 0.0
        %3154 = vmatprep.subr.mxu0 0.0
        %3155 = vmatpush1.msra.mxu0 0.0
        %3156 = vmatprep.subr.mxu0 0.0
        %3157 = vmatpush1.msra.mxu0 0.0
        %3158 = vmatprep.subr.mxu0 0.0
        %3159 = vmatpush1.msra.mxu0 0.0
        %3160 = vmatprep.subr.mxu0 0.0
        %3161 = vmatpush1.msra.mxu0 0.0
        %3162 = vmatprep.mubr.f32.mxu0 0.0
        %3163 = vmatmul.mubr.f32.gmra.mrb[0].mxu0 %v3087
        %v3164 = vpop.f32.mrb[0].mxu0
        %v3165 = vadd.f32 %v3084, %v3164
        %v3166 = vpop.f32.mrb[0].mxu0
        %3167 = vmatprep.mubr.f32.mxu0 0.0
        %3168 = vmatmul.mubr.f32.gmra.mrb[0].mxu0 %v3090
        %v3169 = vpop.f32.mrb[0].mxu0
        %v3170 = vadd.f32 %v3084, %v3169
        %v3171 = vpop.f32.mrb[0].mxu0
        %3172 = vmatprep.mubr.f32.mxu0 0.0
        %3173 = vmatmul.mubr.f32.gmra.mrb[0].mxu0 %v3093
        %v3174 = vpop.f32.mrb[0].mxu0
        %v3175 = vadd.f32 %v3084, %v3174
        %v3176 = vpop.f32.mrb[0].mxu0
        %3177 = vmatprep.mubr.f32.mxu0 0.0
        %3178 = vmatmul.mubr.f32.gmra.mrb[0].mxu0 %v3096
        %v3179 = vpop.f32.mrb[0].mxu0
        %v3180 = vadd.f32 %v3084, %v3179
        %v3181 = vpop.f32.mrb[0].mxu0
        %3182 = vdwg.mxu0
        %3183 = vst.msk [vmem:[%s750] sm:$0xff] %vm787, %v3165
        %3184 = vst.msk [vmem:[%s750 + $0x8] sm:$0xff] %vm787, %v3170
        %3185 = vst.msk [vmem:[%s750 + $0x10] sm:$0xff] %vm787, %v3175
        %3186 = vst.msk [vmem:[%s750 + $0x18] sm:$0xff] %vm787, %v3180
        %s3187 = sand.u32 %s407, 1
        %s3188 = scalar_lea.sflag [#allocation4], %s3187
        %s3189 = sand.u32 %s407, 1
        %s3190 = smul.addr %s3189, 32
        %s3191 = scalar_lea.vmem [#allocation17], %s3190
        %s3192 = smul.u32 4, %s43
        %p3193 = scmp.lt.s32.totalorder %s3192, 7
        %s3194 = scalar_select %p3193, %s3192, 7
        %s3195 = smul.addr %s3194, 4
        %s3196 = smul.addr %s3195, 8
        %s3197 = scalar_lea.vmem %s17, %s3196
        // Predicated region
        $region121: #{tpu_custom_call.1} parent=83 // pred_check
          %p3198 = pneg %p417
        $region122: #{tpu_custom_call.1} parent=83 // pred_check_branch
          %3200 = sbr.rel (%p3198) target = $region124
        $region123: #{tpu_custom_call.1} parent=83 // pred_region
          %s3201 = smul.u32 4, %s43
          %s3203 = ssub.s32 512, 512
          %3204 = vsyncadd %s3188, %s3203
          %s3205 = smul.addr %s3201, 128
          %s3206 = scalar_lea.hbm %s16, %s3205
          %s3207 = sshll.u32 %s3191, 4
          %s3208 = int_to_ptr.vmem [resolvable:$true] %s3207
          %3213 = dma.vmem_to_hbm [thread:$0]  %s3208, 512, %s3206, %s3188, 128, 128, 8
        $region124: #{tpu_custom_call.1} parent=83 // pred_fallthru
          _
        // Predicated region
        $region125: #{tpu_custom_call.1} parent=83 // pred_check
          %p3214 = pneg %p443
        $region126: #{tpu_custom_call.1} parent=83 // pred_check_branch
          %3216 = sbr.rel (%p3214) target = $region128
        $region127: #{tpu_custom_call.1} parent=83 // pred_region
          %s3217 = smul.u32 4, %s43
        $region128: #{tpu_custom_call.1} parent=83 // pred_fallthru
          _
      $region84: #{tpu_custom_call.1} parent=5 // pred_fallthru
        _
      %p3218 = scmp.le.s32.totalorder 2, %s38
      // Predicated region
      $region129: #{tpu_custom_call.1} parent=5 // pred_check
        %p3219 = pneg %p3218
      $region130: #{tpu_custom_call.1} parent=5 // pred_check_branch
        %3221 = sbr.rel (%p3219) target = $region132
      $region131: #{tpu_custom_call.1} parent=5 // pred_region
        %s3222 = ssub.s32 %s38, 2
        // Predicated region
        $region133: #{tpu_custom_call.1} parent=131 // pred_check
          %p3223 = pneg %p423
        $region134: #{tpu_custom_call.1} parent=131 // pred_check_branch
          %3225 = sbr.rel (%p3223) target = $region136
        $region135: #{tpu_custom_call.1} parent=131 // pred_region
          %s3226 = sand.u32 %s408, 1
          %s3227 = scalar_lea.sflag [#allocation4], %s3226
          %s3228 = sand.u32 %s408, 1
          %s3229 = smul.addr %s3228, 32
          %s3230 = scalar_lea.vmem [#allocation17], %s3229
          %3231 = dma.done %s3227, 512
        $region136: #{tpu_custom_call.1} parent=131 // pred_fallthru
          _
        // Predicated region
        $region137: #{tpu_custom_call.1} parent=131 // pred_check
          %p3232 = pneg %p449
        $region138: #{tpu_custom_call.1} parent=131 // pred_check_branch
          %3234 = sbr.rel (%p3232) target = $region140
        $region139: #{tpu_custom_call.1} parent=131 // pred_region
          %s3235 = smul.u32 4, %s44
          %p3236 = scmp.lt.s32.totalorder %s3235, 7
          %s3237 = scalar_select %p3236, %s3235, 7
          %s3238 = smul.addr %s3237, 4
          %s3239 = smul.addr %s3238, 8
          %s3240 = scalar_lea.vmem %s17, %s3239
        $region140: #{tpu_custom_call.1} parent=131 // pred_fallthru
          _
      $region132: #{tpu_custom_call.1} parent=5 // pred_fallthru
        _
    $region6: #{tpu_custom_call.1} parent=1 // loop_footer
      %s42 = sadd.s32 1, %s38
    $region7: #{tpu_custom_call.1} parent=1 // loop_footer_branch
      %37 = sbr.rel target = $region3
    $region8: #{tpu_custom_call.1} parent=1 // loop_exit
      _
    %3241 = vsyncpa [#allocation3], 1
    %s3242 = scalar_lea.sflag [#allocation3], 1
    %3243 = vsyncpa %s3242, 1
    %3244 = vsyncpa [#allocation6], 1
    %s3245 = scalar_lea.sflag [#allocation6], 1
    %3246 = vsyncpa %s3245, 1
    %3247 = vsyncpa [#allocation9], 1
    %s3248 = scalar_lea.sflag [#allocation9], 1
    %3249 = vsyncpa %s3248, 1
    %3250 = vsyncpa [#allocation12], 1
    %3251 = vsyncpa [#allocation15], 1
    %3252 = vsyncpa [#allocation4], 1
    %s3253 = scalar_lea.sflag [#allocation4], 1
    %3254 = vsyncpa %s3253, 1

</llo_original>
